<compile_context>
chip_gen: v7x
topology: tpu7x:2x2x1
jax: 0.10.0
libtpu: 0.0.40
codegen_flags: <defaults>
</compile_context>

<pallas_src>
import jax
import jax.numpy as jnp
from jax.experimental import pallas as pl
from jax.experimental.pallas import tpu as pltpu


def _make_kernel(kd, kh, kw, H, W, Ci, Co, pad_d, pad_h, pad_w, fold_w):
    HW = H * W

    def kernel(*refs):
        xrefs = refs[:kd]                               # kd x (Hp, Wp, Ci)
        w_ref, b_ref, o_ref, acc_ref, stage_ref = refs[kd:]

        # f32 accumulator initialised with residual + bias.  The residual is
        # the interior window of the centre depth tap (== the unpadded input
        # row), so no separate residual operand is needed.
        res = xrefs[pad_d][pad_h:pad_h + H, pad_w:pad_w + W, :]     # (H, W, Ci)
        acc_ref[...] = (res.reshape(HW, Ci).astype(jnp.float32)
                        + b_ref[...].astype(jnp.float32))

        for a in range(kd):                             # depth taps
            if fold_w:
                # Lane-aligned channels: hoist the kw W shifts AND fold them
                # into the contraction dim (K = kw*Ci) -> one fat matmul per
                # (depth, height) tap.
                stage_ref[...] = jnp.concatenate(
                    [xrefs[a][:, c:c + W, :] for c in range(kw)], axis=-1)
                for b in range(kh):                     # layout-free H slices
                    patch = stage_ref[b:b + H, :, :].reshape(HW, kw * Ci)
                    acc_ref[...] += jnp.dot(patch, w_ref[a * kh + b],
                                            preferred_element_type=jnp.float32)
            else:
                # Small-C path: still hoist each W (sublane) shift out of the
                # height-tap loop by staging it once in VMEM and reusing it
                # for all kh height taps (kd*kw relayouts, not kd*kh*kw).
                for c in range(kw):
                    stage_ref[...] = xrefs[a][:, c:c + W, :]
                    for b in range(kh):
                        patch = stage_ref[b:b + H, :, :].reshape(HW, Ci)
                        acc_ref[...] += jnp.dot(
                            patch, w_ref[a * kh + b, c * Ci:(c + 1) * Ci, :],
                            preferred_element_type=jnp.float32)

        o_ref[...] = acc_ref[...].reshape(H, W, Co).astype(o_ref.dtype)

    return kernel


def residual_same_pad_conv3d(x, weight, bias, kernel_size):
    """x: (N, Ci, D, H, W) NCDHW; weight: (Co, Ci, kd, kh, kw); bias: (Co,)."""
    if isinstance(kernel_size, int):
        kernel_size = (kernel_size,) * 3
    kd, kh, kw = kernel_size
    N, Ci, D, H, W = x.shape
    Co = weight.shape[0]
    assert Co == Ci, "residual add requires in_channels == out_channels"

    # SamePadConv3d (stride 1): total pad = k-1, extra element on the front.
    def _pads(k):
        p = k - 1
        return (p // 2 + p % 2, p // 2)

    pad_d = _pads(kd)[0]
    (ph_f, ph_b), (pw_f, pw_b) = _pads(kh), _pads(kw)
    Hp, Wp = H + kh - 1, W + kw - 1

    # Channels-last; replicate-pad H/W only (the D replicate pad is folded into
    # the clamped index maps below -> one less padded axis in HBM).
    x_cl = jnp.transpose(x, (0, 2, 3, 4, 1))                     # (N, D, H, W, Ci)
    xhw = jnp.pad(x_cl, ((0, 0), (0, 0), (ph_f, ph_b), (pw_f, pw_b), (0, 0)),
                  mode='edge')                                   # (N, D, Hp, Wp, Ci)

    # weight (Co, Ci, kd, kh, kw) -> (kd*kh, kw*Ci, Co): contraction order
    # (c, ci) matches the in-kernel W-fold / W-stage slicing.
    w = jnp.transpose(weight, (2, 3, 4, 1, 0)).reshape(kd * kh, kw * Ci, Co)
    b = bias.reshape(1, Co)

    fold_w = (Ci % 128 == 0)          # lane-aligned K fold only when cheap
    k_inner = kw * Ci if fold_w else Ci

    def _tap_spec(a):
        def idx(n, d):
            # Clamp == replicate padding along D, folded into the index map.
            dd = jnp.minimum(jnp.maximum(d + (a - pad_d), 0), D - 1)
            return (n, dd, 0, 0, 0)
        return pl.BlockSpec((None, None, Hp, Wp, Ci), idx)

    in_specs = [_tap_spec(a) for a in range(kd)]
    in_specs += [
        pl.BlockSpec((kd * kh, kw * Ci, Co), lambda n, d: (0, 0, 0)),  # resident
        pl.BlockSpec((1, Co), lambda n, d: (0, 0)),                    # resident
    ]

    kernel = _make_kernel(kd, kh, kw, H, W, Ci, Co, pad_d, ph_f, pw_f, fold_w)

    out_cl = pl.pallas_call(
        kernel,
        out_shape=jax.ShapeDtypeStruct((N, D, H, W, Co), x.dtype),
        grid_spec=pltpu.PrefetchScalarGridSpec(
            num_scalar_prefetch=0,
            grid=(N, D),
            in_specs=in_specs,
            out_specs=pl.BlockSpec((None, None, H, W, Co),
                                   lambda n, d: (n, d, 0, 0, 0)),
            scratch_shapes=[
                pltpu.VMEM((H * W, Co), jnp.float32),      # f32 accumulator
                pltpu.VMEM((Hp, W, k_inner), x.dtype),     # staged W-shifted slab
            ],
        ),
        compiler_params=pltpu.CompilerParams(
            dimension_semantics=("parallel", "parallel"),
            vmem_limit_bytes=32 * 1024 * 1024),
    )(*([xhw] * kd), w, b)

    return jnp.transpose(out_cl, (0, 4, 1, 2, 3))                # back to NCDHW


def _reference(x, weight, bias, kernel_size):
    """Pure-JAX reference matching the PyTorch module semantics."""
    if isinstance(kernel_size, int):
        kernel_size = (kernel_size,) * 3
    kd, kh, kw = kernel_size

    def _pads(k):
        p = k - 1
        return (p // 2 + p % 2, p // 2)

    xpad = jnp.pad(x, ((0, 0), (0, 0), _pads(kd), _pads(kh), _pads(kw)),
                   mode='edge')
    conv = jax.lax.conv_general_dilated(
        xpad, weight, window_strides=(1, 1, 1), padding='VALID',
        dimension_numbers=('NCDHW', 'OIDHW', 'NCDHW'))
    return x + conv + bias[None, :, None, None, None]


if __name__ == "__main__":
    key = jax.random.PRNGKey(0)
    k1, k2, k3 = jax.random.split(key, 3)

    # small shapes consistent with the module: batch=2, channels=4, 8^3 volume
    N, C, D, H, W = 2, 4, 8, 8, 8
    kernel_size = 3

    x = jax.random.normal(k1, (N, C, D, H, W), dtype=jnp.float32)
    fan_in = C * kernel_size ** 3
    weight = jax.random.normal(
        k2, (C, C, kernel_size, kernel_size, kernel_size),
        dtype=jnp.float32) / jnp.sqrt(float(fan_in))
    bias = 0.1 * jax.random.normal(k3, (C,), dtype=jnp.float32)

    out = jax.block_until_ready(
        residual_same_pad_conv3d(x, weight, bias, kernel_size))

    ref = jax.block_until_ready(_reference(x, weight, bias, kernel_size))
    assert out.shape == ref.shape == (N, C, D, H, W)
    err = float(jnp.max(jnp.abs(out - ref)))
    assert jnp.allclose(out, ref, atol=1e-4, rtol=1e-4), err

    print("KERNEL_OK")
</pallas_src>

<mosaic_0001>
module attributes {stable_mosaic.version = 11 : i64} {
  func.func @kernel(%arg0: i32, %arg1: i32, %arg2: memref<1x1x10x10x4xf32, #tpu.memory_space<vmem>>, %arg3: memref<1x1x10x10x4xf32, #tpu.memory_space<vmem>>, %arg4: memref<1x1x10x10x4xf32, #tpu.memory_space<vmem>>, %arg5: memref<9x12x4xf32, #tpu.memory_space<vmem>>, %arg6: memref<1x4xf32, #tpu.memory_space<vmem>>, %arg7: memref<1x1x8x8x4xf32, #tpu.memory_space<vmem>>, %arg8: memref<64x4xf32, #tpu.memory_space<vmem>>, %arg9: memref<10x8x4xf32, #tpu.memory_space<vmem>>) attributes {dimension_semantics = [#tpu.dimension_semantics<parallel>, #tpu.dimension_semantics<parallel>], iteration_bounds = array<i64: 2, 8>, scalar_prefetch = 0 : i64, scratch_operands = 2 : i64, tpu.core_type = #tpu.core_type<tc>, window_params = [{transform_indices = @transform_0, window_bounds = array<i64: 1, 1, 10, 10, 4>}, {transform_indices = @transform_1, window_bounds = array<i64: 1, 1, 10, 10, 4>}, {transform_indices = @transform_2, window_bounds = array<i64: 1, 1, 10, 10, 4>}, {pipeline_mode = #tpu.pipeline_mode<synchronous>, transform_indices = @transform_3, window_bounds = array<i64: 9, 12, 4>}, {pipeline_mode = #tpu.pipeline_mode<synchronous>, transform_indices = @transform_4, window_bounds = array<i64: 1, 4>}, {transform_indices = @transform_5, window_bounds = array<i64: 1, 1, 8, 8, 4>}]} {
    %c0 = arith.constant 0 : index
    %c0_0 = arith.constant 0 : index
    %c1 = arith.constant 1 : index
    %c1_1 = arith.constant 1 : index
    %c0_2 = arith.constant 0 : index
    %0 = vector.load %arg3[%c0, %c0_0, %c1, %c1_1, %c0_2] : memref<1x1x10x10x4xf32, #tpu.memory_space<vmem>>, vector<1x1x8x8x4xf32>
    %1 = vector.shape_cast %0 : vector<1x1x8x8x4xf32> to vector<8x8x4xf32>
    %2 = vector.shape_cast %1 : vector<8x8x4xf32> to vector<64x4xf32>
    %c0_3 = arith.constant 0 : index
    %c0_4 = arith.constant 0 : index
    %3 = vector.load %arg6[%c0_3, %c0_4] : memref<1x4xf32, #tpu.memory_space<vmem>>, vector<1x4xf32>
    %4 = vector.broadcast %3 : vector<1x4xf32> to vector<64x4xf32>
    %5 = arith.addf %2, %4 : vector<64x4xf32>
    %c0_5 = arith.constant 0 : index
    %c0_6 = arith.constant 0 : index
    %6 = vector.load %arg8[%c0_5, %c0_6] : memref<64x4xf32, #tpu.memory_space<vmem>>, vector<64x4xf32>
    tpu.vector_store %arg8[%c0_5, %c0_6], %5 {strides = array<i32>} : memref<64x4xf32, #tpu.memory_space<vmem>>, vector<64x4xf32>,
    %c0_7 = arith.constant 0 : index
    %c0_8 = arith.constant 0 : index
    %c0_9 = arith.constant 0 : index
    %c0_10 = arith.constant 0 : index
    %c0_11 = arith.constant 0 : index
    %7 = vector.load %arg2[%c0_7, %c0_8, %c0_9, %c0_10, %c0_11] : memref<1x1x10x10x4xf32, #tpu.memory_space<vmem>>, vector<1x1x10x8x4xf32>
    %8 = vector.shape_cast %7 : vector<1x1x10x8x4xf32> to vector<10x8x4xf32>
    %c0_12 = arith.constant 0 : index
    %c0_13 = arith.constant 0 : index
    %c0_14 = arith.constant 0 : index
    %9 = vector.load %arg9[%c0_12, %c0_13, %c0_14] : memref<10x8x4xf32, #tpu.memory_space<vmem>>, vector<10x8x4xf32>
    tpu.vector_store %arg9[%c0_12, %c0_13, %c0_14], %8 {strides = array<i32>} : memref<10x8x4xf32, #tpu.memory_space<vmem>>, vector<10x8x4xf32>,
    %c0_15 = arith.constant 0 : index
    %c0_16 = arith.constant 0 : index
    %c0_17 = arith.constant 0 : index
    %10 = vector.load %arg9[%c0_15, %c0_16, %c0_17] : memref<10x8x4xf32, #tpu.memory_space<vmem>>, vector<8x8x4xf32>
    %11 = vector.shape_cast %10 : vector<8x8x4xf32> to vector<64x4xf32>
    %c0_18 = arith.constant 0 : index
    %c0_19 = arith.constant 0 : index
    %12 = vector.load %arg8[%c0_18, %c0_19] : memref<64x4xf32, #tpu.memory_space<vmem>>, vector<64x4xf32>
    %c0_20 = arith.constant 0 : index
    %c0_21 = arith.constant 0 : index
    %c0_22 = arith.constant 0 : index
    %13 = vector.load %arg5[%c0_20, %c0_21, %c0_22] : memref<9x12x4xf32, #tpu.memory_space<vmem>>, vector<1x4x4xf32>
    %14 = vector.shape_cast %13 : vector<1x4x4xf32> to vector<4x4xf32>
    %cst = arith.constant dense<0.000000e+00> : vector<64x4xf32>
    %15 = tpu.matmul %11, %14, %cst {dimension_numbers = #tpu.dot_dimension_numbers<[1], [0], [0], [1], [0, 0, 1, 1], [], []>} : vector<64x4xf32>, vector<4x4xf32>, vector<64x4xf32> -> vector<64x4xf32>
    %16 = arith.addf %12, %15 : vector<64x4xf32>
    %c0_23 = arith.constant 0 : index
    %c0_24 = arith.constant 0 : index
    %17 = vector.load %arg8[%c0_23, %c0_24] : memref<64x4xf32, #tpu.memory_space<vmem>>, vector<64x4xf32>
    tpu.vector_store %arg8[%c0_23, %c0_24], %16 {strides = array<i32>} : memref<64x4xf32, #tpu.memory_space<vmem>>, vector<64x4xf32>,
    %c1_25 = arith.constant 1 : index
    %c0_26 = arith.constant 0 : index
    %c0_27 = arith.constant 0 : index
    %18 = vector.load %arg9[%c1_25, %c0_26, %c0_27] : memref<10x8x4xf32, #tpu.memory_space<vmem>>, vector<8x8x4xf32>
    %19 = vector.shape_cast %18 : vector<8x8x4xf32> to vector<64x4xf32>
    %c0_28 = arith.constant 0 : index
    %c0_29 = arith.constant 0 : index
    %20 = vector.load %arg8[%c0_28, %c0_29] : memref<64x4xf32, #tpu.memory_space<vmem>>, vector<64x4xf32>
    %c1_30 = arith.constant 1 : index
    %c0_31 = arith.constant 0 : index
    %c0_32 = arith.constant 0 : index
    %21 = vector.load %arg5[%c1_30, %c0_31, %c0_32] : memref<9x12x4xf32, #tpu.memory_space<vmem>>, vector<1x4x4xf32>
    %22 = vector.shape_cast %21 : vector<1x4x4xf32> to vector<4x4xf32>
    %cst_33 = arith.constant dense<0.000000e+00> : vector<64x4xf32>
    %23 = tpu.matmul %19, %22, %cst_33 {dimension_numbers = #tpu.dot_dimension_numbers<[1], [0], [0], [1], [0, 0, 1, 1], [], []>} : vector<64x4xf32>, vector<4x4xf32>, vector<64x4xf32> -> vector<64x4xf32>
    %24 = arith.addf %20, %23 : vector<64x4xf32>
    %c0_34 = arith.constant 0 : index
    %c0_35 = arith.constant 0 : index
    %25 = vector.load %arg8[%c0_34, %c0_35] : memref<64x4xf32, #tpu.memory_space<vmem>>, vector<64x4xf32>
    tpu.vector_store %arg8[%c0_34, %c0_35], %24 {strides = array<i32>} : memref<64x4xf32, #tpu.memory_space<vmem>>, vector<64x4xf32>,
    %c2 = arith.constant 2 : index
    %c0_36 = arith.constant 0 : index
    %c0_37 = arith.constant 0 : index
    %26 = vector.load %arg9[%c2, %c0_36, %c0_37] : memref<10x8x4xf32, #tpu.memory_space<vmem>>, vector<8x8x4xf32>
    %27 = vector.shape_cast %26 : vector<8x8x4xf32> to vector<64x4xf32>
    %c0_38 = arith.constant 0 : index
    %c0_39 = arith.constant 0 : index
    %28 = vector.load %arg8[%c0_38, %c0_39] : memref<64x4xf32, #tpu.memory_space<vmem>>, vector<64x4xf32>
    %c2_40 = arith.constant 2 : index
    %c0_41 = arith.constant 0 : index
    %c0_42 = arith.constant 0 : index
    %29 = vector.load %arg5[%c2_40, %c0_41, %c0_42] : memref<9x12x4xf32, #tpu.memory_space<vmem>>, vector<1x4x4xf32>
    %30 = vector.shape_cast %29 : vector<1x4x4xf32> to vector<4x4xf32>
    %cst_43 = arith.constant dense<0.000000e+00> : vector<64x4xf32>
    %31 = tpu.matmul %27, %30, %cst_43 {dimension_numbers = #tpu.dot_dimension_numbers<[1], [0], [0], [1], [0, 0, 1, 1], [], []>} : vector<64x4xf32>, vector<4x4xf32>, vector<64x4xf32> -> vector<64x4xf32>
    %32 = arith.addf %28, %31 : vector<64x4xf32>
    %c0_44 = arith.constant 0 : index
    %c0_45 = arith.constant 0 : index
    %33 = vector.load %arg8[%c0_44, %c0_45] : memref<64x4xf32, #tpu.memory_space<vmem>>, vector<64x4xf32>
    tpu.vector_store %arg8[%c0_44, %c0_45], %32 {strides = array<i32>} : memref<64x4xf32, #tpu.memory_space<vmem>>, vector<64x4xf32>,
    %c0_46 = arith.constant 0 : index
    %c0_47 = arith.constant 0 : index
    %c0_48 = arith.constant 0 : index
    %c1_49 = arith.constant 1 : index
    %c0_50 = arith.constant 0 : index
    %34 = vector.load %arg2[%c0_46, %c0_47, %c0_48, %c1_49, %c0_50] : memref<1x1x10x10x4xf32, #tpu.memory_space<vmem>>, vector<1x1x10x8x4xf32>
    %35 = vector.shape_cast %34 : vector<1x1x10x8x4xf32> to vector<10x8x4xf32>
    %c0_51 = arith.constant 0 : index
    %c0_52 = arith.constant 0 : index
    %c0_53 = arith.constant 0 : index
    %36 = vector.load %arg9[%c0_51, %c0_52, %c0_53] : memref<10x8x4xf32, #tpu.memory_space<vmem>>, vector<10x8x4xf32>
    tpu.vector_store %arg9[%c0_51, %c0_52, %c0_53], %35 {strides = array<i32>} : memref<10x8x4xf32, #tpu.memory_space<vmem>>, vector<10x8x4xf32>,
    %c0_54 = arith.constant 0 : index
    %c0_55 = arith.constant 0 : index
    %c0_56 = arith.constant 0 : index
    %37 = vector.load %arg9[%c0_54, %c0_55, %c0_56] : memref<10x8x4xf32, #tpu.memory_space<vmem>>, vector<8x8x4xf32>
    %38 = vector.shape_cast %37 : vector<8x8x4xf32> to vector<64x4xf32>
    %c0_57 = arith.constant 0 : index
    %c0_58 = arith.constant 0 : index
    %39 = vector.load %arg8[%c0_57, %c0_58] : memref<64x4xf32, #tpu.memory_space<vmem>>, vector<64x4xf32>
    %c0_59 = arith.constant 0 : index
    %c4 = arith.constant 4 : index
    %c0_60 = arith.constant 0 : index
    %40 = vector.load %arg5[%c0_59, %c4, %c0_60] : memref<9x12x4xf32, #tpu.memory_space<vmem>>, vector<1x4x4xf32>
    %41 = vector.shape_cast %40 : vector<1x4x4xf32> to vector<4x4xf32>
    %cst_61 = arith.constant dense<0.000000e+00> : vector<64x4xf32>
    %42 = tpu.matmul %38, %41, %cst_61 {dimension_numbers = #tpu.dot_dimension_numbers<[1], [0], [0], [1], [0, 0, 1, 1], [], []>} : vector<64x4xf32>, vector<4x4xf32>, vector<64x4xf32> -> vector<64x4xf32>
    %43 = arith.addf %39, %42 : vector<64x4xf32>
    %c0_62 = arith.constant 0 : index
    %c0_63 = arith.constant 0 : index
    %44 = vector.load %arg8[%c0_62, %c0_63] : memref<64x4xf32, #tpu.memory_space<vmem>>, vector<64x4xf32>
    tpu.vector_store %arg8[%c0_62, %c0_63], %43 {strides = array<i32>} : memref<64x4xf32, #tpu.memory_space<vmem>>, vector<64x4xf32>,
    %c1_64 = arith.constant 1 : index
    %c0_65 = arith.constant 0 : index
    %c0_66 = arith.constant 0 : index
    %45 = vector.load %arg9[%c1_64, %c0_65, %c0_66] : memref<10x8x4xf32, #tpu.memory_space<vmem>>, vector<8x8x4xf32>
    %46 = vector.shape_cast %45 : vector<8x8x4xf32> to vector<64x4xf32>
    %c0_67 = arith.constant 0 : index
    %c0_68 = arith.constant 0 : index
    %47 = vector.load %arg8[%c0_67, %c0_68] : memref<64x4xf32, #tpu.memory_space<vmem>>, vector<64x4xf32>
    %c1_69 = arith.constant 1 : index
    %c4_70 = arith.constant 4 : index
    %c0_71 = arith.constant 0 : index
    %48 = vector.load %arg5[%c1_69, %c4_70, %c0_71] : memref<9x12x4xf32, #tpu.memory_space<vmem>>, vector<1x4x4xf32>
    %49 = vector.shape_cast %48 : vector<1x4x4xf32> to vector<4x4xf32>
    %cst_72 = arith.constant dense<0.000000e+00> : vector<64x4xf32>
    %50 = tpu.matmul %46, %49, %cst_72 {dimension_numbers = #tpu.dot_dimension_numbers<[1], [0], [0], [1], [0, 0, 1, 1], [], []>} : vector<64x4xf32>, vector<4x4xf32>, vector<64x4xf32> -> vector<64x4xf32>
    %51 = arith.addf %47, %50 : vector<64x4xf32>
    %c0_73 = arith.constant 0 : index
    %c0_74 = arith.constant 0 : index
    %52 = vector.load %arg8[%c0_73, %c0_74] : memref<64x4xf32, #tpu.memory_space<vmem>>, vector<64x4xf32>
    tpu.vector_store %arg8[%c0_73, %c0_74], %51 {strides = array<i32>} : memref<64x4xf32, #tpu.memory_space<vmem>>, vector<64x4xf32>,
    %c2_75 = arith.constant 2 : index
    %c0_76 = arith.constant 0 : index
    %c0_77 = arith.constant 0 : index
    %53 = vector.load %arg9[%c2_75, %c0_76, %c0_77] : memref<10x8x4xf32, #tpu.memory_space<vmem>>, vector<8x8x4xf32>
    %54 = vector.shape_cast %53 : vector<8x8x4xf32> to vector<64x4xf32>
    %c0_78 = arith.constant 0 : index
    %c0_79 = arith.constant 0 : index
    %55 = vector.load %arg8[%c0_78, %c0_79] : memref<64x4xf32, #tpu.memory_space<vmem>>, vector<64x4xf32>
    %c2_80 = arith.constant 2 : index
    %c4_81 = arith.constant 4 : index
    %c0_82 = arith.constant 0 : index
    %56 = vector.load %arg5[%c2_80, %c4_81, %c0_82] : memref<9x12x4xf32, #tpu.memory_space<vmem>>, vector<1x4x4xf32>
    %57 = vector.shape_cast %56 : vector<1x4x4xf32> to vector<4x4xf32>
    %cst_83 = arith.constant dense<0.000000e+00> : vector<64x4xf32>
    %58 = tpu.matmul %54, %57, %cst_83 {dimension_numbers = #tpu.dot_dimension_numbers<[1], [0], [0], [1], [0, 0, 1, 1], [], []>} : vector<64x4xf32>, vector<4x4xf32>, vector<64x4xf32> -> vector<64x4xf32>
    %59 = arith.addf %55, %58 : vector<64x4xf32>
    %c0_84 = arith.constant 0 : index
    %c0_85 = arith.constant 0 : index
    %60 = vector.load %arg8[%c0_84, %c0_85] : memref<64x4xf32, #tpu.memory_space<vmem>>, vector<64x4xf32>
    tpu.vector_store %arg8[%c0_84, %c0_85], %59 {strides = array<i32>} : memref<64x4xf32, #tpu.memory_space<vmem>>, vector<64x4xf32>,
    %c0_86 = arith.constant 0 : index
    %c0_87 = arith.constant 0 : index
    %c0_88 = arith.constant 0 : index
    %c2_89 = arith.constant 2 : index
    %c0_90 = arith.constant 0 : index
    %61 = vector.load %arg2[%c0_86, %c0_87, %c0_88, %c2_89, %c0_90] : memref<1x1x10x10x4xf32, #tpu.memory_space<vmem>>, vector<1x1x10x8x4xf32>
    %62 = vector.shape_cast %61 : vector<1x1x10x8x4xf32> to vector<10x8x4xf32>
    %c0_91 = arith.constant 0 : index
    %c0_92 = arith.constant 0 : index
    %c0_93 = arith.constant 0 : index
    %63 = vector.load %arg9[%c0_91, %c0_92, %c0_93] : memref<10x8x4xf32, #tpu.memory_space<vmem>>, vector<10x8x4xf32>
    tpu.vector_store %arg9[%c0_91, %c0_92, %c0_93], %62 {strides = array<i32>} : memref<10x8x4xf32, #tpu.memory_space<vmem>>, vector<10x8x4xf32>,
    %c0_94 = arith.constant 0 : index
    %c0_95 = arith.constant 0 : index
    %c0_96 = arith.constant 0 : index
    %64 = vector.load %arg9[%c0_94, %c0_95, %c0_96] : memref<10x8x4xf32, #tpu.memory_space<vmem>>, vector<8x8x4xf32>
    %65 = vector.shape_cast %64 : vector<8x8x4xf32> to vector<64x4xf32>
    %c0_97 = arith.constant 0 : index
    %c0_98 = arith.constant 0 : index
    %66 = vector.load %arg8[%c0_97, %c0_98] : memref<64x4xf32, #tpu.memory_space<vmem>>, vector<64x4xf32>
    %c0_99 = arith.constant 0 : index
    %c8 = arith.constant 8 : index
    %c0_100 = arith.constant 0 : index
    %67 = vector.load %arg5[%c0_99, %c8, %c0_100] : memref<9x12x4xf32, #tpu.memory_space<vmem>>, vector<1x4x4xf32>
    %68 = vector.shape_cast %67 : vector<1x4x4xf32> to vector<4x4xf32>
    %cst_101 = arith.constant dense<0.000000e+00> : vector<64x4xf32>
    %69 = tpu.matmul %65, %68, %cst_101 {dimension_numbers = #tpu.dot_dimension_numbers<[1], [0], [0], [1], [0, 0, 1, 1], [], []>} : vector<64x4xf32>, vector<4x4xf32>, vector<64x4xf32> -> vector<64x4xf32>
    %70 = arith.addf %66, %69 : vector<64x4xf32>
    %c0_102 = arith.constant 0 : index
    %c0_103 = arith.constant 0 : index
    %71 = vector.load %arg8[%c0_102, %c0_103] : memref<64x4xf32, #tpu.memory_space<vmem>>, vector<64x4xf32>
    tpu.vector_store %arg8[%c0_102, %c0_103], %70 {strides = array<i32>} : memref<64x4xf32, #tpu.memory_space<vmem>>, vector<64x4xf32>,
    %c1_104 = arith.constant 1 : index
    %c0_105 = arith.constant 0 : index
    %c0_106 = arith.constant 0 : index
    %72 = vector.load %arg9[%c1_104, %c0_105, %c0_106] : memref<10x8x4xf32, #tpu.memory_space<vmem>>, vector<8x8x4xf32>
    %73 = vector.shape_cast %72 : vector<8x8x4xf32> to vector<64x4xf32>
    %c0_107 = arith.constant 0 : index
    %c0_108 = arith.constant 0 : index
    %74 = vector.load %arg8[%c0_107, %c0_108] : memref<64x4xf32, #tpu.memory_space<vmem>>, vector<64x4xf32>
    %c1_109 = arith.constant 1 : index
    %c8_110 = arith.constant 8 : index
    %c0_111 = arith.constant 0 : index
    %75 = vector.load %arg5[%c1_109, %c8_110, %c0_111] : memref<9x12x4xf32, #tpu.memory_space<vmem>>, vector<1x4x4xf32>
    %76 = vector.shape_cast %75 : vector<1x4x4xf32> to vector<4x4xf32>
    %cst_112 = arith.constant dense<0.000000e+00> : vector<64x4xf32>
    %77 = tpu.matmul %73, %76, %cst_112 {dimension_numbers = #tpu.dot_dimension_numbers<[1], [0], [0], [1], [0, 0, 1, 1], [], []>} : vector<64x4xf32>, vector<4x4xf32>, vector<64x4xf32> -> vector<64x4xf32>
    %78 = arith.addf %74, %77 : vector<64x4xf32>
    %c0_113 = arith.constant 0 : index
    %c0_114 = arith.constant 0 : index
    %79 = vector.load %arg8[%c0_113, %c0_114] : memref<64x4xf32, #tpu.memory_space<vmem>>, vector<64x4xf32>
    tpu.vector_store %arg8[%c0_113, %c0_114], %78 {strides = array<i32>} : memref<64x4xf32, #tpu.memory_space<vmem>>, vector<64x4xf32>,
    %c2_115 = arith.constant 2 : index
    %c0_116 = arith.constant 0 : index
    %c0_117 = arith.constant 0 : index
    %80 = vector.load %arg9[%c2_115, %c0_116, %c0_117] : memref<10x8x4xf32, #tpu.memory_space<vmem>>, vector<8x8x4xf32>
    %81 = vector.shape_cast %80 : vector<8x8x4xf32> to vector<64x4xf32>
    %c0_118 = arith.constant 0 : index
    %c0_119 = arith.constant 0 : index
    %82 = vector.load %arg8[%c0_118, %c0_119] : memref<64x4xf32, #tpu.memory_space<vmem>>, vector<64x4xf32>
    %c2_120 = arith.constant 2 : index
    %c8_121 = arith.constant 8 : index
    %c0_122 = arith.constant 0 : index
    %83 = vector.load %arg5[%c2_120, %c8_121, %c0_122] : memref<9x12x4xf32, #tpu.memory_space<vmem>>, vector<1x4x4xf32>
    %84 = vector.shape_cast %83 : vector<1x4x4xf32> to vector<4x4xf32>
    %cst_123 = arith.constant dense<0.000000e+00> : vector<64x4xf32>
    %85 = tpu.matmul %81, %84, %cst_123 {dimension_numbers = #tpu.dot_dimension_numbers<[1], [0], [0], [1], [0, 0, 1, 1], [], []>} : vector<64x4xf32>, vector<4x4xf32>, vector<64x4xf32> -> vector<64x4xf32>
    %86 = arith.addf %82, %85 : vector<64x4xf32>
    %c0_124 = arith.constant 0 : index
    %c0_125 = arith.constant 0 : index
    %87 = vector.load %arg8[%c0_124, %c0_125] : memref<64x4xf32, #tpu.memory_space<vmem>>, vector<64x4xf32>
    tpu.vector_store %arg8[%c0_124, %c0_125], %86 {strides = array<i32>} : memref<64x4xf32, #tpu.memory_space<vmem>>, vector<64x4xf32>,
    %c0_126 = arith.constant 0 : index
    %c0_127 = arith.constant 0 : index
    %c0_128 = arith.constant 0 : index
    %c0_129 = arith.constant 0 : index
    %c0_130 = arith.constant 0 : index
    %88 = vector.load %arg3[%c0_126, %c0_127, %c0_128, %c0_129, %c0_130] : memref<1x1x10x10x4xf32, #tpu.memory_space<vmem>>, vector<1x1x10x8x4xf32>
    %89 = vector.shape_cast %88 : vector<1x1x10x8x4xf32> to vector<10x8x4xf32>
    %c0_131 = arith.constant 0 : index
    %c0_132 = arith.constant 0 : index
    %c0_133 = arith.constant 0 : index
    %90 = vector.load %arg9[%c0_131, %c0_132, %c0_133] : memref<10x8x4xf32, #tpu.memory_space<vmem>>, vector<10x8x4xf32>
    tpu.vector_store %arg9[%c0_131, %c0_132, %c0_133], %89 {strides = array<i32>} : memref<10x8x4xf32, #tpu.memory_space<vmem>>, vector<10x8x4xf32>,
    %c0_134 = arith.constant 0 : index
    %c0_135 = arith.constant 0 : index
    %c0_136 = arith.constant 0 : index
    %91 = vector.load %arg9[%c0_134, %c0_135, %c0_136] : memref<10x8x4xf32, #tpu.memory_space<vmem>>, vector<8x8x4xf32>
    %92 = vector.shape_cast %91 : vector<8x8x4xf32> to vector<64x4xf32>
    %c0_137 = arith.constant 0 : index
    %c0_138 = arith.constant 0 : index
    %93 = vector.load %arg8[%c0_137, %c0_138] : memref<64x4xf32, #tpu.memory_space<vmem>>, vector<64x4xf32>
    %c3 = arith.constant 3 : index
    %c0_139 = arith.constant 0 : index
    %c0_140 = arith.constant 0 : index
    %94 = vector.load %arg5[%c3, %c0_139, %c0_140] : memref<9x12x4xf32, #tpu.memory_space<vmem>>, vector<1x4x4xf32>
    %95 = vector.shape_cast %94 : vector<1x4x4xf32> to vector<4x4xf32>
    %cst_141 = arith.constant dense<0.000000e+00> : vector<64x4xf32>
    %96 = tpu.matmul %92, %95, %cst_141 {dimension_numbers = #tpu.dot_dimension_numbers<[1], [0], [0], [1], [0, 0, 1, 1], [], []>} : vector<64x4xf32>, vector<4x4xf32>, vector<64x4xf32> -> vector<64x4xf32>
    %97 = arith.addf %93, %96 : vector<64x4xf32>
    %c0_142 = arith.constant 0 : index
    %c0_143 = arith.constant 0 : index
    %98 = vector.load %arg8[%c0_142, %c0_143] : memref<64x4xf32, #tpu.memory_space<vmem>>, vector<64x4xf32>
    tpu.vector_store %arg8[%c0_142, %c0_143], %97 {strides = array<i32>} : memref<64x4xf32, #tpu.memory_space<vmem>>, vector<64x4xf32>,
    %c1_144 = arith.constant 1 : index
    %c0_145 = arith.constant 0 : index
    %c0_146 = arith.constant 0 : index
    %99 = vector.load %arg9[%c1_144, %c0_145, %c0_146] : memref<10x8x4xf32, #tpu.memory_space<vmem>>, vector<8x8x4xf32>
    %100 = vector.shape_cast %99 : vector<8x8x4xf32> to vector<64x4xf32>
    %c0_147 = arith.constant 0 : index
    %c0_148 = arith.constant 0 : index
    %101 = vector.load %arg8[%c0_147, %c0_148] : memref<64x4xf32, #tpu.memory_space<vmem>>, vector<64x4xf32>
    %c4_149 = arith.constant 4 : index
    %c0_150 = arith.constant 0 : index
    %c0_151 = arith.constant 0 : index
    %102 = vector.load %arg5[%c4_149, %c0_150, %c0_151] : memref<9x12x4xf32, #tpu.memory_space<vmem>>, vector<1x4x4xf32>
    %103 = vector.shape_cast %102 : vector<1x4x4xf32> to vector<4x4xf32>
    %cst_152 = arith.constant dense<0.000000e+00> : vector<64x4xf32>
    %104 = tpu.matmul %100, %103, %cst_152 {dimension_numbers = #tpu.dot_dimension_numbers<[1], [0], [0], [1], [0, 0, 1, 1], [], []>} : vector<64x4xf32>, vector<4x4xf32>, vector<64x4xf32> -> vector<64x4xf32>
    %105 = arith.addf %101, %104 : vector<64x4xf32>
    %c0_153 = arith.constant 0 : index
    %c0_154 = arith.constant 0 : index
    %106 = vector.load %arg8[%c0_153, %c0_154] : memref<64x4xf32, #tpu.memory_space<vmem>>, vector<64x4xf32>
    tpu.vector_store %arg8[%c0_153, %c0_154], %105 {strides = array<i32>} : memref<64x4xf32, #tpu.memory_space<vmem>>, vector<64x4xf32>,
    %c2_155 = arith.constant 2 : index
    %c0_156 = arith.constant 0 : index
    %c0_157 = arith.constant 0 : index
    %107 = vector.load %arg9[%c2_155, %c0_156, %c0_157] : memref<10x8x4xf32, #tpu.memory_space<vmem>>, vector<8x8x4xf32>
    %108 = vector.shape_cast %107 : vector<8x8x4xf32> to vector<64x4xf32>
    %c0_158 = arith.constant 0 : index
    %c0_159 = arith.constant 0 : index
    %109 = vector.load %arg8[%c0_158, %c0_159] : memref<64x4xf32, #tpu.memory_space<vmem>>, vector<64x4xf32>
    %c5 = arith.constant 5 : index
    %c0_160 = arith.constant 0 : index
    %c0_161 = arith.constant 0 : index
    %110 = vector.load %arg5[%c5, %c0_160, %c0_161] : memref<9x12x4xf32, #tpu.memory_space<vmem>>, vector<1x4x4xf32>
    %111 = vector.shape_cast %110 : vector<1x4x4xf32> to vector<4x4xf32>
    %cst_162 = arith.constant dense<0.000000e+00> : vector<64x4xf32>
    %112 = tpu.matmul %108, %111, %cst_162 {dimension_numbers = #tpu.dot_dimension_numbers<[1], [0], [0], [1], [0, 0, 1, 1], [], []>} : vector<64x4xf32>, vector<4x4xf32>, vector<64x4xf32> -> vector<64x4xf32>
    %113 = arith.addf %109, %112 : vector<64x4xf32>
    %c0_163 = arith.constant 0 : index
    %c0_164 = arith.constant 0 : index
    %114 = vector.load %arg8[%c0_163, %c0_164] : memref<64x4xf32, #tpu.memory_space<vmem>>, vector<64x4xf32>
    tpu.vector_store %arg8[%c0_163, %c0_164], %113 {strides = array<i32>} : memref<64x4xf32, #tpu.memory_space<vmem>>, vector<64x4xf32>,
    %c0_165 = arith.constant 0 : index
    %c0_166 = arith.constant 0 : index
    %c0_167 = arith.constant 0 : index
    %c1_168 = arith.constant 1 : index
    %c0_169 = arith.constant 0 : index
    %115 = vector.load %arg3[%c0_165, %c0_166, %c0_167, %c1_168, %c0_169] : memref<1x1x10x10x4xf32, #tpu.memory_space<vmem>>, vector<1x1x10x8x4xf32>
    %116 = vector.shape_cast %115 : vector<1x1x10x8x4xf32> to vector<10x8x4xf32>
    %c0_170 = arith.constant 0 : index
    %c0_171 = arith.constant 0 : index
    %c0_172 = arith.constant 0 : index
    %117 = vector.load %arg9[%c0_170, %c0_171, %c0_172] : memref<10x8x4xf32, #tpu.memory_space<vmem>>, vector<10x8x4xf32>
    tpu.vector_store %arg9[%c0_170, %c0_171, %c0_172], %116 {strides = array<i32>} : memref<10x8x4xf32, #tpu.memory_space<vmem>>, vector<10x8x4xf32>,
    %c0_173 = arith.constant 0 : index
    %c0_174 = arith.constant 0 : index
    %c0_175 = arith.constant 0 : index
    %118 = vector.load %arg9[%c0_173, %c0_174, %c0_175] : memref<10x8x4xf32, #tpu.memory_space<vmem>>, vector<8x8x4xf32>
    %119 = vector.shape_cast %118 : vector<8x8x4xf32> to vector<64x4xf32>
    %c0_176 = arith.constant 0 : index
    %c0_177 = arith.constant 0 : index
    %120 = vector.load %arg8[%c0_176, %c0_177] : memref<64x4xf32, #tpu.memory_space<vmem>>, vector<64x4xf32>
    %c3_178 = arith.constant 3 : index
    %c4_179 = arith.constant 4 : index
    %c0_180 = arith.constant 0 : index
    %121 = vector.load %arg5[%c3_178, %c4_179, %c0_180] : memref<9x12x4xf32, #tpu.memory_space<vmem>>, vector<1x4x4xf32>
    %122 = vector.shape_cast %121 : vector<1x4x4xf32> to vector<4x4xf32>
    %cst_181 = arith.constant dense<0.000000e+00> : vector<64x4xf32>
    %123 = tpu.matmul %119, %122, %cst_181 {dimension_numbers = #tpu.dot_dimension_numbers<[1], [0], [0], [1], [0, 0, 1, 1], [], []>} : vector<64x4xf32>, vector<4x4xf32>, vector<64x4xf32> -> vector<64x4xf32>
    %124 = arith.addf %120, %123 : vector<64x4xf32>
    %c0_182 = arith.constant 0 : index
    %c0_183 = arith.constant 0 : index
    %125 = vector.load %arg8[%c0_182, %c0_183] : memref<64x4xf32, #tpu.memory_space<vmem>>, vector<64x4xf32>
    tpu.vector_store %arg8[%c0_182, %c0_183], %124 {strides = array<i32>} : memref<64x4xf32, #tpu.memory_space<vmem>>, vector<64x4xf32>,
    %c1_184 = arith.constant 1 : index
    %c0_185 = arith.constant 0 : index
    %c0_186 = arith.constant 0 : index
    %126 = vector.load %arg9[%c1_184, %c0_185, %c0_186] : memref<10x8x4xf32, #tpu.memory_space<vmem>>, vector<8x8x4xf32>
    %127 = vector.shape_cast %126 : vector<8x8x4xf32> to vector<64x4xf32>
    %c0_187 = arith.constant 0 : index
    %c0_188 = arith.constant 0 : index
    %128 = vector.load %arg8[%c0_187, %c0_188] : memref<64x4xf32, #tpu.memory_space<vmem>>, vector<64x4xf32>
    %c4_189 = arith.constant 4 : index
    %c4_190 = arith.constant 4 : index
    %c0_191 = arith.constant 0 : index
    %129 = vector.load %arg5[%c4_189, %c4_190, %c0_191] : memref<9x12x4xf32, #tpu.memory_space<vmem>>, vector<1x4x4xf32>
    %130 = vector.shape_cast %129 : vector<1x4x4xf32> to vector<4x4xf32>
    %cst_192 = arith.constant dense<0.000000e+00> : vector<64x4xf32>
    %131 = tpu.matmul %127, %130, %cst_192 {dimension_numbers = #tpu.dot_dimension_numbers<[1], [0], [0], [1], [0, 0, 1, 1], [], []>} : vector<64x4xf32>, vector<4x4xf32>, vector<64x4xf32> -> vector<64x4xf32>
    %132 = arith.addf %128, %131 : vector<64x4xf32>
    %c0_193 = arith.constant 0 : index
    %c0_194 = arith.constant 0 : index
    %133 = vector.load %arg8[%c0_193, %c0_194] : memref<64x4xf32, #tpu.memory_space<vmem>>, vector<64x4xf32>
    tpu.vector_store %arg8[%c0_193, %c0_194], %132 {strides = array<i32>} : memref<64x4xf32, #tpu.memory_space<vmem>>, vector<64x4xf32>,
    %c2_195 = arith.constant 2 : index
    %c0_196 = arith.constant 0 : index
    %c0_197 = arith.constant 0 : index
    %134 = vector.load %arg9[%c2_195, %c0_196, %c0_197] : memref<10x8x4xf32, #tpu.memory_space<vmem>>, vector<8x8x4xf32>
    %135 = vector.shape_cast %134 : vector<8x8x4xf32> to vector<64x4xf32>
    %c0_198 = arith.constant 0 : index
    %c0_199 = arith.constant 0 : index
    %136 = vector.load %arg8[%c0_198, %c0_199] : memref<64x4xf32, #tpu.memory_space<vmem>>, vector<64x4xf32>
    %c5_200 = arith.constant 5 : index
    %c4_201 = arith.constant 4 : index
    %c0_202 = arith.constant 0 : index
    %137 = vector.load %arg5[%c5_200, %c4_201, %c0_202] : memref<9x12x4xf32, #tpu.memory_space<vmem>>, vector<1x4x4xf32>
    %138 = vector.shape_cast %137 : vector<1x4x4xf32> to vector<4x4xf32>
    %cst_203 = arith.constant dense<0.000000e+00> : vector<64x4xf32>
    %139 = tpu.matmul %135, %138, %cst_203 {dimension_numbers = #tpu.dot_dimension_numbers<[1], [0], [0], [1], [0, 0, 1, 1], [], []>} : vector<64x4xf32>, vector<4x4xf32>, vector<64x4xf32> -> vector<64x4xf32>
    %140 = arith.addf %136, %139 : vector<64x4xf32>
    %c0_204 = arith.constant 0 : index
    %c0_205 = arith.constant 0 : index
    %141 = vector.load %arg8[%c0_204, %c0_205] : memref<64x4xf32, #tpu.memory_space<vmem>>, vector<64x4xf32>
    tpu.vector_store %arg8[%c0_204, %c0_205], %140 {strides = array<i32>} : memref<64x4xf32, #tpu.memory_space<vmem>>, vector<64x4xf32>,
    %c0_206 = arith.constant 0 : index
    %c0_207 = arith.constant 0 : index
    %c0_208 = arith.constant 0 : index
    %c2_209 = arith.constant 2 : index
    %c0_210 = arith.constant 0 : index
    %142 = vector.load %arg3[%c0_206, %c0_207, %c0_208, %c2_209, %c0_210] : memref<1x1x10x10x4xf32, #tpu.memory_space<vmem>>, vector<1x1x10x8x4xf32>
    %143 = vector.shape_cast %142 : vector<1x1x10x8x4xf32> to vector<10x8x4xf32>
    %c0_211 = arith.constant 0 : index
    %c0_212 = arith.constant 0 : index
    %c0_213 = arith.constant 0 : index
    %144 = vector.load %arg9[%c0_211, %c0_212, %c0_213] : memref<10x8x4xf32, #tpu.memory_space<vmem>>, vector<10x8x4xf32>
    tpu.vector_store %arg9[%c0_211, %c0_212, %c0_213], %143 {strides = array<i32>} : memref<10x8x4xf32, #tpu.memory_space<vmem>>, vector<10x8x4xf32>,
    %c0_214 = arith.constant 0 : index
    %c0_215 = arith.constant 0 : index
    %c0_216 = arith.constant 0 : index
    %145 = vector.load %arg9[%c0_214, %c0_215, %c0_216] : memref<10x8x4xf32, #tpu.memory_space<vmem>>, vector<8x8x4xf32>
    %146 = vector.shape_cast %145 : vector<8x8x4xf32> to vector<64x4xf32>
    %c0_217 = arith.constant 0 : index
    %c0_218 = arith.constant 0 : index
    %147 = vector.load %arg8[%c0_217, %c0_218] : memref<64x4xf32, #tpu.memory_space<vmem>>, vector<64x4xf32>
    %c3_219 = arith.constant 3 : index
    %c8_220 = arith.constant 8 : index
    %c0_221 = arith.constant 0 : index
    %148 = vector.load %arg5[%c3_219, %c8_220, %c0_221] : memref<9x12x4xf32, #tpu.memory_space<vmem>>, vector<1x4x4xf32>
    %149 = vector.shape_cast %148 : vector<1x4x4xf32> to vector<4x4xf32>
    %cst_222 = arith.constant dense<0.000000e+00> : vector<64x4xf32>
    %150 = tpu.matmul %146, %149, %cst_222 {dimension_numbers = #tpu.dot_dimension_numbers<[1], [0], [0], [1], [0, 0, 1, 1], [], []>} : vector<64x4xf32>, vector<4x4xf32>, vector<64x4xf32> -> vector<64x4xf32>
    %151 = arith.addf %147, %150 : vector<64x4xf32>
    %c0_223 = arith.constant 0 : index
    %c0_224 = arith.constant 0 : index
    %152 = vector.load %arg8[%c0_223, %c0_224] : memref<64x4xf32, #tpu.memory_space<vmem>>, vector<64x4xf32>
    tpu.vector_store %arg8[%c0_223, %c0_224], %151 {strides = array<i32>} : memref<64x4xf32, #tpu.memory_space<vmem>>, vector<64x4xf32>,
    %c1_225 = arith.constant 1 : index
    %c0_226 = arith.constant 0 : index
    %c0_227 = arith.constant 0 : index
    %153 = vector.load %arg9[%c1_225, %c0_226, %c0_227] : memref<10x8x4xf32, #tpu.memory_space<vmem>>, vector<8x8x4xf32>
    %154 = vector.shape_cast %153 : vector<8x8x4xf32> to vector<64x4xf32>
    %c0_228 = arith.constant 0 : index
    %c0_229 = arith.constant 0 : index
    %155 = vector.load %arg8[%c0_228, %c0_229] : memref<64x4xf32, #tpu.memory_space<vmem>>, vector<64x4xf32>
    %c4_230 = arith.constant 4 : index
    %c8_231 = arith.constant 8 : index
    %c0_232 = arith.constant 0 : index
    %156 = vector.load %arg5[%c4_230, %c8_231, %c0_232] : memref<9x12x4xf32, #tpu.memory_space<vmem>>, vector<1x4x4xf32>
    %157 = vector.shape_cast %156 : vector<1x4x4xf32> to vector<4x4xf32>
    %cst_233 = arith.constant dense<0.000000e+00> : vector<64x4xf32>
    %158 = tpu.matmul %154, %157, %cst_233 {dimension_numbers = #tpu.dot_dimension_numbers<[1], [0], [0], [1], [0, 0, 1, 1], [], []>} : vector<64x4xf32>, vector<4x4xf32>, vector<64x4xf32> -> vector<64x4xf32>
    %159 = arith.addf %155, %158 : vector<64x4xf32>
    %c0_234 = arith.constant 0 : index
    %c0_235 = arith.constant 0 : index
    %160 = vector.load %arg8[%c0_234, %c0_235] : memref<64x4xf32, #tpu.memory_space<vmem>>, vector<64x4xf32>
    tpu.vector_store %arg8[%c0_234, %c0_235], %159 {strides = array<i32>} : memref<64x4xf32, #tpu.memory_space<vmem>>, vector<64x4xf32>,
    %c2_236 = arith.constant 2 : index
    %c0_237 = arith.constant 0 : index
    %c0_238 = arith.constant 0 : index
    %161 = vector.load %arg9[%c2_236, %c0_237, %c0_238] : memref<10x8x4xf32, #tpu.memory_space<vmem>>, vector<8x8x4xf32>
    %162 = vector.shape_cast %161 : vector<8x8x4xf32> to vector<64x4xf32>
    %c0_239 = arith.constant 0 : index
    %c0_240 = arith.constant 0 : index
    %163 = vector.load %arg8[%c0_239, %c0_240] : memref<64x4xf32, #tpu.memory_space<vmem>>, vector<64x4xf32>
    %c5_241 = arith.constant 5 : index
    %c8_242 = arith.constant 8 : index
    %c0_243 = arith.constant 0 : index
    %164 = vector.load %arg5[%c5_241, %c8_242, %c0_243] : memref<9x12x4xf32, #tpu.memory_space<vmem>>, vector<1x4x4xf32>
    %165 = vector.shape_cast %164 : vector<1x4x4xf32> to vector<4x4xf32>
    %cst_244 = arith.constant dense<0.000000e+00> : vector<64x4xf32>
    %166 = tpu.matmul %162, %165, %cst_244 {dimension_numbers = #tpu.dot_dimension_numbers<[1], [0], [0], [1], [0, 0, 1, 1], [], []>} : vector<64x4xf32>, vector<4x4xf32>, vector<64x4xf32> -> vector<64x4xf32>
    %167 = arith.addf %163, %166 : vector<64x4xf32>
    %c0_245 = arith.constant 0 : index
    %c0_246 = arith.constant 0 : index
    %168 = vector.load %arg8[%c0_245, %c0_246] : memref<64x4xf32, #tpu.memory_space<vmem>>, vector<64x4xf32>
    tpu.vector_store %arg8[%c0_245, %c0_246], %167 {strides = array<i32>} : memref<64x4xf32, #tpu.memory_space<vmem>>, vector<64x4xf32>,
    %c0_247 = arith.constant 0 : index
    %c0_248 = arith.constant 0 : index
    %c0_249 = arith.constant 0 : index
    %c0_250 = arith.constant 0 : index
    %c0_251 = arith.constant 0 : index
    %169 = vector.load %arg4[%c0_247, %c0_248, %c0_249, %c0_250, %c0_251] : memref<1x1x10x10x4xf32, #tpu.memory_space<vmem>>, vector<1x1x10x8x4xf32>
    %170 = vector.shape_cast %169 : vector<1x1x10x8x4xf32> to vector<10x8x4xf32>
    %c0_252 = arith.constant 0 : index
    %c0_253 = arith.constant 0 : index
    %c0_254 = arith.constant 0 : index
    %171 = vector.load %arg9[%c0_252, %c0_253, %c0_254] : memref<10x8x4xf32, #tpu.memory_space<vmem>>, vector<10x8x4xf32>
    tpu.vector_store %arg9[%c0_252, %c0_253, %c0_254], %170 {strides = array<i32>} : memref<10x8x4xf32, #tpu.memory_space<vmem>>, vector<10x8x4xf32>,
    %c0_255 = arith.constant 0 : index
    %c0_256 = arith.constant 0 : index
    %c0_257 = arith.constant 0 : index
    %172 = vector.load %arg9[%c0_255, %c0_256, %c0_257] : memref<10x8x4xf32, #tpu.memory_space<vmem>>, vector<8x8x4xf32>
    %173 = vector.shape_cast %172 : vector<8x8x4xf32> to vector<64x4xf32>
    %c0_258 = arith.constant 0 : index
    %c0_259 = arith.constant 0 : index
    %174 = vector.load %arg8[%c0_258, %c0_259] : memref<64x4xf32, #tpu.memory_space<vmem>>, vector<64x4xf32>
    %c6 = arith.constant 6 : index
    %c0_260 = arith.constant 0 : index
    %c0_261 = arith.constant 0 : index
    %175 = vector.load %arg5[%c6, %c0_260, %c0_261] : memref<9x12x4xf32, #tpu.memory_space<vmem>>, vector<1x4x4xf32>
    %176 = vector.shape_cast %175 : vector<1x4x4xf32> to vector<4x4xf32>
    %cst_262 = arith.constant dense<0.000000e+00> : vector<64x4xf32>
    %177 = tpu.matmul %173, %176, %cst_262 {dimension_numbers = #tpu.dot_dimension_numbers<[1], [0], [0], [1], [0, 0, 1, 1], [], []>} : vector<64x4xf32>, vector<4x4xf32>, vector<64x4xf32> -> vector<64x4xf32>
    %178 = arith.addf %174, %177 : vector<64x4xf32>
    %c0_263 = arith.constant 0 : index
    %c0_264 = arith.constant 0 : index
    %179 = vector.load %arg8[%c0_263, %c0_264] : memref<64x4xf32, #tpu.memory_space<vmem>>, vector<64x4xf32>
    tpu.vector_store %arg8[%c0_263, %c0_264], %178 {strides = array<i32>} : memref<64x4xf32, #tpu.memory_space<vmem>>, vector<64x4xf32>,
    %c1_265 = arith.constant 1 : index
    %c0_266 = arith.constant 0 : index
    %c0_267 = arith.constant 0 : index
    %180 = vector.load %arg9[%c1_265, %c0_266, %c0_267] : memref<10x8x4xf32, #tpu.memory_space<vmem>>, vector<8x8x4xf32>
    %181 = vector.shape_cast %180 : vector<8x8x4xf32> to vector<64x4xf32>
    %c0_268 = arith.constant 0 : index
    %c0_269 = arith.constant 0 : index
    %182 = vector.load %arg8[%c0_268, %c0_269] : memref<64x4xf32, #tpu.memory_space<vmem>>, vector<64x4xf32>
    %c7 = arith.constant 7 : index
    %c0_270 = arith.constant 0 : index
    %c0_271 = arith.constant 0 : index
    %183 = vector.load %arg5[%c7, %c0_270, %c0_271] : memref<9x12x4xf32, #tpu.memory_space<vmem>>, vector<1x4x4xf32>
    %184 = vector.shape_cast %183 : vector<1x4x4xf32> to vector<4x4xf32>
    %cst_272 = arith.constant dense<0.000000e+00> : vector<64x4xf32>
    %185 = tpu.matmul %181, %184, %cst_272 {dimension_numbers = #tpu.dot_dimension_numbers<[1], [0], [0], [1], [0, 0, 1, 1], [], []>} : vector<64x4xf32>, vector<4x4xf32>, vector<64x4xf32> -> vector<64x4xf32>
    %186 = arith.addf %182, %185 : vector<64x4xf32>
    %c0_273 = arith.constant 0 : index
    %c0_274 = arith.constant 0 : index
    %187 = vector.load %arg8[%c0_273, %c0_274] : memref<64x4xf32, #tpu.memory_space<vmem>>, vector<64x4xf32>
    tpu.vector_store %arg8[%c0_273, %c0_274], %186 {strides = array<i32>} : memref<64x4xf32, #tpu.memory_space<vmem>>, vector<64x4xf32>,
    %c2_275 = arith.constant 2 : index
    %c0_276 = arith.constant 0 : index
    %c0_277 = arith.constant 0 : index
    %188 = vector.load %arg9[%c2_275, %c0_276, %c0_277] : memref<10x8x4xf32, #tpu.memory_space<vmem>>, vector<8x8x4xf32>
    %189 = vector.shape_cast %188 : vector<8x8x4xf32> to vector<64x4xf32>
    %c0_278 = arith.constant 0 : index
    %c0_279 = arith.constant 0 : index
    %190 = vector.load %arg8[%c0_278, %c0_279] : memref<64x4xf32, #tpu.memory_space<vmem>>, vector<64x4xf32>
    %c8_280 = arith.constant 8 : index
    %c0_281 = arith.constant 0 : index
    %c0_282 = arith.constant 0 : index
    %191 = vector.load %arg5[%c8_280, %c0_281, %c0_282] : memref<9x12x4xf32, #tpu.memory_space<vmem>>, vector<1x4x4xf32>
    %192 = vector.shape_cast %191 : vector<1x4x4xf32> to vector<4x4xf32>
    %cst_283 = arith.constant dense<0.000000e+00> : vector<64x4xf32>
    %193 = tpu.matmul %189, %192, %cst_283 {dimension_numbers = #tpu.dot_dimension_numbers<[1], [0], [0], [1], [0, 0, 1, 1], [], []>} : vector<64x4xf32>, vector<4x4xf32>, vector<64x4xf32> -> vector<64x4xf32>
    %194 = arith.addf %190, %193 : vector<64x4xf32>
    %c0_284 = arith.constant 0 : index
    %c0_285 = arith.constant 0 : index
    %195 = vector.load %arg8[%c0_284, %c0_285] : memref<64x4xf32, #tpu.memory_space<vmem>>, vector<64x4xf32>
    tpu.vector_store %arg8[%c0_284, %c0_285], %194 {strides = array<i32>} : memref<64x4xf32, #tpu.memory_space<vmem>>, vector<64x4xf32>,
    %c0_286 = arith.constant 0 : index
    %c0_287 = arith.constant 0 : index
    %c0_288 = arith.constant 0 : index
    %c1_289 = arith.constant 1 : index
    %c0_290 = arith.constant 0 : index
    %196 = vector.load %arg4[%c0_286, %c0_287, %c0_288, %c1_289, %c0_290] : memref<1x1x10x10x4xf32, #tpu.memory_space<vmem>>, vector<1x1x10x8x4xf32>
    %197 = vector.shape_cast %196 : vector<1x1x10x8x4xf32> to vector<10x8x4xf32>
    %c0_291 = arith.constant 0 : index
    %c0_292 = arith.constant 0 : index
    %c0_293 = arith.constant 0 : index
    %198 = vector.load %arg9[%c0_291, %c0_292, %c0_293] : memref<10x8x4xf32, #tpu.memory_space<vmem>>, vector<10x8x4xf32>
    tpu.vector_store %arg9[%c0_291, %c0_292, %c0_293], %197 {strides = array<i32>} : memref<10x8x4xf32, #tpu.memory_space<vmem>>, vector<10x8x4xf32>,
    %c0_294 = arith.constant 0 : index
    %c0_295 = arith.constant 0 : index
    %c0_296 = arith.constant 0 : index
    %199 = vector.load %arg9[%c0_294, %c0_295, %c0_296] : memref<10x8x4xf32, #tpu.memory_space<vmem>>, vector<8x8x4xf32>
    %200 = vector.shape_cast %199 : vector<8x8x4xf32> to vector<64x4xf32>
    %c0_297 = arith.constant 0 : index
    %c0_298 = arith.constant 0 : index
    %201 = vector.load %arg8[%c0_297, %c0_298] : memref<64x4xf32, #tpu.memory_space<vmem>>, vector<64x4xf32>
    %c6_299 = arith.constant 6 : index
    %c4_300 = arith.constant 4 : index
    %c0_301 = arith.constant 0 : index
    %202 = vector.load %arg5[%c6_299, %c4_300, %c0_301] : memref<9x12x4xf32, #tpu.memory_space<vmem>>, vector<1x4x4xf32>
    %203 = vector.shape_cast %202 : vector<1x4x4xf32> to vector<4x4xf32>
    %cst_302 = arith.constant dense<0.000000e+00> : vector<64x4xf32>
    %204 = tpu.matmul %200, %203, %cst_302 {dimension_numbers = #tpu.dot_dimension_numbers<[1], [0], [0], [1], [0, 0, 1, 1], [], []>} : vector<64x4xf32>, vector<4x4xf32>, vector<64x4xf32> -> vector<64x4xf32>
    %205 = arith.addf %201, %204 : vector<64x4xf32>
    %c0_303 = arith.constant 0 : index
    %c0_304 = arith.constant 0 : index
    %206 = vector.load %arg8[%c0_303, %c0_304] : memref<64x4xf32, #tpu.memory_space<vmem>>, vector<64x4xf32>
    tpu.vector_store %arg8[%c0_303, %c0_304], %205 {strides = array<i32>} : memref<64x4xf32, #tpu.memory_space<vmem>>, vector<64x4xf32>,
    %c1_305 = arith.constant 1 : index
    %c0_306 = arith.constant 0 : index
    %c0_307 = arith.constant 0 : index
    %207 = vector.load %arg9[%c1_305, %c0_306, %c0_307] : memref<10x8x4xf32, #tpu.memory_space<vmem>>, vector<8x8x4xf32>
    %208 = vector.shape_cast %207 : vector<8x8x4xf32> to vector<64x4xf32>
    %c0_308 = arith.constant 0 : index
    %c0_309 = arith.constant 0 : index
    %209 = vector.load %arg8[%c0_308, %c0_309] : memref<64x4xf32, #tpu.memory_space<vmem>>, vector<64x4xf32>
    %c7_310 = arith.constant 7 : index
    %c4_311 = arith.constant 4 : index
    %c0_312 = arith.constant 0 : index
    %210 = vector.load %arg5[%c7_310, %c4_311, %c0_312] : memref<9x12x4xf32, #tpu.memory_space<vmem>>, vector<1x4x4xf32>
    %211 = vector.shape_cast %210 : vector<1x4x4xf32> to vector<4x4xf32>
    %cst_313 = arith.constant dense<0.000000e+00> : vector<64x4xf32>
    %212 = tpu.matmul %208, %211, %cst_313 {dimension_numbers = #tpu.dot_dimension_numbers<[1], [0], [0], [1], [0, 0, 1, 1], [], []>} : vector<64x4xf32>, vector<4x4xf32>, vector<64x4xf32> -> vector<64x4xf32>
    %213 = arith.addf %209, %212 : vector<64x4xf32>
    %c0_314 = arith.constant 0 : index
    %c0_315 = arith.constant 0 : index
    %214 = vector.load %arg8[%c0_314, %c0_315] : memref<64x4xf32, #tpu.memory_space<vmem>>, vector<64x4xf32>
    tpu.vector_store %arg8[%c0_314, %c0_315], %213 {strides = array<i32>} : memref<64x4xf32, #tpu.memory_space<vmem>>, vector<64x4xf32>,
    %c2_316 = arith.constant 2 : index
    %c0_317 = arith.constant 0 : index
    %c0_318 = arith.constant 0 : index
    %215 = vector.load %arg9[%c2_316, %c0_317, %c0_318] : memref<10x8x4xf32, #tpu.memory_space<vmem>>, vector<8x8x4xf32>
    %216 = vector.shape_cast %215 : vector<8x8x4xf32> to vector<64x4xf32>
    %c0_319 = arith.constant 0 : index
    %c0_320 = arith.constant 0 : index
    %217 = vector.load %arg8[%c0_319, %c0_320] : memref<64x4xf32, #tpu.memory_space<vmem>>, vector<64x4xf32>
    %c8_321 = arith.constant 8 : index
    %c4_322 = arith.constant 4 : index
    %c0_323 = arith.constant 0 : index
    %218 = vector.load %arg5[%c8_321, %c4_322, %c0_323] : memref<9x12x4xf32, #tpu.memory_space<vmem>>, vector<1x4x4xf32>
    %219 = vector.shape_cast %218 : vector<1x4x4xf32> to vector<4x4xf32>
    %cst_324 = arith.constant dense<0.000000e+00> : vector<64x4xf32>
    %220 = tpu.matmul %216, %219, %cst_324 {dimension_numbers = #tpu.dot_dimension_numbers<[1], [0], [0], [1], [0, 0, 1, 1], [], []>} : vector<64x4xf32>, vector<4x4xf32>, vector<64x4xf32> -> vector<64x4xf32>
    %221 = arith.addf %217, %220 : vector<64x4xf32>
    %c0_325 = arith.constant 0 : index
    %c0_326 = arith.constant 0 : index
    %222 = vector.load %arg8[%c0_325, %c0_326] : memref<64x4xf32, #tpu.memory_space<vmem>>, vector<64x4xf32>
    tpu.vector_store %arg8[%c0_325, %c0_326], %221 {strides = array<i32>} : memref<64x4xf32, #tpu.memory_space<vmem>>, vector<64x4xf32>,
    %c0_327 = arith.constant 0 : index
    %c0_328 = arith.constant 0 : index
    %c0_329 = arith.constant 0 : index
    %c2_330 = arith.constant 2 : index
    %c0_331 = arith.constant 0 : index
    %223 = vector.load %arg4[%c0_327, %c0_328, %c0_329, %c2_330, %c0_331] : memref<1x1x10x10x4xf32, #tpu.memory_space<vmem>>, vector<1x1x10x8x4xf32>
    %224 = vector.shape_cast %223 : vector<1x1x10x8x4xf32> to vector<10x8x4xf32>
    %c0_332 = arith.constant 0 : index
    %c0_333 = arith.constant 0 : index
    %c0_334 = arith.constant 0 : index
    %225 = vector.load %arg9[%c0_332, %c0_333, %c0_334] : memref<10x8x4xf32, #tpu.memory_space<vmem>>, vector<10x8x4xf32>
    tpu.vector_store %arg9[%c0_332, %c0_333, %c0_334], %224 {strides = array<i32>} : memref<10x8x4xf32, #tpu.memory_space<vmem>>, vector<10x8x4xf32>,
    %c0_335 = arith.constant 0 : index
    %c0_336 = arith.constant 0 : index
    %c0_337 = arith.constant 0 : index
    %226 = vector.load %arg9[%c0_335, %c0_336, %c0_337] : memref<10x8x4xf32, #tpu.memory_space<vmem>>, vector<8x8x4xf32>
    %227 = vector.shape_cast %226 : vector<8x8x4xf32> to vector<64x4xf32>
    %c0_338 = arith.constant 0 : index
    %c0_339 = arith.constant 0 : index
    %228 = vector.load %arg8[%c0_338, %c0_339] : memref<64x4xf32, #tpu.memory_space<vmem>>, vector<64x4xf32>
    %c6_340 = arith.constant 6 : index
    %c8_341 = arith.constant 8 : index
    %c0_342 = arith.constant 0 : index
    %229 = vector.load %arg5[%c6_340, %c8_341, %c0_342] : memref<9x12x4xf32, #tpu.memory_space<vmem>>, vector<1x4x4xf32>
    %230 = vector.shape_cast %229 : vector<1x4x4xf32> to vector<4x4xf32>
    %cst_343 = arith.constant dense<0.000000e+00> : vector<64x4xf32>
    %231 = tpu.matmul %227, %230, %cst_343 {dimension_numbers = #tpu.dot_dimension_numbers<[1], [0], [0], [1], [0, 0, 1, 1], [], []>} : vector<64x4xf32>, vector<4x4xf32>, vector<64x4xf32> -> vector<64x4xf32>
    %232 = arith.addf %228, %231 : vector<64x4xf32>
    %c0_344 = arith.constant 0 : index
    %c0_345 = arith.constant 0 : index
    %233 = vector.load %arg8[%c0_344, %c0_345] : memref<64x4xf32, #tpu.memory_space<vmem>>, vector<64x4xf32>
    tpu.vector_store %arg8[%c0_344, %c0_345], %232 {strides = array<i32>} : memref<64x4xf32, #tpu.memory_space<vmem>>, vector<64x4xf32>,
    %c1_346 = arith.constant 1 : index
    %c0_347 = arith.constant 0 : index
    %c0_348 = arith.constant 0 : index
    %234 = vector.load %arg9[%c1_346, %c0_347, %c0_348] : memref<10x8x4xf32, #tpu.memory_space<vmem>>, vector<8x8x4xf32>
    %235 = vector.shape_cast %234 : vector<8x8x4xf32> to vector<64x4xf32>
    %c0_349 = arith.constant 0 : index
    %c0_350 = arith.constant 0 : index
    %236 = vector.load %arg8[%c0_349, %c0_350] : memref<64x4xf32, #tpu.memory_space<vmem>>, vector<64x4xf32>
    %c7_351 = arith.constant 7 : index
    %c8_352 = arith.constant 8 : index
    %c0_353 = arith.constant 0 : index
    %237 = vector.load %arg5[%c7_351, %c8_352, %c0_353] : memref<9x12x4xf32, #tpu.memory_space<vmem>>, vector<1x4x4xf32>
    %238 = vector.shape_cast %237 : vector<1x4x4xf32> to vector<4x4xf32>
    %cst_354 = arith.constant dense<0.000000e+00> : vector<64x4xf32>
    %239 = tpu.matmul %235, %238, %cst_354 {dimension_numbers = #tpu.dot_dimension_numbers<[1], [0], [0], [1], [0, 0, 1, 1], [], []>} : vector<64x4xf32>, vector<4x4xf32>, vector<64x4xf32> -> vector<64x4xf32>
    %240 = arith.addf %236, %239 : vector<64x4xf32>
    %c0_355 = arith.constant 0 : index
    %c0_356 = arith.constant 0 : index
    %241 = vector.load %arg8[%c0_355, %c0_356] : memref<64x4xf32, #tpu.memory_space<vmem>>, vector<64x4xf32>
    tpu.vector_store %arg8[%c0_355, %c0_356], %240 {strides = array<i32>} : memref<64x4xf32, #tpu.memory_space<vmem>>, vector<64x4xf32>,
    %c2_357 = arith.constant 2 : index
    %c0_358 = arith.constant 0 : index
    %c0_359 = arith.constant 0 : index
    %242 = vector.load %arg9[%c2_357, %c0_358, %c0_359] : memref<10x8x4xf32, #tpu.memory_space<vmem>>, vector<8x8x4xf32>
    %243 = vector.shape_cast %242 : vector<8x8x4xf32> to vector<64x4xf32>
    %c0_360 = arith.constant 0 : index
    %c0_361 = arith.constant 0 : index
    %244 = vector.load %arg8[%c0_360, %c0_361] : memref<64x4xf32, #tpu.memory_space<vmem>>, vector<64x4xf32>
    %c8_362 = arith.constant 8 : index
    %c8_363 = arith.constant 8 : index
    %c0_364 = arith.constant 0 : index
    %245 = vector.load %arg5[%c8_362, %c8_363, %c0_364] : memref<9x12x4xf32, #tpu.memory_space<vmem>>, vector<1x4x4xf32>
    %246 = vector.shape_cast %245 : vector<1x4x4xf32> to vector<4x4xf32>
    %cst_365 = arith.constant dense<0.000000e+00> : vector<64x4xf32>
    %247 = tpu.matmul %243, %246, %cst_365 {dimension_numbers = #tpu.dot_dimension_numbers<[1], [0], [0], [1], [0, 0, 1, 1], [], []>} : vector<64x4xf32>, vector<4x4xf32>, vector<64x4xf32> -> vector<64x4xf32>
    %248 = arith.addf %244, %247 : vector<64x4xf32>
    %c0_366 = arith.constant 0 : index
    %c0_367 = arith.constant 0 : index
    %249 = vector.load %arg8[%c0_366, %c0_367] : memref<64x4xf32, #tpu.memory_space<vmem>>, vector<64x4xf32>
    tpu.vector_store %arg8[%c0_366, %c0_367], %248 {strides = array<i32>} : memref<64x4xf32, #tpu.memory_space<vmem>>, vector<64x4xf32>,
    %c0_368 = arith.constant 0 : index
    %c0_369 = arith.constant 0 : index
    %250 = vector.load %arg8[%c0_368, %c0_369] : memref<64x4xf32, #tpu.memory_space<vmem>>, vector<64x4xf32>
    %251 = vector.shape_cast %250 : vector<64x4xf32> to vector<8x8x4xf32>
    %c0_370 = arith.constant 0 : index
    %c0_371 = arith.constant 0 : index
    %c0_372 = arith.constant 0 : index
    %c0_373 = arith.constant 0 : index
    %c0_374 = arith.constant 0 : index
    %252 = vector.load %arg7[%c0_370, %c0_371, %c0_372, %c0_373, %c0_374] : memref<1x1x8x8x4xf32, #tpu.memory_space<vmem>>, vector<1x1x8x8x4xf32>
    %253 = vector.shape_cast %252 : vector<1x1x8x8x4xf32> to vector<8x8x4xf32>
    %254 = vector.shape_cast %251 : vector<8x8x4xf32> to vector<1x1x8x8x4xf32>
    tpu.vector_store %arg7[%c0_370, %c0_371, %c0_372, %c0_373, %c0_374], %254 {strides = array<i32>} : memref<1x1x8x8x4xf32, #tpu.memory_space<vmem>>, vector<1x1x8x8x4xf32>,
    return
  }
  func.func @transform_0(%arg0: i32, %arg1: i32) -> (i32, i32, i32, i32, i32) {
    %c-1_i32 = arith.constant -1 : i32
    %0 = arith.addi %arg1, %c-1_i32 : i32
    %c0_i32 = arith.constant 0 : i32
    %1 = arith.maxsi %0, %c0_i32 : i32
    %c7_i32 = arith.constant 7 : i32
    %2 = arith.minsi %1, %c7_i32 : i32
    %c0_i32_0 = arith.constant 0 : i32
    %c0_i32_1 = arith.constant 0 : i32
    %c0_i32_2 = arith.constant 0 : i32
    %c0_i32_3 = arith.constant 0 : i32
    return %arg0, %2, %c0_i32_0, %c0_i32_1, %c0_i32_2 : i32, i32, i32, i32, i32
  }
  func.func @transform_1(%arg0: i32, %arg1: i32) -> (i32, i32, i32, i32, i32) {
    %c0_i32 = arith.constant 0 : i32
    %0 = arith.addi %arg1, %c0_i32 : i32
    %c0_i32_0 = arith.constant 0 : i32
    %1 = arith.maxsi %0, %c0_i32_0 : i32
    %c7_i32 = arith.constant 7 : i32
    %2 = arith.minsi %1, %c7_i32 : i32
    %c0_i32_1 = arith.constant 0 : i32
    %c0_i32_2 = arith.constant 0 : i32
    %c0_i32_3 = arith.constant 0 : i32
    %c0_i32_4 = arith.constant 0 : i32
    return %arg0, %2, %c0_i32_1, %c0_i32_2, %c0_i32_3 : i32, i32, i32, i32, i32
  }
  func.func @transform_2(%arg0: i32, %arg1: i32) -> (i32, i32, i32, i32, i32) {
    %c1_i32 = arith.constant 1 : i32
    %0 = arith.addi %arg1, %c1_i32 : i32
    %c0_i32 = arith.constant 0 : i32
    %1 = arith.maxsi %0, %c0_i32 : i32
    %c7_i32 = arith.constant 7 : i32
    %2 = arith.minsi %1, %c7_i32 : i32
    %c0_i32_0 = arith.constant 0 : i32
    %c0_i32_1 = arith.constant 0 : i32
    %c0_i32_2 = arith.constant 0 : i32
    %c0_i32_3 = arith.constant 0 : i32
    return %arg0, %2, %c0_i32_0, %c0_i32_1, %c0_i32_2 : i32, i32, i32, i32, i32
  }
  func.func @transform_3(%arg0: i32, %arg1: i32) -> (i32, i32, i32) {
    %c0_i32 = arith.constant 0 : i32
    %c0_i32_0 = arith.constant 0 : i32
    %c0_i32_1 = arith.constant 0 : i32
    %c0_i32_2 = arith.constant 0 : i32
    return %c0_i32, %c0_i32_0, %c0_i32_1 : i32, i32, i32
  }
  func.func @transform_4(%arg0: i32, %arg1: i32) -> (i32, i32) {
    %c0_i32 = arith.constant 0 : i32
    %c0_i32_0 = arith.constant 0 : i32
    %c0_i32_1 = arith.constant 0 : i32
    return %c0_i32, %c0_i32_0 : i32, i32
  }
  func.func @transform_5(%arg0: i32, %arg1: i32) -> (i32, i32, i32, i32, i32) {
    %c0_i32 = arith.constant 0 : i32
    %c0_i32_0 = arith.constant 0 : i32
    %c0_i32_1 = arith.constant 0 : i32
    %c0_i32_2 = arith.constant 0 : i32
    return %arg0, %arg1, %c0_i32, %c0_i32_0, %c0_i32_1 : i32, i32, i32, i32, i32
  }
}

</mosaic_0001>

<llo_original>
// kernel: tpu_custom_call.1
$region0: #{tpu_custom_call.1}
  #allocation0 [shape = 'u32[]', space=smem, size = 0x4, offset = 0x4, fixed_abs, tag = 'smem constant byte address 0x4 - core index']
  #allocation1 [shape = 'u32[144,128]{1,0:T(1,128)}', space=vmem, size = 0x12000, scoped, tag = 'internal scratch']
  #allocation2 [shape = 'f32[64,4]{1,0:T(8,128)}', space=vmem, size = 0x8000, scoped, tag = 'scratch operand']
  #allocation3 [shape = 'f32[10,8,4]{2,1,0:T(8,128)}', space=vmem, size = 0xa000, scoped, tag = 'scratch operand']
  %s0 = inlined_call_operand.vmem [shape: f32[2,8,10,10,4], index: 0, kind: input, shape index: {}]
  %s1 = inlined_call_operand.vmem [shape: f32[2,8,10,10,4], index: 1, kind: input, shape index: {}]
  %s2 = inlined_call_operand.vmem [shape: f32[2,8,10,10,4], index: 2, kind: input, shape index: {}]
  %s3 = inlined_call_operand.vmem [shape: f32[9,12,4], index: 3, kind: input, shape index: {}]
  %s4 = inlined_call_operand.vmem [shape: f32[1,4], index: 4, kind: input, shape index: {}]
  %s5 = inlined_call_operand.vmem [shape: f32[2,8,8,8,4], index: 5, kind: output, shape index: {}]
  %s6 = sld [smem:[#allocation0]]
  $region53: #{tpu_custom_call.1} parent=0
    _
  %s8 = ssub.s32 1, %s6
  %s9 = scalar_select 0, %s8, %s6
  loop: start=0, step=1, limit=18
  $region2: #{tpu_custom_call.1} parent=0 // loop_pre_header
    _
  $region3: #{tpu_custom_call.1} parent=0 // loop_header
    %s11 = sphi 0, %s15
    %p12 = scmp.ge.s32.totalorder %s11, 18
    %s18 = sphi 0, %s30
    %s19 = sphi 0, %s26
    %s20 = sphi 0, %s18
    %s21 = sphi 0, %s19
    %s22 = sphi 0, %s20
    %s23 = sphi 0, %s21
    %s45 = sphi 0, %s47
    %s48 = sphi 0, %s45
    %s49 = sphi 0, %s48
    %s65 = sphi 0, %s49
    %s81 = sphi 0, %s83
    %s84 = sphi 0, %s81
    %s85 = sphi 0, %s84
    %s101 = sphi 0, %s85
    %s119 = sphi 0, %s121
    %s122 = sphi 0, %s119
    %s123 = sphi 0, %s122
    %s139 = sphi 0, %s123
    %s143 = sphi 0, %s143
    %s145 = sphi 0, %s143
    %s146 = sphi 0, %s145
    %s160 = sphi 0, %s146
    %s164 = sphi 0, %s164
    %s166 = sphi 0, %s164
    %s167 = sphi 0, %s166
    %s181 = sphi 0, %s167
    %s189 = sphi 0, %s191
    %s192 = sphi 0, %s189
    %s193 = sphi 0, %s192
    %s209 = sphi 0, %s193
  $region4: #{tpu_custom_call.1} parent=0 // loop_header_branch
    %14 = sbr.rel (%p12) target = $region8
  $region5: #{tpu_custom_call.1} parent=0 // loop_body
    %s16 = ssub.s32 %s11, 1
    %s17 = ssub.s32 %s11, 2
    %s24 = sadd.s32 1, %s19
    %p25 = scmp.ge.s32.totalorder %s24, 8
    %s26 = scalar_select %p25, 0, %s24
    %s27 = sadd.s32 1, %s18
    %s28 = scalar_select %p25, %s27, %s18
    %p29 = scmp.ge.s32.totalorder %s28, 2
    %s30 = scalar_select %p29, 0, %s28
    %s31 = sadd.s32 %s19, 4294967295
    %p32 = scmp.gt.s32.totalorder %s31, 0
    %s33 = scalar_select %p32, %s31, 0
    %p34 = scmp.lt.s32.totalorder %s33, 7
    %s35 = scalar_select %p34, %s33, 7
    %s36 = sadd.s32 %s26, 4294967295
    %p37 = scmp.gt.s32.totalorder %s36, 0
    %s38 = scalar_select %p37, %s36, 0
    %p39 = scmp.lt.s32.totalorder %s38, 7
    %s40 = scalar_select %p39, %s38, 7
    %s41 = ssub.s32 %s18, %s30
    %s42 = ssub.s32 %s35, %s40
    %s43 = sor.u32 %s41, %s42
    %p44 = scmp.eq.s32.totalorder %s43, 0
    %s46 = sadd.s32 %s45, 1
    %s47 = scalar_select %p44, %s45, %s46
    %p50 = pneg %p44
    %p51 = scmp.eq.s32.totalorder %s11, 15
    %p52 = por %p50, %p51
    %p53 = scmp.ne.s32.totalorder %s45, %s48
    %p54 = scmp.eq.s32.totalorder %s11, 0
    %p55 = por %p53, %p54
    %p56 = scmp.ne.s32.totalorder %s45, %s48
    %p57 = scmp.eq.s32.totalorder %s16, 15
    %p58 = por %p56, %p57
    %p59 = scmp.ne.s32.totalorder %s48, %s49
    %p60 = scmp.eq.s32.totalorder %s16, 0
    %p61 = por %p59, %p60
    %p62 = scmp.ne.s32.totalorder %s48, %s49
    %p63 = scmp.eq.s32.totalorder %s17, 15
    %p64 = por %p62, %p63
    %p66 = scmp.ne.s32.totalorder %s49, %s65
    %p67 = scmp.eq.s32.totalorder %s17, 0
    %p68 = por %p66, %p67
    %p69 = scmp.gt.s32.totalorder %s19, 0
    %s70 = scalar_select %p69, %s19, 0
    %p71 = scmp.lt.s32.totalorder %s70, 7
    %s72 = scalar_select %p71, %s70, 7
    %p73 = scmp.gt.s32.totalorder %s26, 0
    %s74 = scalar_select %p73, %s26, 0
    %p75 = scmp.lt.s32.totalorder %s74, 7
    %s76 = scalar_select %p75, %s74, 7
    %s77 = ssub.s32 %s18, %s30
    %s78 = ssub.s32 %s72, %s76
    %s79 = sor.u32 %s77, %s78
    %p80 = scmp.eq.s32.totalorder %s79, 0
    %s82 = sadd.s32 %s81, 1
    %s83 = scalar_select %p80, %s81, %s82
    %p86 = pneg %p80
    %p87 = scmp.eq.s32.totalorder %s11, 15
    %p88 = por %p86, %p87
    %p89 = scmp.ne.s32.totalorder %s81, %s84
    %p90 = scmp.eq.s32.totalorder %s11, 0
    %p91 = por %p89, %p90
    %p92 = scmp.ne.s32.totalorder %s81, %s84
    %p93 = scmp.eq.s32.totalorder %s16, 15
    %p94 = por %p92, %p93
    %p95 = scmp.ne.s32.totalorder %s84, %s85
    %p96 = scmp.eq.s32.totalorder %s16, 0
    %p97 = por %p95, %p96
    %p98 = scmp.ne.s32.totalorder %s84, %s85
    %p99 = scmp.eq.s32.totalorder %s17, 15
    %p100 = por %p98, %p99
    %p102 = scmp.ne.s32.totalorder %s85, %s101
    %p103 = scmp.eq.s32.totalorder %s17, 0
    %p104 = por %p102, %p103
    %s105 = sadd.s32 %s19, 1
    %p106 = scmp.gt.s32.totalorder %s105, 0
    %s107 = scalar_select %p106, %s105, 0
    %p108 = scmp.lt.s32.totalorder %s107, 7
    %s109 = scalar_select %p108, %s107, 7
    %s110 = sadd.s32 %s26, 1
    %p111 = scmp.gt.s32.totalorder %s110, 0
    %s112 = scalar_select %p111, %s110, 0
    %p113 = scmp.lt.s32.totalorder %s112, 7
    %s114 = scalar_select %p113, %s112, 7
    %s115 = ssub.s32 %s18, %s30
    %s116 = ssub.s32 %s109, %s114
    %s117 = sor.u32 %s115, %s116
    %p118 = scmp.eq.s32.totalorder %s117, 0
    %s120 = sadd.s32 %s119, 1
    %s121 = scalar_select %p118, %s119, %s120
    %p124 = pneg %p118
    %p125 = scmp.eq.s32.totalorder %s11, 15
    %p126 = por %p124, %p125
    %p127 = scmp.ne.s32.totalorder %s119, %s122
    %p128 = scmp.eq.s32.totalorder %s11, 0
    %p129 = por %p127, %p128
    %p130 = scmp.ne.s32.totalorder %s119, %s122
    %p131 = scmp.eq.s32.totalorder %s16, 15
    %p132 = por %p130, %p131
    %p133 = scmp.ne.s32.totalorder %s122, %s123
    %p134 = scmp.eq.s32.totalorder %s16, 0
    %p135 = por %p133, %p134
    %p136 = scmp.ne.s32.totalorder %s122, %s123
    %p137 = scmp.eq.s32.totalorder %s17, 15
    %p138 = por %p136, %p137
    %p140 = scmp.ne.s32.totalorder %s123, %s139
    %p141 = scmp.eq.s32.totalorder %s17, 0
    %p142 = por %p140, %p141
    %s144 = sadd.s32 %s143, 1
    %p147 = scmp.eq.s32.totalorder %s11, 15
    %p148 = scmp.ne.s32.totalorder %s143, %s145
    %p149 = scmp.eq.s32.totalorder %s11, 0
    %p150 = por %p148, %p149
    %p151 = scmp.ne.s32.totalorder %s143, %s145
    %p152 = scmp.eq.s32.totalorder %s16, 15
    %p153 = por %p151, %p152
    %p154 = scmp.ne.s32.totalorder %s145, %s146
    %p155 = scmp.eq.s32.totalorder %s16, 0
    %p156 = por %p154, %p155
    %p157 = scmp.ne.s32.totalorder %s145, %s146
    %p158 = scmp.eq.s32.totalorder %s17, 15
    %p159 = por %p157, %p158
    %p161 = scmp.ne.s32.totalorder %s146, %s160
    %p162 = scmp.eq.s32.totalorder %s17, 0
    %p163 = por %p161, %p162
    %s165 = sadd.s32 %s164, 1
    %p168 = scmp.eq.s32.totalorder %s11, 15
    %p169 = scmp.ne.s32.totalorder %s164, %s166
    %p170 = scmp.eq.s32.totalorder %s11, 0
    %p171 = por %p169, %p170
    %p172 = scmp.ne.s32.totalorder %s164, %s166
    %p173 = scmp.eq.s32.totalorder %s16, 15
    %p174 = por %p172, %p173
    %p175 = scmp.ne.s32.totalorder %s166, %s167
    %p176 = scmp.eq.s32.totalorder %s16, 0
    %p177 = por %p175, %p176
    %p178 = scmp.ne.s32.totalorder %s166, %s167
    %p179 = scmp.eq.s32.totalorder %s17, 15
    %p180 = por %p178, %p179
    %p182 = scmp.ne.s32.totalorder %s167, %s181
    %p183 = scmp.eq.s32.totalorder %s17, 0
    %p184 = por %p182, %p183
    %s185 = ssub.s32 %s18, %s30
    %s186 = ssub.s32 %s19, %s26
    %s187 = sor.u32 %s185, %s186
    %p188 = scmp.eq.s32.totalorder %s187, 0
    %s190 = sadd.s32 %s189, 1
    %s191 = scalar_select %p188, %s189, %s190
    %p194 = pneg %p188
    %p195 = scmp.eq.s32.totalorder %s11, 15
    %p196 = por %p194, %p195
    %p197 = scmp.ne.s32.totalorder %s189, %s192
    %p198 = scmp.eq.s32.totalorder %s11, 0
    %p199 = por %p197, %p198
    %p200 = scmp.ne.s32.totalorder %s189, %s192
    %p201 = scmp.eq.s32.totalorder %s16, 15
    %p202 = por %p200, %p201
    %p203 = scmp.ne.s32.totalorder %s192, %s193
    %p204 = scmp.eq.s32.totalorder %s16, 0
    %p205 = por %p203, %p204
    %p206 = scmp.ne.s32.totalorder %s192, %s193
    %p207 = scmp.eq.s32.totalorder %s17, 15
    %p208 = por %p206, %p207
    %p210 = scmp.ne.s32.totalorder %s193, %s209
    %p211 = scmp.eq.s32.totalorder %s17, 0
    %p212 = por %p210, %p211
    %p213 = scmp.le.s32.totalorder 1, %s11
    %p214 = scmp.lt.s32.totalorder %s11, 17
    %p215 = pnand %p213, %p214
    %p216 = pneg %p215
    // Predicated region
    $region9: #{tpu_custom_call.1} parent=5 // pred_check
      _
    $region10: #{tpu_custom_call.1} parent=5 // pred_check_branch
      %218 = sbr.rel (%p215) target = $region12
    $region11: #{tpu_custom_call.1} parent=5 // pred_region
      %s219 = ssub.s32 %s11, 1
      // Predicated region
      $region13: #{tpu_custom_call.1} parent=11 // pred_check
        %p220 = pneg %p156
      $region14: #{tpu_custom_call.1} parent=11 // pred_check_branch
        %222 = sbr.rel (%p220) target = $region16
      $region15: #{tpu_custom_call.1} parent=11 // pred_region
        _
      $region16: #{tpu_custom_call.1} parent=11 // pred_fallthru
        _
      // Predicated region
      $region17: #{tpu_custom_call.1} parent=11 // pred_check
        %p223 = pneg %p177
      $region18: #{tpu_custom_call.1} parent=11 // pred_check_branch
        %225 = sbr.rel (%p223) target = $region20
      $region19: #{tpu_custom_call.1} parent=11 // pred_region
        _
      $region20: #{tpu_custom_call.1} parent=11 // pred_fallthru
        _
    $region12: #{tpu_custom_call.1} parent=5 // pred_fallthru
      _
    %p226 = scmp.lt.s32.totalorder %s11, 16
    // Predicated region
    $region21: #{tpu_custom_call.1} parent=5 // pred_check
      %p227 = pneg %p226
    $region22: #{tpu_custom_call.1} parent=5 // pred_check_branch
      %229 = sbr.rel (%p227) target = $region24
    $region23: #{tpu_custom_call.1} parent=5 // pred_region
      // Predicated region
      $region25: #{tpu_custom_call.1} parent=23 // pred_check
        %p230 = pneg %p55
      $region26: #{tpu_custom_call.1} parent=23 // pred_check_branch
        %232 = sbr.rel (%p230) target = $region28
      $region27: #{tpu_custom_call.1} parent=23 // pred_region
        %s233 = sadd.s32 %s19, 4294967295
        %p234 = scmp.gt.s32.totalorder %s233, 0
        %s235 = scalar_select %p234, %s233, 0
        %p236 = scmp.lt.s32.totalorder %s235, 7
        %s237 = scalar_select %p236, %s235, 7
        %p238 = scmp.lt.s32.totalorder %s18, 1
        %s239 = scalar_select %p238, %s18, 1
        %p240 = scmp.lt.s32.totalorder %s237, 7
        %s241 = scalar_select %p240, %s237, 7
        %s242 = smul.addr %s241, 20
        %s243 = smul.addr %s239, 160
        %s244 = sadd.s32 %s242, %s243
        %s245 = smul.addr %s244, 8
        %s246 = scalar_lea.vmem %s0, %s245
        %s247 = sadd.s32 %s19, 4294967295
        %p248 = scmp.gt.s32.totalorder %s247, 0
        %s249 = scalar_select %p248, %s247, 0
        %p250 = scmp.lt.s32.totalorder %s249, 7
        %s251 = scalar_select %p250, %s249, 7
      $region28: #{tpu_custom_call.1} parent=23 // pred_fallthru
        _
      // Predicated region
      $region29: #{tpu_custom_call.1} parent=23 // pred_check
        %p252 = pneg %p91
      $region30: #{tpu_custom_call.1} parent=23 // pred_check_branch
        %254 = sbr.rel (%p252) target = $region32
      $region31: #{tpu_custom_call.1} parent=23 // pred_region
        %p255 = scmp.gt.s32.totalorder %s19, 0
        %s256 = scalar_select %p255, %s19, 0
        %p257 = scmp.lt.s32.totalorder %s256, 7
        %s258 = scalar_select %p257, %s256, 7
        %p259 = scmp.lt.s32.totalorder %s18, 1
        %s260 = scalar_select %p259, %s18, 1
        %p261 = scmp.lt.s32.totalorder %s258, 7
        %s262 = scalar_select %p261, %s258, 7
        %s263 = smul.addr %s262, 20
        %s264 = smul.addr %s260, 160
        %s265 = sadd.s32 %s263, %s264
        %s266 = smul.addr %s265, 8
        %s267 = scalar_lea.vmem %s1, %s266
        %p268 = scmp.gt.s32.totalorder %s19, 0
        %s269 = scalar_select %p268, %s19, 0
        %p270 = scmp.lt.s32.totalorder %s269, 7
        %s271 = scalar_select %p270, %s269, 7
      $region32: #{tpu_custom_call.1} parent=23 // pred_fallthru
        _
      // Predicated region
      $region33: #{tpu_custom_call.1} parent=23 // pred_check
        %p272 = pneg %p129
      $region34: #{tpu_custom_call.1} parent=23 // pred_check_branch
        %274 = sbr.rel (%p272) target = $region36
      $region35: #{tpu_custom_call.1} parent=23 // pred_region
        %s275 = sadd.s32 %s19, 1
        %p276 = scmp.gt.s32.totalorder %s275, 0
        %s277 = scalar_select %p276, %s275, 0
        %p278 = scmp.lt.s32.totalorder %s277, 7
        %s279 = scalar_select %p278, %s277, 7
        %p280 = scmp.lt.s32.totalorder %s18, 1
        %s281 = scalar_select %p280, %s18, 1
        %p282 = scmp.lt.s32.totalorder %s279, 7
        %s283 = scalar_select %p282, %s279, 7
        %s284 = smul.addr %s283, 20
        %s285 = smul.addr %s281, 160
        %s286 = sadd.s32 %s284, %s285
        %s287 = smul.addr %s286, 8
        %s288 = scalar_lea.vmem %s2, %s287
        %s289 = sadd.s32 %s19, 1
        %p290 = scmp.gt.s32.totalorder %s289, 0
        %s291 = scalar_select %p290, %s289, 0
        %p292 = scmp.lt.s32.totalorder %s291, 7
        %s293 = scalar_select %p292, %s291, 7
      $region36: #{tpu_custom_call.1} parent=23 // pred_fallthru
        _
    $region24: #{tpu_custom_call.1} parent=5 // pred_fallthru
      _
    %p294 = scmp.le.s32.totalorder 1, %s11
    %p295 = scmp.lt.s32.totalorder %s11, 17
    %p296 = pnand %p294, %p295
    %p297 = pneg %p296
    // Predicated region
    $region37: #{tpu_custom_call.1} parent=5 // pred_check
      _
    $region38: #{tpu_custom_call.1} parent=5 // pred_check_branch
      %299 = sbr.rel (%p296) target = $region40
    $region39: #{tpu_custom_call.1} parent=5 // pred_region
      %s300 = ssub.s32 %s11, 1
      %s301 = sadd.s32 %s21, 4294967295
      %p302 = scmp.gt.s32.totalorder %s301, 0
      %s303 = scalar_select %p302, %s301, 0
      %p304 = scmp.lt.s32.totalorder %s303, 7
      %s305 = scalar_select %p304, %s303, 7
      %p306 = scmp.lt.s32.totalorder %s20, 1
      %s307 = scalar_select %p306, %s20, 1
      %p308 = scmp.lt.s32.totalorder %s305, 7
      %s309 = scalar_select %p308, %s305, 7
      %s310 = smul.addr %s309, 20
      %s311 = smul.addr %s307, 160
      %s312 = sadd.s32 %s310, %s311
      %s313 = smul.addr %s312, 8
      %s314 = scalar_lea.vmem %s0, %s313
      %p315 = pneg %p61
      %p316 = pneg %p58
      %p317 = scmp.gt.s32.totalorder %s21, 0
      %s318 = scalar_select %p317, %s21, 0
      %p319 = scmp.lt.s32.totalorder %s318, 7
      %s320 = scalar_select %p319, %s318, 7
      %p321 = scmp.lt.s32.totalorder %s20, 1
      %s322 = scalar_select %p321, %s20, 1
      %p323 = scmp.lt.s32.totalorder %s320, 7
      %s324 = scalar_select %p323, %s320, 7
      %s325 = smul.addr %s324, 20
      %s326 = smul.addr %s322, 160
      %s327 = sadd.s32 %s325, %s326
      %s328 = smul.addr %s327, 8
      %s329 = scalar_lea.vmem %s1, %s328
      %p330 = pneg %p97
      %p331 = pneg %p94
      %s332 = sadd.s32 %s21, 1
      %p333 = scmp.gt.s32.totalorder %s332, 0
      %s334 = scalar_select %p333, %s332, 0
      %p335 = scmp.lt.s32.totalorder %s334, 7
      %s336 = scalar_select %p335, %s334, 7
      %p337 = scmp.lt.s32.totalorder %s20, 1
      %s338 = scalar_select %p337, %s20, 1
      %p339 = scmp.lt.s32.totalorder %s336, 7
      %s340 = scalar_select %p339, %s336, 7
      %s341 = smul.addr %s340, 20
      %s342 = smul.addr %s338, 160
      %s343 = sadd.s32 %s341, %s342
      %s344 = smul.addr %s343, 8
      %s345 = scalar_lea.vmem %s2, %s344
      %p346 = pneg %p135
      %p347 = pneg %p132
      %p348 = pneg %p156
      %p349 = pneg %p153
      %p350 = pneg %p177
      %p351 = pneg %p174
      %p352 = pneg %p205
      %p353 = pneg %p202
      %p354 = scmp.lt.s32.totalorder %s20, 1
      %s355 = scalar_select %p354, %s20, 1
      %p356 = scmp.lt.s32.totalorder %s21, 7
      %s357 = scalar_select %p356, %s21, 7
      %s358 = smul.addr %s357, 8
      %s359 = smul.addr %s355, 64
      %s360 = sadd.s32 %s358, %s359
      %s361 = smul.addr %s360, 8
      %s362 = scalar_lea.vmem %s5, %s361
      %s363 = sadd.s32 %s21, 4294967295
      %p364 = scmp.gt.s32.totalorder %s363, 0
      %s365 = scalar_select %p364, %s363, 0
      %p366 = scmp.lt.s32.totalorder %s365, 7
      %s367 = scalar_select %p366, %s365, 7
      %p368 = scmp.lt.s32.totalorder %s20, 1
      %s369 = scalar_select %p368, %s20, 1
      %p370 = scmp.lt.s32.totalorder %s367, 7
      %s371 = scalar_select %p370, %s367, 7
      %s372 = smul.addr %s371, 20
      %s373 = smul.addr %s369, 160
      %s374 = sadd.s32 %s372, %s373
      %s375 = smul.addr %s374, 8
      %s376 = scalar_lea.vmem %s0, %s375
      %s377 = sadd.s32 %s21, 4294967295
      %p378 = scmp.gt.s32.totalorder %s377, 0
      %s379 = scalar_select %p378, %s377, 0
      %p380 = scmp.lt.s32.totalorder %s379, 7
      %s381 = scalar_select %p380, %s379, 7
      %p382 = scmp.gt.s32.totalorder %s21, 0
      %s383 = scalar_select %p382, %s21, 0
      %p384 = scmp.lt.s32.totalorder %s383, 7
      %s385 = scalar_select %p384, %s383, 7
      %p386 = scmp.lt.s32.totalorder %s20, 1
      %s387 = scalar_select %p386, %s20, 1
      %p388 = scmp.lt.s32.totalorder %s385, 7
      %s389 = scalar_select %p388, %s385, 7
      %s390 = smul.addr %s389, 20
      %s391 = smul.addr %s387, 160
      %s392 = sadd.s32 %s390, %s391
      %s393 = smul.addr %s392, 8
      %s394 = scalar_lea.vmem %s1, %s393
      %p395 = scmp.gt.s32.totalorder %s21, 0
      %s396 = scalar_select %p395, %s21, 0
      %p397 = scmp.lt.s32.totalorder %s396, 7
      %s398 = scalar_select %p397, %s396, 7
      %s399 = sadd.s32 %s21, 1
      %p400 = scmp.gt.s32.totalorder %s399, 0
      %s401 = scalar_select %p400, %s399, 0
      %p402 = scmp.lt.s32.totalorder %s401, 7
      %s403 = scalar_select %p402, %s401, 7
      %p404 = scmp.lt.s32.totalorder %s20, 1
      %s405 = scalar_select %p404, %s20, 1
      %p406 = scmp.lt.s32.totalorder %s403, 7
      %s407 = scalar_select %p406, %s403, 7
      %s408 = smul.addr %s407, 20
      %s409 = smul.addr %s405, 160
      %s410 = sadd.s32 %s408, %s409
      %s411 = smul.addr %s410, 8
      %s412 = scalar_lea.vmem %s2, %s411
      %s413 = sadd.s32 %s21, 1
      %p414 = scmp.gt.s32.totalorder %s413, 0
      %s415 = scalar_select %p414, %s413, 0
      %p416 = scmp.lt.s32.totalorder %s415, 7
      %s417 = scalar_select %p416, %s415, 7
      %p418 = scmp.lt.s32.totalorder %s20, 1
      %s419 = scalar_select %p418, %s20, 1
      %p420 = scmp.lt.s32.totalorder %s21, 7
      %s421 = scalar_select %p420, %s21, 7
      %s422 = smul.addr %s421, 8
      %s423 = smul.addr %s419, 64
      %s424 = sadd.s32 %s422, %s423
      %s425 = smul.addr %s424, 8
      %s426 = scalar_lea.vmem %s5, %s425
      %s427 = scalar_lea.vmem %s394, 16
      %v428 = vld [vmem:[%s427 + $0x1] sm:$0xff]
      %v429 = vld [vmem:[%s427 + $0x11] sm:$0xff]
      %v430 = vld [vmem:[%s427 + $0x21] sm:$0xff]
      %v431 = vld [vmem:[%s427 + $0x31] sm:$0xff]
      %v432 = vld [vmem:[%s427 + $0x41] sm:$0xff]
      %v433 = vld [vmem:[%s427 + $0x51] sm:$0xff]
      %v434 = vld [vmem:[%s427 + $0x61] sm:$0xff]
      %v435 = vld [vmem:[%s427 + $0x71] sm:$0xff]
      %v436 = vld [vmem:[%s4] sm:$0x1]
      %v438 = vlaneseq
      %v439 = vshrl.u32 %v438, 7
      %v440 = vsub.s32 0, %v439
      %v441 = vrot.slane %v436, %v440
      %v443 = vadd.f32 %v428, %v441
      %v444 = vadd.f32 %v429, %v441
      %v445 = vadd.f32 %v430, %v441
      %v446 = vadd.f32 %v431, %v441
      %v447 = vadd.f32 %v432, %v441
      %v448 = vadd.f32 %v433, %v441
      %v449 = vadd.f32 %v434, %v441
      %v450 = vadd.f32 %v435, %v441
      %vm451 = vcmask 31744
      %452 = vst.msk [vmem:[#allocation2] sm:$0xff] %vm451, %v443
      %453 = vst.msk [vmem:[#allocation2 + $0x8] sm:$0xff] %vm451, %v444
      %454 = vst.msk [vmem:[#allocation2 + $0x10] sm:$0xff] %vm451, %v445
      %455 = vst.msk [vmem:[#allocation2 + $0x18] sm:$0xff] %vm451, %v446
      %456 = vst.msk [vmem:[#allocation2 + $0x20] sm:$0xff] %vm451, %v447
      %457 = vst.msk [vmem:[#allocation2 + $0x28] sm:$0xff] %vm451, %v448
      %458 = vst.msk [vmem:[#allocation2 + $0x30] sm:$0xff] %vm451, %v449
      %459 = vst.msk [vmem:[#allocation2 + $0x38] sm:$0xff] %vm451, %v450
      %v460 = vld [vmem:[%s376] sm:$0xff]
      %v461 = vld [vmem:[%s376 + $0x10] sm:$0xff]
      %v462 = vld [vmem:[%s376 + $0x20] sm:$0xff]
      %v463 = vld [vmem:[%s376 + $0x30] sm:$0xff]
      %v464 = vld [vmem:[%s376 + $0x40] sm:$0xff]
      %v465 = vld [vmem:[%s376 + $0x50] sm:$0xff]
      %v466 = vld [vmem:[%s376 + $0x60] sm:$0xff]
      %v467 = vld [vmem:[%s376 + $0x70] sm:$0xff]
      %v468 = vld [vmem:[%s376 + $0x80] sm:$0xff]
      %v469 = vld [vmem:[%s376 + $0x90] sm:$0xff]
      %470 = vst.msk [vmem:[#allocation3] sm:$0xff] %vm451, %v460
      %471 = vst.msk [vmem:[#allocation3 + $0x8] sm:$0xff] %vm451, %v461
      %472 = vst.msk [vmem:[#allocation3 + $0x10] sm:$0xff] %vm451, %v462
      %473 = vst.msk [vmem:[#allocation3 + $0x18] sm:$0xff] %vm451, %v463
      %474 = vst.msk [vmem:[#allocation3 + $0x20] sm:$0xff] %vm451, %v464
      %475 = vst.msk [vmem:[#allocation3 + $0x28] sm:$0xff] %vm451, %v465
      %476 = vst.msk [vmem:[#allocation3 + $0x30] sm:$0xff] %vm451, %v466
      %477 = vst.msk [vmem:[#allocation3 + $0x38] sm:$0xff] %vm451, %v467
      %478 = vst.msk [vmem:[#allocation3 + $0x40] sm:$0xff] %vm451, %v468
      %479 = vst.msk [vmem:[#allocation3 + $0x48] sm:$0xff] %vm451, %v469
      %v480 = vld [vmem:[#allocation3] sm:$0xff]
      %v481 = vld [vmem:[#allocation3 + $0x8] sm:$0xff]
      %v482 = vld [vmem:[#allocation3 + $0x10] sm:$0xff]
      %v483 = vld [vmem:[#allocation3 + $0x18] sm:$0xff]
      %v484 = vld [vmem:[#allocation3 + $0x20] sm:$0xff]
      %v485 = vld [vmem:[#allocation3 + $0x28] sm:$0xff]
      %v486 = vld [vmem:[#allocation3 + $0x30] sm:$0xff]
      %v487 = vld [vmem:[#allocation3 + $0x38] sm:$0xff]
      %v488 = vld [vmem:[#allocation2] sm:$0xff]
      %v489 = vld [vmem:[#allocation2 + $0x8] sm:$0xff]
      %v490 = vld [vmem:[#allocation2 + $0x10] sm:$0xff]
      %v491 = vld [vmem:[#allocation2 + $0x18] sm:$0xff]
      %v492 = vld [vmem:[#allocation2 + $0x20] sm:$0xff]
      %v493 = vld [vmem:[#allocation2 + $0x28] sm:$0xff]
      %v494 = vld [vmem:[#allocation2 + $0x30] sm:$0xff]
      %v495 = vld [vmem:[#allocation2 + $0x38] sm:$0xff]
      %v496 = vld [vmem:[%s3] sm:$0xf]
      %v498 = vsel %vm451, %v480, 0
      %v501 = vsel %vm451, %v481, 0
      %v504 = vsel %vm451, %v482, 0
      %v507 = vsel %vm451, %v483, 0
      %v510 = vsel %vm451, %v484, 0
      %v513 = vsel %vm451, %v485, 0
      %v516 = vsel %vm451, %v486, 0
      %v519 = vsel %vm451, %v487, 0
      %vm521 = vcmask 1043456
      %v523 = vsel %vm521, %v496, 0
      %525 = vmatprep.subr.mxu0 0.0
      %526 = vmatpush1.msra.mxu0 %v523
      %527 = vmatprep.subr.mxu0 0.0
      %528 = vmatpush1.msra.mxu0 0.0
      %529 = vmatprep.subr.mxu0 0.0
      %530 = vmatpush1.msra.mxu0 0.0
      %531 = vmatprep.subr.mxu0 0.0
      %532 = vmatpush1.msra.mxu0 0.0
      %533 = vmatprep.subr.mxu0 0.0
      %534 = vmatpush1.msra.mxu0 0.0
      %535 = vmatprep.subr.mxu0 0.0
      %536 = vmatpush1.msra.mxu0 0.0
      %537 = vmatprep.subr.mxu0 0.0
      %538 = vmatpush1.msra.mxu0 0.0
      %539 = vmatprep.subr.mxu0 0.0
      %540 = vmatpush1.msra.mxu0 0.0
      %541 = vmatprep.subr.mxu0 0.0
      %542 = vmatpush1.msra.mxu0 0.0
      %543 = vmatprep.subr.mxu0 0.0
      %544 = vmatpush1.msra.mxu0 0.0
      %545 = vmatprep.subr.mxu0 0.0
      %546 = vmatpush1.msra.mxu0 0.0
      %547 = vmatprep.subr.mxu0 0.0
      %548 = vmatpush1.msra.mxu0 0.0
      %549 = vmatprep.subr.mxu0 0.0
      %550 = vmatpush1.msra.mxu0 0.0
      %551 = vmatprep.subr.mxu0 0.0
      %552 = vmatpush1.msra.mxu0 0.0
      %553 = vmatprep.subr.mxu0 0.0
      %554 = vmatpush1.msra.mxu0 0.0
      %555 = vmatprep.subr.mxu0 0.0
      %556 = vmatpush1.msra.mxu0 0.0
      %557 = vmatprep.subr.mxu0 0.0
      %558 = vmatpush1.msra.mxu0 0.0
      %559 = vmatprep.subr.mxu0 0.0
      %560 = vmatpush1.msra.mxu0 0.0
      %561 = vmatprep.subr.mxu0 0.0
      %562 = vmatpush1.msra.mxu0 0.0
      %563 = vmatprep.subr.mxu0 0.0
      %564 = vmatpush1.msra.mxu0 0.0
      %565 = vmatprep.subr.mxu0 0.0
      %566 = vmatpush1.msra.mxu0 0.0
      %567 = vmatprep.subr.mxu0 0.0
      %568 = vmatpush1.msra.mxu0 0.0
      %569 = vmatprep.subr.mxu0 0.0
      %570 = vmatpush1.msra.mxu0 0.0
      %571 = vmatprep.subr.mxu0 0.0
      %572 = vmatpush1.msra.mxu0 0.0
      %573 = vmatprep.subr.mxu0 0.0
      %574 = vmatpush1.msra.mxu0 0.0
      %575 = vmatprep.subr.mxu0 0.0
      %576 = vmatpush1.msra.mxu0 0.0
      %577 = vmatprep.subr.mxu0 0.0
      %578 = vmatpush1.msra.mxu0 0.0
      %579 = vmatprep.subr.mxu0 0.0
      %580 = vmatpush1.msra.mxu0 0.0
      %581 = vmatprep.subr.mxu0 0.0
      %582 = vmatpush1.msra.mxu0 0.0
      %583 = vmatprep.subr.mxu0 0.0
      %584 = vmatpush1.msra.mxu0 0.0
      %585 = vmatprep.subr.mxu0 0.0
      %586 = vmatpush1.msra.mxu0 0.0
      %587 = vmatprep.subr.mxu0 0.0
      %588 = vmatpush1.msra.mxu0 0.0
      %589 = vmatprep.mubr.f32.mxu0 0.0
      %590 = vmatmul.mubr.f32.gmra.mrb[0].mxu0 %v498
      %v591 = vpop.f32.mrb[0].mxu0
      %v592 = vadd.f32 0.0, %v591
      %v593 = vpop.f32.mrb[0].mxu0
      %594 = vmatprep.mubr.f32.mxu0 0.0
      %595 = vmatmul.mubr.f32.gmra.mrb[0].mxu0 %v501
      %v596 = vpop.f32.mrb[0].mxu0
      %v597 = vadd.f32 0.0, %v596
      %v598 = vpop.f32.mrb[0].mxu0
      %599 = vmatprep.mubr.f32.mxu0 0.0
      %600 = vmatmul.mubr.f32.gmra.mrb[0].mxu0 %v504
      %v601 = vpop.f32.mrb[0].mxu0
      %v602 = vadd.f32 0.0, %v601
      %v603 = vpop.f32.mrb[0].mxu0
      %604 = vmatprep.mubr.f32.mxu0 0.0
      %605 = vmatmul.mubr.f32.gmra.mrb[0].mxu0 %v507
      %v606 = vpop.f32.mrb[0].mxu0
      %v607 = vadd.f32 0.0, %v606
      %v608 = vpop.f32.mrb[0].mxu0
      %609 = vmatprep.mubr.f32.mxu0 0.0
      %610 = vmatmul.mubr.f32.gmra.mrb[0].mxu0 %v510
      %v611 = vpop.f32.mrb[0].mxu0
      %v612 = vadd.f32 0.0, %v611
      %v613 = vpop.f32.mrb[0].mxu0
      %614 = vmatprep.mubr.f32.mxu0 0.0
      %615 = vmatmul.mubr.f32.gmra.mrb[0].mxu0 %v513
      %v616 = vpop.f32.mrb[0].mxu0
      %v617 = vadd.f32 0.0, %v616
      %v618 = vpop.f32.mrb[0].mxu0
      %619 = vmatprep.mubr.f32.mxu0 0.0
      %620 = vmatmul.mubr.f32.gmra.mrb[0].mxu0 %v516
      %v621 = vpop.f32.mrb[0].mxu0
      %v622 = vadd.f32 0.0, %v621
      %v623 = vpop.f32.mrb[0].mxu0
      %624 = vmatprep.mubr.f32.mxu0 0.0
      %625 = vmatmul.mubr.f32.gmra.mrb[0].mxu0 %v519
      %v626 = vpop.f32.mrb[0].mxu0
      %v627 = vadd.f32 0.0, %v626
      %v628 = vpop.f32.mrb[0].mxu0
      %629 = vdwg.mxu0
      %v630 = vadd.f32 %v488, %v592
      %v631 = vadd.f32 %v489, %v597
      %v632 = vadd.f32 %v490, %v602
      %v633 = vadd.f32 %v491, %v607
      %v634 = vadd.f32 %v492, %v612
      %v635 = vadd.f32 %v493, %v617
      %v636 = vadd.f32 %v494, %v622
      %v637 = vadd.f32 %v495, %v627
      %638 = vst.msk [vmem:[#allocation2] sm:$0xff] %vm451, %v630
      %639 = vst.msk [vmem:[#allocation2 + $0x8] sm:$0xff] %vm451, %v631
      %640 = vst.msk [vmem:[#allocation2 + $0x10] sm:$0xff] %vm451, %v632
      %641 = vst.msk [vmem:[#allocation2 + $0x18] sm:$0xff] %vm451, %v633
      %642 = vst.msk [vmem:[#allocation2 + $0x20] sm:$0xff] %vm451, %v634
      %643 = vst.msk [vmem:[#allocation2 + $0x28] sm:$0xff] %vm451, %v635
      %644 = vst.msk [vmem:[#allocation2 + $0x30] sm:$0xff] %vm451, %v636
      %645 = vst.msk [vmem:[#allocation2 + $0x38] sm:$0xff] %vm451, %v637
      %s646 = scalar_lea.vmem [#allocation3], 8
      %v647 = vld [vmem:[%s646] sm:$0xff]
      %v648 = vld [vmem:[%s646 + $0x8] sm:$0xff]
      %v649 = vld [vmem:[%s646 + $0x10] sm:$0xff]
      %v650 = vld [vmem:[%s646 + $0x18] sm:$0xff]
      %v651 = vld [vmem:[%s646 + $0x20] sm:$0xff]
      %v652 = vld [vmem:[%s646 + $0x28] sm:$0xff]
      %v653 = vld [vmem:[%s646 + $0x30] sm:$0xff]
      %v654 = vld [vmem:[%s646 + $0x38] sm:$0xff]
      %v655 = vld [vmem:[#allocation2] sm:$0xff]
      %v656 = vld [vmem:[#allocation2 + $0x8] sm:$0xff]
      %v657 = vld [vmem:[#allocation2 + $0x10] sm:$0xff]
      %v658 = vld [vmem:[#allocation2 + $0x18] sm:$0xff]
      %v659 = vld [vmem:[#allocation2 + $0x20] sm:$0xff]
      %v660 = vld [vmem:[#allocation2 + $0x28] sm:$0xff]
      %v661 = vld [vmem:[#allocation2 + $0x30] sm:$0xff]
      %v662 = vld [vmem:[#allocation2 + $0x38] sm:$0xff]
      %s663 = scalar_lea.vmem %s3, 16
      %v664 = vld [vmem:[%s663] sm:$0xf]
      %v666 = vsel %vm451, %v647, 0
      %v669 = vsel %vm451, %v648, 0
      %v672 = vsel %vm451, %v649, 0
      %v675 = vsel %vm451, %v650, 0
      %v678 = vsel %vm451, %v651, 0
      %v681 = vsel %vm451, %v652, 0
      %v684 = vsel %vm451, %v653, 0
      %v687 = vsel %vm451, %v654, 0
      %v690 = vsel %vm521, %v664, 0
      %692 = vmatprep.subr.mxu0 0.0
      %693 = vmatpush1.msra.mxu0 %v690
      %694 = vmatprep.subr.mxu0 0.0
      %695 = vmatpush1.msra.mxu0 0.0
      %696 = vmatprep.subr.mxu0 0.0
      %697 = vmatpush1.msra.mxu0 0.0
      %698 = vmatprep.subr.mxu0 0.0
      %699 = vmatpush1.msra.mxu0 0.0
      %700 = vmatprep.subr.mxu0 0.0
      %701 = vmatpush1.msra.mxu0 0.0
      %702 = vmatprep.subr.mxu0 0.0
      %703 = vmatpush1.msra.mxu0 0.0
      %704 = vmatprep.subr.mxu0 0.0
      %705 = vmatpush1.msra.mxu0 0.0
      %706 = vmatprep.subr.mxu0 0.0
      %707 = vmatpush1.msra.mxu0 0.0
      %708 = vmatprep.subr.mxu0 0.0
      %709 = vmatpush1.msra.mxu0 0.0
      %710 = vmatprep.subr.mxu0 0.0
      %711 = vmatpush1.msra.mxu0 0.0
      %712 = vmatprep.subr.mxu0 0.0
      %713 = vmatpush1.msra.mxu0 0.0
      %714 = vmatprep.subr.mxu0 0.0
      %715 = vmatpush1.msra.mxu0 0.0
      %716 = vmatprep.subr.mxu0 0.0
      %717 = vmatpush1.msra.mxu0 0.0
      %718 = vmatprep.subr.mxu0 0.0
      %719 = vmatpush1.msra.mxu0 0.0
      %720 = vmatprep.subr.mxu0 0.0
      %721 = vmatpush1.msra.mxu0 0.0
      %722 = vmatprep.subr.mxu0 0.0
      %723 = vmatpush1.msra.mxu0 0.0
      %724 = vmatprep.subr.mxu0 0.0
      %725 = vmatpush1.msra.mxu0 0.0
      %726 = vmatprep.subr.mxu0 0.0
      %727 = vmatpush1.msra.mxu0 0.0
      %728 = vmatprep.subr.mxu0 0.0
      %729 = vmatpush1.msra.mxu0 0.0
      %730 = vmatprep.subr.mxu0 0.0
      %731 = vmatpush1.msra.mxu0 0.0
      %732 = vmatprep.subr.mxu0 0.0
      %733 = vmatpush1.msra.mxu0 0.0
      %734 = vmatprep.subr.mxu0 0.0
      %735 = vmatpush1.msra.mxu0 0.0
      %736 = vmatprep.subr.mxu0 0.0
      %737 = vmatpush1.msra.mxu0 0.0
      %738 = vmatprep.subr.mxu0 0.0
      %739 = vmatpush1.msra.mxu0 0.0
      %740 = vmatprep.subr.mxu0 0.0
      %741 = vmatpush1.msra.mxu0 0.0
      %742 = vmatprep.subr.mxu0 0.0
      %743 = vmatpush1.msra.mxu0 0.0
      %744 = vmatprep.subr.mxu0 0.0
      %745 = vmatpush1.msra.mxu0 0.0
      %746 = vmatprep.subr.mxu0 0.0
      %747 = vmatpush1.msra.mxu0 0.0
      %748 = vmatprep.subr.mxu0 0.0
      %749 = vmatpush1.msra.mxu0 0.0
      %750 = vmatprep.subr.mxu0 0.0
      %751 = vmatpush1.msra.mxu0 0.0
      %752 = vmatprep.subr.mxu0 0.0
      %753 = vmatpush1.msra.mxu0 0.0
      %754 = vmatprep.subr.mxu0 0.0
      %755 = vmatpush1.msra.mxu0 0.0
      %756 = vmatprep.mubr.f32.mxu0 0.0
      %757 = vmatmul.mubr.f32.gmra.mrb[0].mxu0 %v666
      %v758 = vpop.f32.mrb[0].mxu0
      %v759 = vadd.f32 0.0, %v758
      %v760 = vpop.f32.mrb[0].mxu0
      %761 = vmatprep.mubr.f32.mxu0 0.0
      %762 = vmatmul.mubr.f32.gmra.mrb[0].mxu0 %v669
      %v763 = vpop.f32.mrb[0].mxu0
      %v764 = vadd.f32 0.0, %v763
      %v765 = vpop.f32.mrb[0].mxu0
      %766 = vmatprep.mubr.f32.mxu0 0.0
      %767 = vmatmul.mubr.f32.gmra.mrb[0].mxu0 %v672
      %v768 = vpop.f32.mrb[0].mxu0
      %v769 = vadd.f32 0.0, %v768
      %v770 = vpop.f32.mrb[0].mxu0
      %771 = vmatprep.mubr.f32.mxu0 0.0
      %772 = vmatmul.mubr.f32.gmra.mrb[0].mxu0 %v675
      %v773 = vpop.f32.mrb[0].mxu0
      %v774 = vadd.f32 0.0, %v773
      %v775 = vpop.f32.mrb[0].mxu0
      %776 = vmatprep.mubr.f32.mxu0 0.0
      %777 = vmatmul.mubr.f32.gmra.mrb[0].mxu0 %v678
      %v778 = vpop.f32.mrb[0].mxu0
      %v779 = vadd.f32 0.0, %v778
      %v780 = vpop.f32.mrb[0].mxu0
      %781 = vmatprep.mubr.f32.mxu0 0.0
      %782 = vmatmul.mubr.f32.gmra.mrb[0].mxu0 %v681
      %v783 = vpop.f32.mrb[0].mxu0
      %v784 = vadd.f32 0.0, %v783
      %v785 = vpop.f32.mrb[0].mxu0
      %786 = vmatprep.mubr.f32.mxu0 0.0
      %787 = vmatmul.mubr.f32.gmra.mrb[0].mxu0 %v684
      %v788 = vpop.f32.mrb[0].mxu0
      %v789 = vadd.f32 0.0, %v788
      %v790 = vpop.f32.mrb[0].mxu0
      %791 = vmatprep.mubr.f32.mxu0 0.0
      %792 = vmatmul.mubr.f32.gmra.mrb[0].mxu0 %v687
      %v793 = vpop.f32.mrb[0].mxu0
      %v794 = vadd.f32 0.0, %v793
      %v795 = vpop.f32.mrb[0].mxu0
      %796 = vdwg.mxu0
      %v797 = vadd.f32 %v655, %v759
      %v798 = vadd.f32 %v656, %v764
      %v799 = vadd.f32 %v657, %v769
      %v800 = vadd.f32 %v658, %v774
      %v801 = vadd.f32 %v659, %v779
      %v802 = vadd.f32 %v660, %v784
      %v803 = vadd.f32 %v661, %v789
      %v804 = vadd.f32 %v662, %v794
      %805 = vst.msk [vmem:[#allocation2] sm:$0xff] %vm451, %v797
      %806 = vst.msk [vmem:[#allocation2 + $0x8] sm:$0xff] %vm451, %v798
      %807 = vst.msk [vmem:[#allocation2 + $0x10] sm:$0xff] %vm451, %v799
      %808 = vst.msk [vmem:[#allocation2 + $0x18] sm:$0xff] %vm451, %v800
      %809 = vst.msk [vmem:[#allocation2 + $0x20] sm:$0xff] %vm451, %v801
      %810 = vst.msk [vmem:[#allocation2 + $0x28] sm:$0xff] %vm451, %v802
      %811 = vst.msk [vmem:[#allocation2 + $0x30] sm:$0xff] %vm451, %v803
      %812 = vst.msk [vmem:[#allocation2 + $0x38] sm:$0xff] %vm451, %v804
      %s813 = scalar_lea.vmem [#allocation3], 16
      %v814 = vld [vmem:[%s813] sm:$0xff]
      %v815 = vld [vmem:[%s813 + $0x8] sm:$0xff]
      %v816 = vld [vmem:[%s813 + $0x10] sm:$0xff]
      %v817 = vld [vmem:[%s813 + $0x18] sm:$0xff]
      %v818 = vld [vmem:[%s813 + $0x20] sm:$0xff]
      %v819 = vld [vmem:[%s813 + $0x28] sm:$0xff]
      %v820 = vld [vmem:[%s813 + $0x30] sm:$0xff]
      %v821 = vld [vmem:[%s813 + $0x38] sm:$0xff]
      %v822 = vld [vmem:[#allocation2] sm:$0xff]
      %v823 = vld [vmem:[#allocation2 + $0x8] sm:$0xff]
      %v824 = vld [vmem:[#allocation2 + $0x10] sm:$0xff]
      %v825 = vld [vmem:[#allocation2 + $0x18] sm:$0xff]
      %v826 = vld [vmem:[#allocation2 + $0x20] sm:$0xff]
      %v827 = vld [vmem:[#allocation2 + $0x28] sm:$0xff]
      %v828 = vld [vmem:[#allocation2 + $0x30] sm:$0xff]
      %v829 = vld [vmem:[#allocation2 + $0x38] sm:$0xff]
      %s830 = scalar_lea.vmem %s3, 32
      %v831 = vld [vmem:[%s830] sm:$0xf]
      %v833 = vsel %vm451, %v814, 0
      %v836 = vsel %vm451, %v815, 0
      %v839 = vsel %vm451, %v816, 0
      %v842 = vsel %vm451, %v817, 0
      %v845 = vsel %vm451, %v818, 0
      %v848 = vsel %vm451, %v819, 0
      %v851 = vsel %vm451, %v820, 0
      %v854 = vsel %vm451, %v821, 0
      %v857 = vsel %vm521, %v831, 0
      %859 = vmatprep.subr.mxu0 0.0
      %860 = vmatpush1.msra.mxu0 %v857
      %861 = vmatprep.subr.mxu0 0.0
      %862 = vmatpush1.msra.mxu0 0.0
      %863 = vmatprep.subr.mxu0 0.0
      %864 = vmatpush1.msra.mxu0 0.0
      %865 = vmatprep.subr.mxu0 0.0
      %866 = vmatpush1.msra.mxu0 0.0
      %867 = vmatprep.subr.mxu0 0.0
      %868 = vmatpush1.msra.mxu0 0.0
      %869 = vmatprep.subr.mxu0 0.0
      %870 = vmatpush1.msra.mxu0 0.0
      %871 = vmatprep.subr.mxu0 0.0
      %872 = vmatpush1.msra.mxu0 0.0
      %873 = vmatprep.subr.mxu0 0.0
      %874 = vmatpush1.msra.mxu0 0.0
      %875 = vmatprep.subr.mxu0 0.0
      %876 = vmatpush1.msra.mxu0 0.0
      %877 = vmatprep.subr.mxu0 0.0
      %878 = vmatpush1.msra.mxu0 0.0
      %879 = vmatprep.subr.mxu0 0.0
      %880 = vmatpush1.msra.mxu0 0.0
      %881 = vmatprep.subr.mxu0 0.0
      %882 = vmatpush1.msra.mxu0 0.0
      %883 = vmatprep.subr.mxu0 0.0
      %884 = vmatpush1.msra.mxu0 0.0
      %885 = vmatprep.subr.mxu0 0.0
      %886 = vmatpush1.msra.mxu0 0.0
      %887 = vmatprep.subr.mxu0 0.0
      %888 = vmatpush1.msra.mxu0 0.0
      %889 = vmatprep.subr.mxu0 0.0
      %890 = vmatpush1.msra.mxu0 0.0
      %891 = vmatprep.subr.mxu0 0.0
      %892 = vmatpush1.msra.mxu0 0.0
      %893 = vmatprep.subr.mxu0 0.0
      %894 = vmatpush1.msra.mxu0 0.0
      %895 = vmatprep.subr.mxu0 0.0
      %896 = vmatpush1.msra.mxu0 0.0
      %897 = vmatprep.subr.mxu0 0.0
      %898 = vmatpush1.msra.mxu0 0.0
      %899 = vmatprep.subr.mxu0 0.0
      %900 = vmatpush1.msra.mxu0 0.0
      %901 = vmatprep.subr.mxu0 0.0
      %902 = vmatpush1.msra.mxu0 0.0
      %903 = vmatprep.subr.mxu0 0.0
      %904 = vmatpush1.msra.mxu0 0.0
      %905 = vmatprep.subr.mxu0 0.0
      %906 = vmatpush1.msra.mxu0 0.0
      %907 = vmatprep.subr.mxu0 0.0
      %908 = vmatpush1.msra.mxu0 0.0
      %909 = vmatprep.subr.mxu0 0.0
      %910 = vmatpush1.msra.mxu0 0.0
      %911 = vmatprep.subr.mxu0 0.0
      %912 = vmatpush1.msra.mxu0 0.0
      %913 = vmatprep.subr.mxu0 0.0
      %914 = vmatpush1.msra.mxu0 0.0
      %915 = vmatprep.subr.mxu0 0.0
      %916 = vmatpush1.msra.mxu0 0.0
      %917 = vmatprep.subr.mxu0 0.0
      %918 = vmatpush1.msra.mxu0 0.0
      %919 = vmatprep.subr.mxu0 0.0
      %920 = vmatpush1.msra.mxu0 0.0
      %921 = vmatprep.subr.mxu0 0.0
      %922 = vmatpush1.msra.mxu0 0.0
      %923 = vmatprep.mubr.f32.mxu0 0.0
      %924 = vmatmul.mubr.f32.gmra.mrb[0].mxu0 %v833
      %v925 = vpop.f32.mrb[0].mxu0
      %v926 = vadd.f32 0.0, %v925
      %v927 = vpop.f32.mrb[0].mxu0
      %928 = vmatprep.mubr.f32.mxu0 0.0
      %929 = vmatmul.mubr.f32.gmra.mrb[0].mxu0 %v836
      %v930 = vpop.f32.mrb[0].mxu0
      %v931 = vadd.f32 0.0, %v930
      %v932 = vpop.f32.mrb[0].mxu0
      %933 = vmatprep.mubr.f32.mxu0 0.0
      %934 = vmatmul.mubr.f32.gmra.mrb[0].mxu0 %v839
      %v935 = vpop.f32.mrb[0].mxu0
      %v936 = vadd.f32 0.0, %v935
      %v937 = vpop.f32.mrb[0].mxu0
      %938 = vmatprep.mubr.f32.mxu0 0.0
      %939 = vmatmul.mubr.f32.gmra.mrb[0].mxu0 %v842
      %v940 = vpop.f32.mrb[0].mxu0
      %v941 = vadd.f32 0.0, %v940
      %v942 = vpop.f32.mrb[0].mxu0
      %943 = vmatprep.mubr.f32.mxu0 0.0
      %944 = vmatmul.mubr.f32.gmra.mrb[0].mxu0 %v845
      %v945 = vpop.f32.mrb[0].mxu0
      %v946 = vadd.f32 0.0, %v945
      %v947 = vpop.f32.mrb[0].mxu0
      %948 = vmatprep.mubr.f32.mxu0 0.0
      %949 = vmatmul.mubr.f32.gmra.mrb[0].mxu0 %v848
      %v950 = vpop.f32.mrb[0].mxu0
      %v951 = vadd.f32 0.0, %v950
      %v952 = vpop.f32.mrb[0].mxu0
      %953 = vmatprep.mubr.f32.mxu0 0.0
      %954 = vmatmul.mubr.f32.gmra.mrb[0].mxu0 %v851
      %v955 = vpop.f32.mrb[0].mxu0
      %v956 = vadd.f32 0.0, %v955
      %v957 = vpop.f32.mrb[0].mxu0
      %958 = vmatprep.mubr.f32.mxu0 0.0
      %959 = vmatmul.mubr.f32.gmra.mrb[0].mxu0 %v854
      %v960 = vpop.f32.mrb[0].mxu0
      %v961 = vadd.f32 0.0, %v960
      %v962 = vpop.f32.mrb[0].mxu0
      %963 = vdwg.mxu0
      %v964 = vadd.f32 %v822, %v926
      %v965 = vadd.f32 %v823, %v931
      %v966 = vadd.f32 %v824, %v936
      %v967 = vadd.f32 %v825, %v941
      %v968 = vadd.f32 %v826, %v946
      %v969 = vadd.f32 %v827, %v951
      %v970 = vadd.f32 %v828, %v956
      %v971 = vadd.f32 %v829, %v961
      %972 = vst.msk [vmem:[#allocation2] sm:$0xff] %vm451, %v964
      %973 = vst.msk [vmem:[#allocation2 + $0x8] sm:$0xff] %vm451, %v965
      %974 = vst.msk [vmem:[#allocation2 + $0x10] sm:$0xff] %vm451, %v966
      %975 = vst.msk [vmem:[#allocation2 + $0x18] sm:$0xff] %vm451, %v967
      %976 = vst.msk [vmem:[#allocation2 + $0x20] sm:$0xff] %vm451, %v968
      %977 = vst.msk [vmem:[#allocation2 + $0x28] sm:$0xff] %vm451, %v969
      %978 = vst.msk [vmem:[#allocation2 + $0x30] sm:$0xff] %vm451, %v970
      %979 = vst.msk [vmem:[#allocation2 + $0x38] sm:$0xff] %vm451, %v971
      %v980 = vld [vmem:[%s376 + $0x1] sm:$0xff]
      %v981 = vld [vmem:[%s376 + $0x11] sm:$0xff]
      %v982 = vld [vmem:[%s376 + $0x21] sm:$0xff]
      %v983 = vld [vmem:[%s376 + $0x31] sm:$0xff]
      %v984 = vld [vmem:[%s376 + $0x41] sm:$0xff]
      %v985 = vld [vmem:[%s376 + $0x51] sm:$0xff]
      %v986 = vld [vmem:[%s376 + $0x61] sm:$0xff]
      %v987 = vld [vmem:[%s376 + $0x71] sm:$0xff]
      %v988 = vld [vmem:[%s376 + $0x81] sm:$0xff]
      %v989 = vld [vmem:[%s376 + $0x91] sm:$0xff]
      %990 = vst.msk [vmem:[#allocation3] sm:$0xff] %vm451, %v980
      %991 = vst.msk [vmem:[#allocation3 + $0x8] sm:$0xff] %vm451, %v981
      %992 = vst.msk [vmem:[#allocation3 + $0x10] sm:$0xff] %vm451, %v982
      %993 = vst.msk [vmem:[#allocation3 + $0x18] sm:$0xff] %vm451, %v983
      %994 = vst.msk [vmem:[#allocation3 + $0x20] sm:$0xff] %vm451, %v984
      %995 = vst.msk [vmem:[#allocation3 + $0x28] sm:$0xff] %vm451, %v985
      %996 = vst.msk [vmem:[#allocation3 + $0x30] sm:$0xff] %vm451, %v986
      %997 = vst.msk [vmem:[#allocation3 + $0x38] sm:$0xff] %vm451, %v987
      %998 = vst.msk [vmem:[#allocation3 + $0x40] sm:$0xff] %vm451, %v988
      %999 = vst.msk [vmem:[#allocation3 + $0x48] sm:$0xff] %vm451, %v989
      %v1000 = vld [vmem:[#allocation3] sm:$0xff]
      %v1001 = vld [vmem:[#allocation3 + $0x8] sm:$0xff]
      %v1002 = vld [vmem:[#allocation3 + $0x10] sm:$0xff]
      %v1003 = vld [vmem:[#allocation3 + $0x18] sm:$0xff]
      %v1004 = vld [vmem:[#allocation3 + $0x20] sm:$0xff]
      %v1005 = vld [vmem:[#allocation3 + $0x28] sm:$0xff]
      %v1006 = vld [vmem:[#allocation3 + $0x30] sm:$0xff]
      %v1007 = vld [vmem:[#allocation3 + $0x38] sm:$0xff]
      %v1008 = vld [vmem:[#allocation2] sm:$0xff]
      %v1009 = vld [vmem:[#allocation2 + $0x8] sm:$0xff]
      %v1010 = vld [vmem:[#allocation2 + $0x10] sm:$0xff]
      %v1011 = vld [vmem:[#allocation2 + $0x18] sm:$0xff]
      %v1012 = vld [vmem:[#allocation2 + $0x20] sm:$0xff]
      %v1013 = vld [vmem:[#allocation2 + $0x28] sm:$0xff]
      %v1014 = vld [vmem:[#allocation2 + $0x30] sm:$0xff]
      %v1015 = vld [vmem:[#allocation2 + $0x38] sm:$0xff]
      %v1016 = vld [vmem:[%s3 + $0x4] sm:$0xf]
      %v1018 = vsel %vm451, %v1000, 0
      %v1021 = vsel %vm451, %v1001, 0
      %v1024 = vsel %vm451, %v1002, 0
      %v1027 = vsel %vm451, %v1003, 0
      %v1030 = vsel %vm451, %v1004, 0
      %v1033 = vsel %vm451, %v1005, 0
      %v1036 = vsel %vm451, %v1006, 0
      %v1039 = vsel %vm451, %v1007, 0
      %v1042 = vsel %vm521, %v1016, 0
      %1044 = vmatprep.subr.mxu0 0.0
      %1045 = vmatpush1.msra.mxu0 %v1042
      %1046 = vmatprep.subr.mxu0 0.0
      %1047 = vmatpush1.msra.mxu0 0.0
      %1048 = vmatprep.subr.mxu0 0.0
      %1049 = vmatpush1.msra.mxu0 0.0
      %1050 = vmatprep.subr.mxu0 0.0
      %1051 = vmatpush1.msra.mxu0 0.0
      %1052 = vmatprep.subr.mxu0 0.0
      %1053 = vmatpush1.msra.mxu0 0.0
      %1054 = vmatprep.subr.mxu0 0.0
      %1055 = vmatpush1.msra.mxu0 0.0
      %1056 = vmatprep.subr.mxu0 0.0
      %1057 = vmatpush1.msra.mxu0 0.0
      %1058 = vmatprep.subr.mxu0 0.0
      %1059 = vmatpush1.msra.mxu0 0.0
      %1060 = vmatprep.subr.mxu0 0.0
      %1061 = vmatpush1.msra.mxu0 0.0
      %1062 = vmatprep.subr.mxu0 0.0
      %1063 = vmatpush1.msra.mxu0 0.0
      %1064 = vmatprep.subr.mxu0 0.0
      %1065 = vmatpush1.msra.mxu0 0.0
      %1066 = vmatprep.subr.mxu0 0.0
      %1067 = vmatpush1.msra.mxu0 0.0
      %1068 = vmatprep.subr.mxu0 0.0
      %1069 = vmatpush1.msra.mxu0 0.0
      %1070 = vmatprep.subr.mxu0 0.0
      %1071 = vmatpush1.msra.mxu0 0.0
      %1072 = vmatprep.subr.mxu0 0.0
      %1073 = vmatpush1.msra.mxu0 0.0
      %1074 = vmatprep.subr.mxu0 0.0
      %1075 = vmatpush1.msra.mxu0 0.0
      %1076 = vmatprep.subr.mxu0 0.0
      %1077 = vmatpush1.msra.mxu0 0.0
      %1078 = vmatprep.subr.mxu0 0.0
      %1079 = vmatpush1.msra.mxu0 0.0
      %1080 = vmatprep.subr.mxu0 0.0
      %1081 = vmatpush1.msra.mxu0 0.0
      %1082 = vmatprep.subr.mxu0 0.0
      %1083 = vmatpush1.msra.mxu0 0.0
      %1084 = vmatprep.subr.mxu0 0.0
      %1085 = vmatpush1.msra.mxu0 0.0
      %1086 = vmatprep.subr.mxu0 0.0
      %1087 = vmatpush1.msra.mxu0 0.0
      %1088 = vmatprep.subr.mxu0 0.0
      %1089 = vmatpush1.msra.mxu0 0.0
      %1090 = vmatprep.subr.mxu0 0.0
      %1091 = vmatpush1.msra.mxu0 0.0
      %1092 = vmatprep.subr.mxu0 0.0
      %1093 = vmatpush1.msra.mxu0 0.0
      %1094 = vmatprep.subr.mxu0 0.0
      %1095 = vmatpush1.msra.mxu0 0.0
      %1096 = vmatprep.subr.mxu0 0.0
      %1097 = vmatpush1.msra.mxu0 0.0
      %1098 = vmatprep.subr.mxu0 0.0
      %1099 = vmatpush1.msra.mxu0 0.0
      %1100 = vmatprep.subr.mxu0 0.0
      %1101 = vmatpush1.msra.mxu0 0.0
      %1102 = vmatprep.subr.mxu0 0.0
      %1103 = vmatpush1.msra.mxu0 0.0
      %1104 = vmatprep.subr.mxu0 0.0
      %1105 = vmatpush1.msra.mxu0 0.0
      %1106 = vmatprep.subr.mxu0 0.0
      %1107 = vmatpush1.msra.mxu0 0.0
      %1108 = vmatprep.mubr.f32.mxu0 0.0
      %1109 = vmatmul.mubr.f32.gmra.mrb[0].mxu0 %v1018
      %v1110 = vpop.f32.mrb[0].mxu0
      %v1111 = vadd.f32 0.0, %v1110
      %v1112 = vpop.f32.mrb[0].mxu0
      %1113 = vmatprep.mubr.f32.mxu0 0.0
      %1114 = vmatmul.mubr.f32.gmra.mrb[0].mxu0 %v1021
      %v1115 = vpop.f32.mrb[0].mxu0
      %v1116 = vadd.f32 0.0, %v1115
      %v1117 = vpop.f32.mrb[0].mxu0
      %1118 = vmatprep.mubr.f32.mxu0 0.0
      %1119 = vmatmul.mubr.f32.gmra.mrb[0].mxu0 %v1024
      %v1120 = vpop.f32.mrb[0].mxu0
      %v1121 = vadd.f32 0.0, %v1120
      %v1122 = vpop.f32.mrb[0].mxu0
      %1123 = vmatprep.mubr.f32.mxu0 0.0
      %1124 = vmatmul.mubr.f32.gmra.mrb[0].mxu0 %v1027
      %v1125 = vpop.f32.mrb[0].mxu0
      %v1126 = vadd.f32 0.0, %v1125
      %v1127 = vpop.f32.mrb[0].mxu0
      %1128 = vmatprep.mubr.f32.mxu0 0.0
      %1129 = vmatmul.mubr.f32.gmra.mrb[0].mxu0 %v1030
      %v1130 = vpop.f32.mrb[0].mxu0
      %v1131 = vadd.f32 0.0, %v1130
      %v1132 = vpop.f32.mrb[0].mxu0
      %1133 = vmatprep.mubr.f32.mxu0 0.0
      %1134 = vmatmul.mubr.f32.gmra.mrb[0].mxu0 %v1033
      %v1135 = vpop.f32.mrb[0].mxu0
      %v1136 = vadd.f32 0.0, %v1135
      %v1137 = vpop.f32.mrb[0].mxu0
      %1138 = vmatprep.mubr.f32.mxu0 0.0
      %1139 = vmatmul.mubr.f32.gmra.mrb[0].mxu0 %v1036
      %v1140 = vpop.f32.mrb[0].mxu0
      %v1141 = vadd.f32 0.0, %v1140
      %v1142 = vpop.f32.mrb[0].mxu0
      %1143 = vmatprep.mubr.f32.mxu0 0.0
      %1144 = vmatmul.mubr.f32.gmra.mrb[0].mxu0 %v1039
      %v1145 = vpop.f32.mrb[0].mxu0
      %v1146 = vadd.f32 0.0, %v1145
      %v1147 = vpop.f32.mrb[0].mxu0
      %1148 = vdwg.mxu0
      %v1149 = vadd.f32 %v1008, %v1111
      %v1150 = vadd.f32 %v1009, %v1116
      %v1151 = vadd.f32 %v1010, %v1121
      %v1152 = vadd.f32 %v1011, %v1126
      %v1153 = vadd.f32 %v1012, %v1131
      %v1154 = vadd.f32 %v1013, %v1136
      %v1155 = vadd.f32 %v1014, %v1141
      %v1156 = vadd.f32 %v1015, %v1146
      %1157 = vst.msk [vmem:[#allocation2] sm:$0xff] %vm451, %v1149
      %1158 = vst.msk [vmem:[#allocation2 + $0x8] sm:$0xff] %vm451, %v1150
      %1159 = vst.msk [vmem:[#allocation2 + $0x10] sm:$0xff] %vm451, %v1151
      %1160 = vst.msk [vmem:[#allocation2 + $0x18] sm:$0xff] %vm451, %v1152
      %1161 = vst.msk [vmem:[#allocation2 + $0x20] sm:$0xff] %vm451, %v1153
      %1162 = vst.msk [vmem:[#allocation2 + $0x28] sm:$0xff] %vm451, %v1154
      %1163 = vst.msk [vmem:[#allocation2 + $0x30] sm:$0xff] %vm451, %v1155
      %1164 = vst.msk [vmem:[#allocation2 + $0x38] sm:$0xff] %vm451, %v1156
      %v1165 = vld [vmem:[%s646] sm:$0xff]
      %v1166 = vld [vmem:[%s646 + $0x8] sm:$0xff]
      %v1167 = vld [vmem:[%s646 + $0x10] sm:$0xff]
      %v1168 = vld [vmem:[%s646 + $0x18] sm:$0xff]
      %v1169 = vld [vmem:[%s646 + $0x20] sm:$0xff]
      %v1170 = vld [vmem:[%s646 + $0x28] sm:$0xff]
      %v1171 = vld [vmem:[%s646 + $0x30] sm:$0xff]
      %v1172 = vld [vmem:[%s646 + $0x38] sm:$0xff]
      %v1173 = vld [vmem:[#allocation2] sm:$0xff]
      %v1174 = vld [vmem:[#allocation2 + $0x8] sm:$0xff]
      %v1175 = vld [vmem:[#allocation2 + $0x10] sm:$0xff]
      %v1176 = vld [vmem:[#allocation2 + $0x18] sm:$0xff]
      %v1177 = vld [vmem:[#allocation2 + $0x20] sm:$0xff]
      %v1178 = vld [vmem:[#allocation2 + $0x28] sm:$0xff]
      %v1179 = vld [vmem:[#allocation2 + $0x30] sm:$0xff]
      %v1180 = vld [vmem:[#allocation2 + $0x38] sm:$0xff]
      %v1181 = vld [vmem:[%s663 + $0x4] sm:$0xf]
      %v1183 = vsel %vm451, %v1165, 0
      %v1186 = vsel %vm451, %v1166, 0
      %v1189 = vsel %vm451, %v1167, 0
      %v1192 = vsel %vm451, %v1168, 0
      %v1195 = vsel %vm451, %v1169, 0
      %v1198 = vsel %vm451, %v1170, 0
      %v1201 = vsel %vm451, %v1171, 0
      %v1204 = vsel %vm451, %v1172, 0
      %v1207 = vsel %vm521, %v1181, 0
      %1209 = vmatprep.subr.mxu0 0.0
      %1210 = vmatpush1.msra.mxu0 %v1207
      %1211 = vmatprep.subr.mxu0 0.0
      %1212 = vmatpush1.msra.mxu0 0.0
      %1213 = vmatprep.subr.mxu0 0.0
      %1214 = vmatpush1.msra.mxu0 0.0
      %1215 = vmatprep.subr.mxu0 0.0
      %1216 = vmatpush1.msra.mxu0 0.0
      %1217 = vmatprep.subr.mxu0 0.0
      %1218 = vmatpush1.msra.mxu0 0.0
      %1219 = vmatprep.subr.mxu0 0.0
      %1220 = vmatpush1.msra.mxu0 0.0
      %1221 = vmatprep.subr.mxu0 0.0
      %1222 = vmatpush1.msra.mxu0 0.0
      %1223 = vmatprep.subr.mxu0 0.0
      %1224 = vmatpush1.msra.mxu0 0.0
      %1225 = vmatprep.subr.mxu0 0.0
      %1226 = vmatpush1.msra.mxu0 0.0
      %1227 = vmatprep.subr.mxu0 0.0
      %1228 = vmatpush1.msra.mxu0 0.0
      %1229 = vmatprep.subr.mxu0 0.0
      %1230 = vmatpush1.msra.mxu0 0.0
      %1231 = vmatprep.subr.mxu0 0.0
      %1232 = vmatpush1.msra.mxu0 0.0
      %1233 = vmatprep.subr.mxu0 0.0
      %1234 = vmatpush1.msra.mxu0 0.0
      %1235 = vmatprep.subr.mxu0 0.0
      %1236 = vmatpush1.msra.mxu0 0.0
      %1237 = vmatprep.subr.mxu0 0.0
      %1238 = vmatpush1.msra.mxu0 0.0
      %1239 = vmatprep.subr.mxu0 0.0
      %1240 = vmatpush1.msra.mxu0 0.0
      %1241 = vmatprep.subr.mxu0 0.0
      %1242 = vmatpush1.msra.mxu0 0.0
      %1243 = vmatprep.subr.mxu0 0.0
      %1244 = vmatpush1.msra.mxu0 0.0
      %1245 = vmatprep.subr.mxu0 0.0
      %1246 = vmatpush1.msra.mxu0 0.0
      %1247 = vmatprep.subr.mxu0 0.0
      %1248 = vmatpush1.msra.mxu0 0.0
      %1249 = vmatprep.subr.mxu0 0.0
      %1250 = vmatpush1.msra.mxu0 0.0
      %1251 = vmatprep.subr.mxu0 0.0
      %1252 = vmatpush1.msra.mxu0 0.0
      %1253 = vmatprep.subr.mxu0 0.0
      %1254 = vmatpush1.msra.mxu0 0.0
      %1255 = vmatprep.subr.mxu0 0.0
      %1256 = vmatpush1.msra.mxu0 0.0
      %1257 = vmatprep.subr.mxu0 0.0
      %1258 = vmatpush1.msra.mxu0 0.0
      %1259 = vmatprep.subr.mxu0 0.0
      %1260 = vmatpush1.msra.mxu0 0.0
      %1261 = vmatprep.subr.mxu0 0.0
      %1262 = vmatpush1.msra.mxu0 0.0
      %1263 = vmatprep.subr.mxu0 0.0
      %1264 = vmatpush1.msra.mxu0 0.0
      %1265 = vmatprep.subr.mxu0 0.0
      %1266 = vmatpush1.msra.mxu0 0.0
      %1267 = vmatprep.subr.mxu0 0.0
      %1268 = vmatpush1.msra.mxu0 0.0
      %1269 = vmatprep.subr.mxu0 0.0
      %1270 = vmatpush1.msra.mxu0 0.0
      %1271 = vmatprep.subr.mxu0 0.0
      %1272 = vmatpush1.msra.mxu0 0.0
      %1273 = vmatprep.mubr.f32.mxu0 0.0
      %1274 = vmatmul.mubr.f32.gmra.mrb[0].mxu0 %v1183
      %v1275 = vpop.f32.mrb[0].mxu0
      %v1276 = vadd.f32 0.0, %v1275
      %v1277 = vpop.f32.mrb[0].mxu0
      %1278 = vmatprep.mubr.f32.mxu0 0.0
      %1279 = vmatmul.mubr.f32.gmra.mrb[0].mxu0 %v1186
      %v1280 = vpop.f32.mrb[0].mxu0
      %v1281 = vadd.f32 0.0, %v1280
      %v1282 = vpop.f32.mrb[0].mxu0
      %1283 = vmatprep.mubr.f32.mxu0 0.0
      %1284 = vmatmul.mubr.f32.gmra.mrb[0].mxu0 %v1189
      %v1285 = vpop.f32.mrb[0].mxu0
      %v1286 = vadd.f32 0.0, %v1285
      %v1287 = vpop.f32.mrb[0].mxu0
      %1288 = vmatprep.mubr.f32.mxu0 0.0
      %1289 = vmatmul.mubr.f32.gmra.mrb[0].mxu0 %v1192
      %v1290 = vpop.f32.mrb[0].mxu0
      %v1291 = vadd.f32 0.0, %v1290
      %v1292 = vpop.f32.mrb[0].mxu0
      %1293 = vmatprep.mubr.f32.mxu0 0.0
      %1294 = vmatmul.mubr.f32.gmra.mrb[0].mxu0 %v1195
      %v1295 = vpop.f32.mrb[0].mxu0
      %v1296 = vadd.f32 0.0, %v1295
      %v1297 = vpop.f32.mrb[0].mxu0
      %1298 = vmatprep.mubr.f32.mxu0 0.0
      %1299 = vmatmul.mubr.f32.gmra.mrb[0].mxu0 %v1198
      %v1300 = vpop.f32.mrb[0].mxu0
      %v1301 = vadd.f32 0.0, %v1300
      %v1302 = vpop.f32.mrb[0].mxu0
      %1303 = vmatprep.mubr.f32.mxu0 0.0
      %1304 = vmatmul.mubr.f32.gmra.mrb[0].mxu0 %v1201
      %v1305 = vpop.f32.mrb[0].mxu0
      %v1306 = vadd.f32 0.0, %v1305
      %v1307 = vpop.f32.mrb[0].mxu0
      %1308 = vmatprep.mubr.f32.mxu0 0.0
      %1309 = vmatmul.mubr.f32.gmra.mrb[0].mxu0 %v1204
      %v1310 = vpop.f32.mrb[0].mxu0
      %v1311 = vadd.f32 0.0, %v1310
      %v1312 = vpop.f32.mrb[0].mxu0
      %1313 = vdwg.mxu0
      %v1314 = vadd.f32 %v1173, %v1276
      %v1315 = vadd.f32 %v1174, %v1281
      %v1316 = vadd.f32 %v1175, %v1286
      %v1317 = vadd.f32 %v1176, %v1291
      %v1318 = vadd.f32 %v1177, %v1296
      %v1319 = vadd.f32 %v1178, %v1301
      %v1320 = vadd.f32 %v1179, %v1306
      %v1321 = vadd.f32 %v1180, %v1311
      %1322 = vst.msk [vmem:[#allocation2] sm:$0xff] %vm451, %v1314
      %1323 = vst.msk [vmem:[#allocation2 + $0x8] sm:$0xff] %vm451, %v1315
      %1324 = vst.msk [vmem:[#allocation2 + $0x10] sm:$0xff] %vm451, %v1316
      %1325 = vst.msk [vmem:[#allocation2 + $0x18] sm:$0xff] %vm451, %v1317
      %1326 = vst.msk [vmem:[#allocation2 + $0x20] sm:$0xff] %vm451, %v1318
      %1327 = vst.msk [vmem:[#allocation2 + $0x28] sm:$0xff] %vm451, %v1319
      %1328 = vst.msk [vmem:[#allocation2 + $0x30] sm:$0xff] %vm451, %v1320
      %1329 = vst.msk [vmem:[#allocation2 + $0x38] sm:$0xff] %vm451, %v1321
      %v1330 = vld [vmem:[%s813] sm:$0xff]
      %v1331 = vld [vmem:[%s813 + $0x8] sm:$0xff]
      %v1332 = vld [vmem:[%s813 + $0x10] sm:$0xff]
      %v1333 = vld [vmem:[%s813 + $0x18] sm:$0xff]
      %v1334 = vld [vmem:[%s813 + $0x20] sm:$0xff]
      %v1335 = vld [vmem:[%s813 + $0x28] sm:$0xff]
      %v1336 = vld [vmem:[%s813 + $0x30] sm:$0xff]
      %v1337 = vld [vmem:[%s813 + $0x38] sm:$0xff]
      %v1338 = vld [vmem:[#allocation2] sm:$0xff]
      %v1339 = vld [vmem:[#allocation2 + $0x8] sm:$0xff]
      %v1340 = vld [vmem:[#allocation2 + $0x10] sm:$0xff]
      %v1341 = vld [vmem:[#allocation2 + $0x18] sm:$0xff]
      %v1342 = vld [vmem:[#allocation2 + $0x20] sm:$0xff]
      %v1343 = vld [vmem:[#allocation2 + $0x28] sm:$0xff]
      %v1344 = vld [vmem:[#allocation2 + $0x30] sm:$0xff]
      %v1345 = vld [vmem:[#allocation2 + $0x38] sm:$0xff]
      %v1346 = vld [vmem:[%s830 + $0x4] sm:$0xf]
      %v1348 = vsel %vm451, %v1330, 0
      %v1351 = vsel %vm451, %v1331, 0
      %v1354 = vsel %vm451, %v1332, 0
      %v1357 = vsel %vm451, %v1333, 0
      %v1360 = vsel %vm451, %v1334, 0
      %v1363 = vsel %vm451, %v1335, 0
      %v1366 = vsel %vm451, %v1336, 0
      %v1369 = vsel %vm451, %v1337, 0
      %v1372 = vsel %vm521, %v1346, 0
      %1374 = vmatprep.subr.mxu0 0.0
      %1375 = vmatpush1.msra.mxu0 %v1372
      %1376 = vmatprep.subr.mxu0 0.0
      %1377 = vmatpush1.msra.mxu0 0.0
      %1378 = vmatprep.subr.mxu0 0.0
      %1379 = vmatpush1.msra.mxu0 0.0
      %1380 = vmatprep.subr.mxu0 0.0
      %1381 = vmatpush1.msra.mxu0 0.0
      %1382 = vmatprep.subr.mxu0 0.0
      %1383 = vmatpush1.msra.mxu0 0.0
      %1384 = vmatprep.subr.mxu0 0.0
      %1385 = vmatpush1.msra.mxu0 0.0
      %1386 = vmatprep.subr.mxu0 0.0
      %1387 = vmatpush1.msra.mxu0 0.0
      %1388 = vmatprep.subr.mxu0 0.0
      %1389 = vmatpush1.msra.mxu0 0.0
      %1390 = vmatprep.subr.mxu0 0.0
      %1391 = vmatpush1.msra.mxu0 0.0
      %1392 = vmatprep.subr.mxu0 0.0
      %1393 = vmatpush1.msra.mxu0 0.0
      %1394 = vmatprep.subr.mxu0 0.0
      %1395 = vmatpush1.msra.mxu0 0.0
      %1396 = vmatprep.subr.mxu0 0.0
      %1397 = vmatpush1.msra.mxu0 0.0
      %1398 = vmatprep.subr.mxu0 0.0
      %1399 = vmatpush1.msra.mxu0 0.0
      %1400 = vmatprep.subr.mxu0 0.0
      %1401 = vmatpush1.msra.mxu0 0.0
      %1402 = vmatprep.subr.mxu0 0.0
      %1403 = vmatpush1.msra.mxu0 0.0
      %1404 = vmatprep.subr.mxu0 0.0
      %1405 = vmatpush1.msra.mxu0 0.0
      %1406 = vmatprep.subr.mxu0 0.0
      %1407 = vmatpush1.msra.mxu0 0.0
      %1408 = vmatprep.subr.mxu0 0.0
      %1409 = vmatpush1.msra.mxu0 0.0
      %1410 = vmatprep.subr.mxu0 0.0
      %1411 = vmatpush1.msra.mxu0 0.0
      %1412 = vmatprep.subr.mxu0 0.0
      %1413 = vmatpush1.msra.mxu0 0.0
      %1414 = vmatprep.subr.mxu0 0.0
      %1415 = vmatpush1.msra.mxu0 0.0
      %1416 = vmatprep.subr.mxu0 0.0
      %1417 = vmatpush1.msra.mxu0 0.0
      %1418 = vmatprep.subr.mxu0 0.0
      %1419 = vmatpush1.msra.mxu0 0.0
      %1420 = vmatprep.subr.mxu0 0.0
      %1421 = vmatpush1.msra.mxu0 0.0
      %1422 = vmatprep.subr.mxu0 0.0
      %1423 = vmatpush1.msra.mxu0 0.0
      %1424 = vmatprep.subr.mxu0 0.0
      %1425 = vmatpush1.msra.mxu0 0.0
      %1426 = vmatprep.subr.mxu0 0.0
      %1427 = vmatpush1.msra.mxu0 0.0
      %1428 = vmatprep.subr.mxu0 0.0
      %1429 = vmatpush1.msra.mxu0 0.0
      %1430 = vmatprep.subr.mxu0 0.0
      %1431 = vmatpush1.msra.mxu0 0.0
      %1432 = vmatprep.subr.mxu0 0.0
      %1433 = vmatpush1.msra.mxu0 0.0
      %1434 = vmatprep.subr.mxu0 0.0
      %1435 = vmatpush1.msra.mxu0 0.0
      %1436 = vmatprep.subr.mxu0 0.0
      %1437 = vmatpush1.msra.mxu0 0.0
      %1438 = vmatprep.mubr.f32.mxu0 0.0
      %1439 = vmatmul.mubr.f32.gmra.mrb[0].mxu0 %v1348
      %v1440 = vpop.f32.mrb[0].mxu0
      %v1441 = vadd.f32 0.0, %v1440
      %v1442 = vpop.f32.mrb[0].mxu0
      %1443 = vmatprep.mubr.f32.mxu0 0.0
      %1444 = vmatmul.mubr.f32.gmra.mrb[0].mxu0 %v1351
      %v1445 = vpop.f32.mrb[0].mxu0
      %v1446 = vadd.f32 0.0, %v1445
      %v1447 = vpop.f32.mrb[0].mxu0
      %1448 = vmatprep.mubr.f32.mxu0 0.0
      %1449 = vmatmul.mubr.f32.gmra.mrb[0].mxu0 %v1354
      %v1450 = vpop.f32.mrb[0].mxu0
      %v1451 = vadd.f32 0.0, %v1450
      %v1452 = vpop.f32.mrb[0].mxu0
      %1453 = vmatprep.mubr.f32.mxu0 0.0
      %1454 = vmatmul.mubr.f32.gmra.mrb[0].mxu0 %v1357
      %v1455 = vpop.f32.mrb[0].mxu0
      %v1456 = vadd.f32 0.0, %v1455
      %v1457 = vpop.f32.mrb[0].mxu0
      %1458 = vmatprep.mubr.f32.mxu0 0.0
      %1459 = vmatmul.mubr.f32.gmra.mrb[0].mxu0 %v1360
      %v1460 = vpop.f32.mrb[0].mxu0
      %v1461 = vadd.f32 0.0, %v1460
      %v1462 = vpop.f32.mrb[0].mxu0
      %1463 = vmatprep.mubr.f32.mxu0 0.0
      %1464 = vmatmul.mubr.f32.gmra.mrb[0].mxu0 %v1363
      %v1465 = vpop.f32.mrb[0].mxu0
      %v1466 = vadd.f32 0.0, %v1465
      %v1467 = vpop.f32.mrb[0].mxu0
      %1468 = vmatprep.mubr.f32.mxu0 0.0
      %1469 = vmatmul.mubr.f32.gmra.mrb[0].mxu0 %v1366
      %v1470 = vpop.f32.mrb[0].mxu0
      %v1471 = vadd.f32 0.0, %v1470
      %v1472 = vpop.f32.mrb[0].mxu0
      %1473 = vmatprep.mubr.f32.mxu0 0.0
      %1474 = vmatmul.mubr.f32.gmra.mrb[0].mxu0 %v1369
      %v1475 = vpop.f32.mrb[0].mxu0
      %v1476 = vadd.f32 0.0, %v1475
      %v1477 = vpop.f32.mrb[0].mxu0
      %1478 = vdwg.mxu0
      %v1479 = vadd.f32 %v1338, %v1441
      %v1480 = vadd.f32 %v1339, %v1446
      %v1481 = vadd.f32 %v1340, %v1451
      %v1482 = vadd.f32 %v1341, %v1456
      %v1483 = vadd.f32 %v1342, %v1461
      %v1484 = vadd.f32 %v1343, %v1466
      %v1485 = vadd.f32 %v1344, %v1471
      %v1486 = vadd.f32 %v1345, %v1476
      %1487 = vst.msk [vmem:[#allocation2] sm:$0xff] %vm451, %v1479
      %1488 = vst.msk [vmem:[#allocation2 + $0x8] sm:$0xff] %vm451, %v1480
      %1489 = vst.msk [vmem:[#allocation2 + $0x10] sm:$0xff] %vm451, %v1481
      %1490 = vst.msk [vmem:[#allocation2 + $0x18] sm:$0xff] %vm451, %v1482
      %1491 = vst.msk [vmem:[#allocation2 + $0x20] sm:$0xff] %vm451, %v1483
      %1492 = vst.msk [vmem:[#allocation2 + $0x28] sm:$0xff] %vm451, %v1484
      %1493 = vst.msk [vmem:[#allocation2 + $0x30] sm:$0xff] %vm451, %v1485
      %1494 = vst.msk [vmem:[#allocation2 + $0x38] sm:$0xff] %vm451, %v1486
      %v1495 = vld [vmem:[%s376 + $0x2] sm:$0xff]
      %v1496 = vld [vmem:[%s376 + $0x12] sm:$0xff]
      %v1497 = vld [vmem:[%s376 + $0x22] sm:$0xff]
      %v1498 = vld [vmem:[%s376 + $0x32] sm:$0xff]
      %v1499 = vld [vmem:[%s376 + $0x42] sm:$0xff]
      %v1500 = vld [vmem:[%s376 + $0x52] sm:$0xff]
      %v1501 = vld [vmem:[%s376 + $0x62] sm:$0xff]
      %v1502 = vld [vmem:[%s376 + $0x72] sm:$0xff]
      %v1503 = vld [vmem:[%s376 + $0x82] sm:$0xff]
      %v1504 = vld [vmem:[%s376 + $0x92] sm:$0xff]
      %1505 = vst.msk [vmem:[#allocation3] sm:$0xff] %vm451, %v1495
      %1506 = vst.msk [vmem:[#allocation3 + $0x8] sm:$0xff] %vm451, %v1496
      %1507 = vst.msk [vmem:[#allocation3 + $0x10] sm:$0xff] %vm451, %v1497
      %1508 = vst.msk [vmem:[#allocation3 + $0x18] sm:$0xff] %vm451, %v1498
      %1509 = vst.msk [vmem:[#allocation3 + $0x20] sm:$0xff] %vm451, %v1499
      %1510 = vst.msk [vmem:[#allocation3 + $0x28] sm:$0xff] %vm451, %v1500
      %1511 = vst.msk [vmem:[#allocation3 + $0x30] sm:$0xff] %vm451, %v1501
      %1512 = vst.msk [vmem:[#allocation3 + $0x38] sm:$0xff] %vm451, %v1502
      %1513 = vst.msk [vmem:[#allocation3 + $0x40] sm:$0xff] %vm451, %v1503
      %1514 = vst.msk [vmem:[#allocation3 + $0x48] sm:$0xff] %vm451, %v1504
      %v1515 = vld [vmem:[#allocation3] sm:$0xff]
      %v1516 = vld [vmem:[#allocation3 + $0x8] sm:$0xff]
      %v1517 = vld [vmem:[#allocation3 + $0x10] sm:$0xff]
      %v1518 = vld [vmem:[#allocation3 + $0x18] sm:$0xff]
      %v1519 = vld [vmem:[#allocation3 + $0x20] sm:$0xff]
      %v1520 = vld [vmem:[#allocation3 + $0x28] sm:$0xff]
      %v1521 = vld [vmem:[#allocation3 + $0x30] sm:$0xff]
      %v1522 = vld [vmem:[#allocation3 + $0x38] sm:$0xff]
      %v1523 = vld [vmem:[#allocation2] sm:$0xff]
      %v1524 = vld [vmem:[#allocation2 + $0x8] sm:$0xff]
      %v1525 = vld [vmem:[#allocation2 + $0x10] sm:$0xff]
      %v1526 = vld [vmem:[#allocation2 + $0x18] sm:$0xff]
      %v1527 = vld [vmem:[#allocation2 + $0x20] sm:$0xff]
      %v1528 = vld [vmem:[#allocation2 + $0x28] sm:$0xff]
      %v1529 = vld [vmem:[#allocation2 + $0x30] sm:$0xff]
      %v1530 = vld [vmem:[#allocation2 + $0x38] sm:$0xff]
      %v1531 = vld [vmem:[%s3 + $0x8] sm:$0xf]
      %v1533 = vsel %vm451, %v1515, 0
      %v1536 = vsel %vm451, %v1516, 0
      %v1539 = vsel %vm451, %v1517, 0
      %v1542 = vsel %vm451, %v1518, 0
      %v1545 = vsel %vm451, %v1519, 0
      %v1548 = vsel %vm451, %v1520, 0
      %v1551 = vsel %vm451, %v1521, 0
      %v1554 = vsel %vm451, %v1522, 0
      %v1557 = vsel %vm521, %v1531, 0
      %1559 = vmatprep.subr.mxu0 0.0
      %1560 = vmatpush1.msra.mxu0 %v1557
      %1561 = vmatprep.subr.mxu0 0.0
      %1562 = vmatpush1.msra.mxu0 0.0
      %1563 = vmatprep.subr.mxu0 0.0
      %1564 = vmatpush1.msra.mxu0 0.0
      %1565 = vmatprep.subr.mxu0 0.0
      %1566 = vmatpush1.msra.mxu0 0.0
      %1567 = vmatprep.subr.mxu0 0.0
      %1568 = vmatpush1.msra.mxu0 0.0
      %1569 = vmatprep.subr.mxu0 0.0
      %1570 = vmatpush1.msra.mxu0 0.0
      %1571 = vmatprep.subr.mxu0 0.0
      %1572 = vmatpush1.msra.mxu0 0.0
      %1573 = vmatprep.subr.mxu0 0.0
      %1574 = vmatpush1.msra.mxu0 0.0
      %1575 = vmatprep.subr.mxu0 0.0
      %1576 = vmatpush1.msra.mxu0 0.0
      %1577 = vmatprep.subr.mxu0 0.0
      %1578 = vmatpush1.msra.mxu0 0.0
      %1579 = vmatprep.subr.mxu0 0.0
      %1580 = vmatpush1.msra.mxu0 0.0
      %1581 = vmatprep.subr.mxu0 0.0
      %1582 = vmatpush1.msra.mxu0 0.0
      %1583 = vmatprep.subr.mxu0 0.0
      %1584 = vmatpush1.msra.mxu0 0.0
      %1585 = vmatprep.subr.mxu0 0.0
      %1586 = vmatpush1.msra.mxu0 0.0
      %1587 = vmatprep.subr.mxu0 0.0
      %1588 = vmatpush1.msra.mxu0 0.0
      %1589 = vmatprep.subr.mxu0 0.0
      %1590 = vmatpush1.msra.mxu0 0.0
      %1591 = vmatprep.subr.mxu0 0.0
      %1592 = vmatpush1.msra.mxu0 0.0
      %1593 = vmatprep.subr.mxu0 0.0
      %1594 = vmatpush1.msra.mxu0 0.0
      %1595 = vmatprep.subr.mxu0 0.0
      %1596 = vmatpush1.msra.mxu0 0.0
      %1597 = vmatprep.subr.mxu0 0.0
      %1598 = vmatpush1.msra.mxu0 0.0
      %1599 = vmatprep.subr.mxu0 0.0
      %1600 = vmatpush1.msra.mxu0 0.0
      %1601 = vmatprep.subr.mxu0 0.0
      %1602 = vmatpush1.msra.mxu0 0.0
      %1603 = vmatprep.subr.mxu0 0.0
      %1604 = vmatpush1.msra.mxu0 0.0
      %1605 = vmatprep.subr.mxu0 0.0
      %1606 = vmatpush1.msra.mxu0 0.0
      %1607 = vmatprep.subr.mxu0 0.0
      %1608 = vmatpush1.msra.mxu0 0.0
      %1609 = vmatprep.subr.mxu0 0.0
      %1610 = vmatpush1.msra.mxu0 0.0
      %1611 = vmatprep.subr.mxu0 0.0
      %1612 = vmatpush1.msra.mxu0 0.0
      %1613 = vmatprep.subr.mxu0 0.0
      %1614 = vmatpush1.msra.mxu0 0.0
      %1615 = vmatprep.subr.mxu0 0.0
      %1616 = vmatpush1.msra.mxu0 0.0
      %1617 = vmatprep.subr.mxu0 0.0
      %1618 = vmatpush1.msra.mxu0 0.0
      %1619 = vmatprep.subr.mxu0 0.0
      %1620 = vmatpush1.msra.mxu0 0.0
      %1621 = vmatprep.subr.mxu0 0.0
      %1622 = vmatpush1.msra.mxu0 0.0
      %1623 = vmatprep.mubr.f32.mxu0 0.0
      %1624 = vmatmul.mubr.f32.gmra.mrb[0].mxu0 %v1533
      %v1625 = vpop.f32.mrb[0].mxu0
      %v1626 = vadd.f32 0.0, %v1625
      %v1627 = vpop.f32.mrb[0].mxu0
      %1628 = vmatprep.mubr.f32.mxu0 0.0
      %1629 = vmatmul.mubr.f32.gmra.mrb[0].mxu0 %v1536
      %v1630 = vpop.f32.mrb[0].mxu0
      %v1631 = vadd.f32 0.0, %v1630
      %v1632 = vpop.f32.mrb[0].mxu0
      %1633 = vmatprep.mubr.f32.mxu0 0.0
      %1634 = vmatmul.mubr.f32.gmra.mrb[0].mxu0 %v1539
      %v1635 = vpop.f32.mrb[0].mxu0
      %v1636 = vadd.f32 0.0, %v1635
      %v1637 = vpop.f32.mrb[0].mxu0
      %1638 = vmatprep.mubr.f32.mxu0 0.0
      %1639 = vmatmul.mubr.f32.gmra.mrb[0].mxu0 %v1542
      %v1640 = vpop.f32.mrb[0].mxu0
      %v1641 = vadd.f32 0.0, %v1640
      %v1642 = vpop.f32.mrb[0].mxu0
      %1643 = vmatprep.mubr.f32.mxu0 0.0
      %1644 = vmatmul.mubr.f32.gmra.mrb[0].mxu0 %v1545
      %v1645 = vpop.f32.mrb[0].mxu0
      %v1646 = vadd.f32 0.0, %v1645
      %v1647 = vpop.f32.mrb[0].mxu0
      %1648 = vmatprep.mubr.f32.mxu0 0.0
      %1649 = vmatmul.mubr.f32.gmra.mrb[0].mxu0 %v1548
      %v1650 = vpop.f32.mrb[0].mxu0
      %v1651 = vadd.f32 0.0, %v1650
      %v1652 = vpop.f32.mrb[0].mxu0
      %1653 = vmatprep.mubr.f32.mxu0 0.0
      %1654 = vmatmul.mubr.f32.gmra.mrb[0].mxu0 %v1551
      %v1655 = vpop.f32.mrb[0].mxu0
      %v1656 = vadd.f32 0.0, %v1655
      %v1657 = vpop.f32.mrb[0].mxu0
      %1658 = vmatprep.mubr.f32.mxu0 0.0
      %1659 = vmatmul.mubr.f32.gmra.mrb[0].mxu0 %v1554
      %v1660 = vpop.f32.mrb[0].mxu0
      %v1661 = vadd.f32 0.0, %v1660
      %v1662 = vpop.f32.mrb[0].mxu0
      %1663 = vdwg.mxu0
      %v1664 = vadd.f32 %v1523, %v1626
      %v1665 = vadd.f32 %v1524, %v1631
      %v1666 = vadd.f32 %v1525, %v1636
      %v1667 = vadd.f32 %v1526, %v1641
      %v1668 = vadd.f32 %v1527, %v1646
      %v1669 = vadd.f32 %v1528, %v1651
      %v1670 = vadd.f32 %v1529, %v1656
      %v1671 = vadd.f32 %v1530, %v1661
      %1672 = vst.msk [vmem:[#allocation2] sm:$0xff] %vm451, %v1664
      %1673 = vst.msk [vmem:[#allocation2 + $0x8] sm:$0xff] %vm451, %v1665
      %1674 = vst.msk [vmem:[#allocation2 + $0x10] sm:$0xff] %vm451, %v1666
      %1675 = vst.msk [vmem:[#allocation2 + $0x18] sm:$0xff] %vm451, %v1667
      %1676 = vst.msk [vmem:[#allocation2 + $0x20] sm:$0xff] %vm451, %v1668
      %1677 = vst.msk [vmem:[#allocation2 + $0x28] sm:$0xff] %vm451, %v1669
      %1678 = vst.msk [vmem:[#allocation2 + $0x30] sm:$0xff] %vm451, %v1670
      %1679 = vst.msk [vmem:[#allocation2 + $0x38] sm:$0xff] %vm451, %v1671
      %v1680 = vld [vmem:[%s646] sm:$0xff]
      %v1681 = vld [vmem:[%s646 + $0x8] sm:$0xff]
      %v1682 = vld [vmem:[%s646 + $0x10] sm:$0xff]
      %v1683 = vld [vmem:[%s646 + $0x18] sm:$0xff]
      %v1684 = vld [vmem:[%s646 + $0x20] sm:$0xff]
      %v1685 = vld [vmem:[%s646 + $0x28] sm:$0xff]
      %v1686 = vld [vmem:[%s646 + $0x30] sm:$0xff]
      %v1687 = vld [vmem:[%s646 + $0x38] sm:$0xff]
      %v1688 = vld [vmem:[#allocation2] sm:$0xff]
      %v1689 = vld [vmem:[#allocation2 + $0x8] sm:$0xff]
      %v1690 = vld [vmem:[#allocation2 + $0x10] sm:$0xff]
      %v1691 = vld [vmem:[#allocation2 + $0x18] sm:$0xff]
      %v1692 = vld [vmem:[#allocation2 + $0x20] sm:$0xff]
      %v1693 = vld [vmem:[#allocation2 + $0x28] sm:$0xff]
      %v1694 = vld [vmem:[#allocation2 + $0x30] sm:$0xff]
      %v1695 = vld [vmem:[#allocation2 + $0x38] sm:$0xff]
      %v1696 = vld [vmem:[%s663 + $0x8] sm:$0xf]
      %v1698 = vsel %vm451, %v1680, 0
      %v1701 = vsel %vm451, %v1681, 0
      %v1704 = vsel %vm451, %v1682, 0
      %v1707 = vsel %vm451, %v1683, 0
      %v1710 = vsel %vm451, %v1684, 0
      %v1713 = vsel %vm451, %v1685, 0
      %v1716 = vsel %vm451, %v1686, 0
      %v1719 = vsel %vm451, %v1687, 0
      %v1722 = vsel %vm521, %v1696, 0
      %1724 = vmatprep.subr.mxu0 0.0
      %1725 = vmatpush1.msra.mxu0 %v1722
      %1726 = vmatprep.subr.mxu0 0.0
      %1727 = vmatpush1.msra.mxu0 0.0
      %1728 = vmatprep.subr.mxu0 0.0
      %1729 = vmatpush1.msra.mxu0 0.0
      %1730 = vmatprep.subr.mxu0 0.0
      %1731 = vmatpush1.msra.mxu0 0.0
      %1732 = vmatprep.subr.mxu0 0.0
      %1733 = vmatpush1.msra.mxu0 0.0
      %1734 = vmatprep.subr.mxu0 0.0
      %1735 = vmatpush1.msra.mxu0 0.0
      %1736 = vmatprep.subr.mxu0 0.0
      %1737 = vmatpush1.msra.mxu0 0.0
      %1738 = vmatprep.subr.mxu0 0.0
      %1739 = vmatpush1.msra.mxu0 0.0
      %1740 = vmatprep.subr.mxu0 0.0
      %1741 = vmatpush1.msra.mxu0 0.0
      %1742 = vmatprep.subr.mxu0 0.0
      %1743 = vmatpush1.msra.mxu0 0.0
      %1744 = vmatprep.subr.mxu0 0.0
      %1745 = vmatpush1.msra.mxu0 0.0
      %1746 = vmatprep.subr.mxu0 0.0
      %1747 = vmatpush1.msra.mxu0 0.0
      %1748 = vmatprep.subr.mxu0 0.0
      %1749 = vmatpush1.msra.mxu0 0.0
      %1750 = vmatprep.subr.mxu0 0.0
      %1751 = vmatpush1.msra.mxu0 0.0
      %1752 = vmatprep.subr.mxu0 0.0
      %1753 = vmatpush1.msra.mxu0 0.0
      %1754 = vmatprep.subr.mxu0 0.0
      %1755 = vmatpush1.msra.mxu0 0.0
      %1756 = vmatprep.subr.mxu0 0.0
      %1757 = vmatpush1.msra.mxu0 0.0
      %1758 = vmatprep.subr.mxu0 0.0
      %1759 = vmatpush1.msra.mxu0 0.0
      %1760 = vmatprep.subr.mxu0 0.0
      %1761 = vmatpush1.msra.mxu0 0.0
      %1762 = vmatprep.subr.mxu0 0.0
      %1763 = vmatpush1.msra.mxu0 0.0
      %1764 = vmatprep.subr.mxu0 0.0
      %1765 = vmatpush1.msra.mxu0 0.0
      %1766 = vmatprep.subr.mxu0 0.0
      %1767 = vmatpush1.msra.mxu0 0.0
      %1768 = vmatprep.subr.mxu0 0.0
      %1769 = vmatpush1.msra.mxu0 0.0
      %1770 = vmatprep.subr.mxu0 0.0
      %1771 = vmatpush1.msra.mxu0 0.0
      %1772 = vmatprep.subr.mxu0 0.0
      %1773 = vmatpush1.msra.mxu0 0.0
      %1774 = vmatprep.subr.mxu0 0.0
      %1775 = vmatpush1.msra.mxu0 0.0
      %1776 = vmatprep.subr.mxu0 0.0
      %1777 = vmatpush1.msra.mxu0 0.0
      %1778 = vmatprep.subr.mxu0 0.0
      %1779 = vmatpush1.msra.mxu0 0.0
      %1780 = vmatprep.subr.mxu0 0.0
      %1781 = vmatpush1.msra.mxu0 0.0
      %1782 = vmatprep.subr.mxu0 0.0
      %1783 = vmatpush1.msra.mxu0 0.0
      %1784 = vmatprep.subr.mxu0 0.0
      %1785 = vmatpush1.msra.mxu0 0.0
      %1786 = vmatprep.subr.mxu0 0.0
      %1787 = vmatpush1.msra.mxu0 0.0
      %1788 = vmatprep.mubr.f32.mxu0 0.0
      %1789 = vmatmul.mubr.f32.gmra.mrb[0].mxu0 %v1698
      %v1790 = vpop.f32.mrb[0].mxu0
      %v1791 = vadd.f32 0.0, %v1790
      %v1792 = vpop.f32.mrb[0].mxu0
      %1793 = vmatprep.mubr.f32.mxu0 0.0
      %1794 = vmatmul.mubr.f32.gmra.mrb[0].mxu0 %v1701
      %v1795 = vpop.f32.mrb[0].mxu0
      %v1796 = vadd.f32 0.0, %v1795
      %v1797 = vpop.f32.mrb[0].mxu0
      %1798 = vmatprep.mubr.f32.mxu0 0.0
      %1799 = vmatmul.mubr.f32.gmra.mrb[0].mxu0 %v1704
      %v1800 = vpop.f32.mrb[0].mxu0
      %v1801 = vadd.f32 0.0, %v1800
      %v1802 = vpop.f32.mrb[0].mxu0
      %1803 = vmatprep.mubr.f32.mxu0 0.0
      %1804 = vmatmul.mubr.f32.gmra.mrb[0].mxu0 %v1707
      %v1805 = vpop.f32.mrb[0].mxu0
      %v1806 = vadd.f32 0.0, %v1805
      %v1807 = vpop.f32.mrb[0].mxu0
      %1808 = vmatprep.mubr.f32.mxu0 0.0
      %1809 = vmatmul.mubr.f32.gmra.mrb[0].mxu0 %v1710
      %v1810 = vpop.f32.mrb[0].mxu0
      %v1811 = vadd.f32 0.0, %v1810
      %v1812 = vpop.f32.mrb[0].mxu0
      %1813 = vmatprep.mubr.f32.mxu0 0.0
      %1814 = vmatmul.mubr.f32.gmra.mrb[0].mxu0 %v1713
      %v1815 = vpop.f32.mrb[0].mxu0
      %v1816 = vadd.f32 0.0, %v1815
      %v1817 = vpop.f32.mrb[0].mxu0
      %1818 = vmatprep.mubr.f32.mxu0 0.0
      %1819 = vmatmul.mubr.f32.gmra.mrb[0].mxu0 %v1716
      %v1820 = vpop.f32.mrb[0].mxu0
      %v1821 = vadd.f32 0.0, %v1820
      %v1822 = vpop.f32.mrb[0].mxu0
      %1823 = vmatprep.mubr.f32.mxu0 0.0
      %1824 = vmatmul.mubr.f32.gmra.mrb[0].mxu0 %v1719
      %v1825 = vpop.f32.mrb[0].mxu0
      %v1826 = vadd.f32 0.0, %v1825
      %v1827 = vpop.f32.mrb[0].mxu0
      %1828 = vdwg.mxu0
      %v1829 = vadd.f32 %v1688, %v1791
      %v1830 = vadd.f32 %v1689, %v1796
      %v1831 = vadd.f32 %v1690, %v1801
      %v1832 = vadd.f32 %v1691, %v1806
      %v1833 = vadd.f32 %v1692, %v1811
      %v1834 = vadd.f32 %v1693, %v1816
      %v1835 = vadd.f32 %v1694, %v1821
      %v1836 = vadd.f32 %v1695, %v1826
      %1837 = vst.msk [vmem:[#allocation2] sm:$0xff] %vm451, %v1829
      %1838 = vst.msk [vmem:[#allocation2 + $0x8] sm:$0xff] %vm451, %v1830
      %1839 = vst.msk [vmem:[#allocation2 + $0x10] sm:$0xff] %vm451, %v1831
      %1840 = vst.msk [vmem:[#allocation2 + $0x18] sm:$0xff] %vm451, %v1832
      %1841 = vst.msk [vmem:[#allocation2 + $0x20] sm:$0xff] %vm451, %v1833
      %1842 = vst.msk [vmem:[#allocation2 + $0x28] sm:$0xff] %vm451, %v1834
      %1843 = vst.msk [vmem:[#allocation2 + $0x30] sm:$0xff] %vm451, %v1835
      %1844 = vst.msk [vmem:[#allocation2 + $0x38] sm:$0xff] %vm451, %v1836
      %v1845 = vld [vmem:[%s813] sm:$0xff]
      %v1846 = vld [vmem:[%s813 + $0x8] sm:$0xff]
      %v1847 = vld [vmem:[%s813 + $0x10] sm:$0xff]
      %v1848 = vld [vmem:[%s813 + $0x18] sm:$0xff]
      %v1849 = vld [vmem:[%s813 + $0x20] sm:$0xff]
      %v1850 = vld [vmem:[%s813 + $0x28] sm:$0xff]
      %v1851 = vld [vmem:[%s813 + $0x30] sm:$0xff]
      %v1852 = vld [vmem:[%s813 + $0x38] sm:$0xff]
      %v1853 = vld [vmem:[#allocation2] sm:$0xff]
      %v1854 = vld [vmem:[#allocation2 + $0x8] sm:$0xff]
      %v1855 = vld [vmem:[#allocation2 + $0x10] sm:$0xff]
      %v1856 = vld [vmem:[#allocation2 + $0x18] sm:$0xff]
      %v1857 = vld [vmem:[#allocation2 + $0x20] sm:$0xff]
      %v1858 = vld [vmem:[#allocation2 + $0x28] sm:$0xff]
      %v1859 = vld [vmem:[#allocation2 + $0x30] sm:$0xff]
      %v1860 = vld [vmem:[#allocation2 + $0x38] sm:$0xff]
      %v1861 = vld [vmem:[%s830 + $0x8] sm:$0xf]
      %v1863 = vsel %vm451, %v1845, 0
      %v1866 = vsel %vm451, %v1846, 0
      %v1869 = vsel %vm451, %v1847, 0
      %v1872 = vsel %vm451, %v1848, 0
      %v1875 = vsel %vm451, %v1849, 0
      %v1878 = vsel %vm451, %v1850, 0
      %v1881 = vsel %vm451, %v1851, 0
      %v1884 = vsel %vm451, %v1852, 0
      %v1887 = vsel %vm521, %v1861, 0
      %1889 = vmatprep.subr.mxu0 0.0
      %1890 = vmatpush1.msra.mxu0 %v1887
      %1891 = vmatprep.subr.mxu0 0.0
      %1892 = vmatpush1.msra.mxu0 0.0
      %1893 = vmatprep.subr.mxu0 0.0
      %1894 = vmatpush1.msra.mxu0 0.0
      %1895 = vmatprep.subr.mxu0 0.0
      %1896 = vmatpush1.msra.mxu0 0.0
      %1897 = vmatprep.subr.mxu0 0.0
      %1898 = vmatpush1.msra.mxu0 0.0
      %1899 = vmatprep.subr.mxu0 0.0
      %1900 = vmatpush1.msra.mxu0 0.0
      %1901 = vmatprep.subr.mxu0 0.0
      %1902 = vmatpush1.msra.mxu0 0.0
      %1903 = vmatprep.subr.mxu0 0.0
      %1904 = vmatpush1.msra.mxu0 0.0
      %1905 = vmatprep.subr.mxu0 0.0
      %1906 = vmatpush1.msra.mxu0 0.0
      %1907 = vmatprep.subr.mxu0 0.0
      %1908 = vmatpush1.msra.mxu0 0.0
      %1909 = vmatprep.subr.mxu0 0.0
      %1910 = vmatpush1.msra.mxu0 0.0
      %1911 = vmatprep.subr.mxu0 0.0
      %1912 = vmatpush1.msra.mxu0 0.0
      %1913 = vmatprep.subr.mxu0 0.0
      %1914 = vmatpush1.msra.mxu0 0.0
      %1915 = vmatprep.subr.mxu0 0.0
      %1916 = vmatpush1.msra.mxu0 0.0
      %1917 = vmatprep.subr.mxu0 0.0
      %1918 = vmatpush1.msra.mxu0 0.0
      %1919 = vmatprep.subr.mxu0 0.0
      %1920 = vmatpush1.msra.mxu0 0.0
      %1921 = vmatprep.subr.mxu0 0.0
      %1922 = vmatpush1.msra.mxu0 0.0
      %1923 = vmatprep.subr.mxu0 0.0
      %1924 = vmatpush1.msra.mxu0 0.0
      %1925 = vmatprep.subr.mxu0 0.0
      %1926 = vmatpush1.msra.mxu0 0.0
      %1927 = vmatprep.subr.mxu0 0.0
      %1928 = vmatpush1.msra.mxu0 0.0
      %1929 = vmatprep.subr.mxu0 0.0
      %1930 = vmatpush1.msra.mxu0 0.0
      %1931 = vmatprep.subr.mxu0 0.0
      %1932 = vmatpush1.msra.mxu0 0.0
      %1933 = vmatprep.subr.mxu0 0.0
      %1934 = vmatpush1.msra.mxu0 0.0
      %1935 = vmatprep.subr.mxu0 0.0
      %1936 = vmatpush1.msra.mxu0 0.0
      %1937 = vmatprep.subr.mxu0 0.0
      %1938 = vmatpush1.msra.mxu0 0.0
      %1939 = vmatprep.subr.mxu0 0.0
      %1940 = vmatpush1.msra.mxu0 0.0
      %1941 = vmatprep.subr.mxu0 0.0
      %1942 = vmatpush1.msra.mxu0 0.0
      %1943 = vmatprep.subr.mxu0 0.0
      %1944 = vmatpush1.msra.mxu0 0.0
      %1945 = vmatprep.subr.mxu0 0.0
      %1946 = vmatpush1.msra.mxu0 0.0
      %1947 = vmatprep.subr.mxu0 0.0
      %1948 = vmatpush1.msra.mxu0 0.0
      %1949 = vmatprep.subr.mxu0 0.0
      %1950 = vmatpush1.msra.mxu0 0.0
      %1951 = vmatprep.subr.mxu0 0.0
      %1952 = vmatpush1.msra.mxu0 0.0
      %1953 = vmatprep.mubr.f32.mxu0 0.0
      %1954 = vmatmul.mubr.f32.gmra.mrb[0].mxu0 %v1863
      %v1955 = vpop.f32.mrb[0].mxu0
      %v1956 = vadd.f32 0.0, %v1955
      %v1957 = vpop.f32.mrb[0].mxu0
      %1958 = vmatprep.mubr.f32.mxu0 0.0
      %1959 = vmatmul.mubr.f32.gmra.mrb[0].mxu0 %v1866
      %v1960 = vpop.f32.mrb[0].mxu0
      %v1961 = vadd.f32 0.0, %v1960
      %v1962 = vpop.f32.mrb[0].mxu0
      %1963 = vmatprep.mubr.f32.mxu0 0.0
      %1964 = vmatmul.mubr.f32.gmra.mrb[0].mxu0 %v1869
      %v1965 = vpop.f32.mrb[0].mxu0
      %v1966 = vadd.f32 0.0, %v1965
      %v1967 = vpop.f32.mrb[0].mxu0
      %1968 = vmatprep.mubr.f32.mxu0 0.0
      %1969 = vmatmul.mubr.f32.gmra.mrb[0].mxu0 %v1872
      %v1970 = vpop.f32.mrb[0].mxu0
      %v1971 = vadd.f32 0.0, %v1970
      %v1972 = vpop.f32.mrb[0].mxu0
      %1973 = vmatprep.mubr.f32.mxu0 0.0
      %1974 = vmatmul.mubr.f32.gmra.mrb[0].mxu0 %v1875
      %v1975 = vpop.f32.mrb[0].mxu0
      %v1976 = vadd.f32 0.0, %v1975
      %v1977 = vpop.f32.mrb[0].mxu0
      %1978 = vmatprep.mubr.f32.mxu0 0.0
      %1979 = vmatmul.mubr.f32.gmra.mrb[0].mxu0 %v1878
      %v1980 = vpop.f32.mrb[0].mxu0
      %v1981 = vadd.f32 0.0, %v1980
      %v1982 = vpop.f32.mrb[0].mxu0
      %1983 = vmatprep.mubr.f32.mxu0 0.0
      %1984 = vmatmul.mubr.f32.gmra.mrb[0].mxu0 %v1881
      %v1985 = vpop.f32.mrb[0].mxu0
      %v1986 = vadd.f32 0.0, %v1985
      %v1987 = vpop.f32.mrb[0].mxu0
      %1988 = vmatprep.mubr.f32.mxu0 0.0
      %1989 = vmatmul.mubr.f32.gmra.mrb[0].mxu0 %v1884
      %v1990 = vpop.f32.mrb[0].mxu0
      %v1991 = vadd.f32 0.0, %v1990
      %v1992 = vpop.f32.mrb[0].mxu0
      %1993 = vdwg.mxu0
      %v1994 = vadd.f32 %v1853, %v1956
      %v1995 = vadd.f32 %v1854, %v1961
      %v1996 = vadd.f32 %v1855, %v1966
      %v1997 = vadd.f32 %v1856, %v1971
      %v1998 = vadd.f32 %v1857, %v1976
      %v1999 = vadd.f32 %v1858, %v1981
      %v2000 = vadd.f32 %v1859, %v1986
      %v2001 = vadd.f32 %v1860, %v1991
      %2002 = vst.msk [vmem:[#allocation2] sm:$0xff] %vm451, %v1994
      %2003 = vst.msk [vmem:[#allocation2 + $0x8] sm:$0xff] %vm451, %v1995
      %2004 = vst.msk [vmem:[#allocation2 + $0x10] sm:$0xff] %vm451, %v1996
      %2005 = vst.msk [vmem:[#allocation2 + $0x18] sm:$0xff] %vm451, %v1997
      %2006 = vst.msk [vmem:[#allocation2 + $0x20] sm:$0xff] %vm451, %v1998
      %2007 = vst.msk [vmem:[#allocation2 + $0x28] sm:$0xff] %vm451, %v1999
      %2008 = vst.msk [vmem:[#allocation2 + $0x30] sm:$0xff] %vm451, %v2000
      %2009 = vst.msk [vmem:[#allocation2 + $0x38] sm:$0xff] %vm451, %v2001
      %v2010 = vld [vmem:[%s394] sm:$0xff]
      %v2011 = vld [vmem:[%s394 + $0x10] sm:$0xff]
      %v2012 = vld [vmem:[%s394 + $0x20] sm:$0xff]
      %v2013 = vld [vmem:[%s394 + $0x30] sm:$0xff]
      %v2014 = vld [vmem:[%s394 + $0x40] sm:$0xff]
      %v2015 = vld [vmem:[%s394 + $0x50] sm:$0xff]
      %v2016 = vld [vmem:[%s394 + $0x60] sm:$0xff]
      %v2017 = vld [vmem:[%s394 + $0x70] sm:$0xff]
      %v2018 = vld [vmem:[%s394 + $0x80] sm:$0xff]
      %v2019 = vld [vmem:[%s394 + $0x90] sm:$0xff]
      %2020 = vst.msk [vmem:[#allocation3] sm:$0xff] %vm451, %v2010
      %2021 = vst.msk [vmem:[#allocation3 + $0x8] sm:$0xff] %vm451, %v2011
      %2022 = vst.msk [vmem:[#allocation3 + $0x10] sm:$0xff] %vm451, %v2012
      %2023 = vst.msk [vmem:[#allocation3 + $0x18] sm:$0xff] %vm451, %v2013
      %2024 = vst.msk [vmem:[#allocation3 + $0x20] sm:$0xff] %vm451, %v2014
      %2025 = vst.msk [vmem:[#allocation3 + $0x28] sm:$0xff] %vm451, %v2015
      %2026 = vst.msk [vmem:[#allocation3 + $0x30] sm:$0xff] %vm451, %v2016
      %2027 = vst.msk [vmem:[#allocation3 + $0x38] sm:$0xff] %vm451, %v2017
      %2028 = vst.msk [vmem:[#allocation3 + $0x40] sm:$0xff] %vm451, %v2018
      %2029 = vst.msk [vmem:[#allocation3 + $0x48] sm:$0xff] %vm451, %v2019
      %v2030 = vld [vmem:[#allocation3] sm:$0xff]
      %v2031 = vld [vmem:[#allocation3 + $0x8] sm:$0xff]
      %v2032 = vld [vmem:[#allocation3 + $0x10] sm:$0xff]
      %v2033 = vld [vmem:[#allocation3 + $0x18] sm:$0xff]
      %v2034 = vld [vmem:[#allocation3 + $0x20] sm:$0xff]
      %v2035 = vld [vmem:[#allocation3 + $0x28] sm:$0xff]
      %v2036 = vld [vmem:[#allocation3 + $0x30] sm:$0xff]
      %v2037 = vld [vmem:[#allocation3 + $0x38] sm:$0xff]
      %v2038 = vld [vmem:[#allocation2] sm:$0xff]
      %v2039 = vld [vmem:[#allocation2 + $0x8] sm:$0xff]
      %v2040 = vld [vmem:[#allocation2 + $0x10] sm:$0xff]
      %v2041 = vld [vmem:[#allocation2 + $0x18] sm:$0xff]
      %v2042 = vld [vmem:[#allocation2 + $0x20] sm:$0xff]
      %v2043 = vld [vmem:[#allocation2 + $0x28] sm:$0xff]
      %v2044 = vld [vmem:[#allocation2 + $0x30] sm:$0xff]
      %v2045 = vld [vmem:[#allocation2 + $0x38] sm:$0xff]
      %s2046 = scalar_lea.vmem %s3, 48
      %v2047 = vld [vmem:[%s2046] sm:$0xf]
      %v2049 = vsel %vm451, %v2030, 0
      %v2052 = vsel %vm451, %v2031, 0
      %v2055 = vsel %vm451, %v2032, 0
      %v2058 = vsel %vm451, %v2033, 0
      %v2061 = vsel %vm451, %v2034, 0
      %v2064 = vsel %vm451, %v2035, 0
      %v2067 = vsel %vm451, %v2036, 0
      %v2070 = vsel %vm451, %v2037, 0
      %v2073 = vsel %vm521, %v2047, 0
      %2075 = vmatprep.subr.mxu0 0.0
      %2076 = vmatpush1.msra.mxu0 %v2073
      %2077 = vmatprep.subr.mxu0 0.0
      %2078 = vmatpush1.msra.mxu0 0.0
      %2079 = vmatprep.subr.mxu0 0.0
      %2080 = vmatpush1.msra.mxu0 0.0
      %2081 = vmatprep.subr.mxu0 0.0
      %2082 = vmatpush1.msra.mxu0 0.0
      %2083 = vmatprep.subr.mxu0 0.0
      %2084 = vmatpush1.msra.mxu0 0.0
      %2085 = vmatprep.subr.mxu0 0.0
      %2086 = vmatpush1.msra.mxu0 0.0
      %2087 = vmatprep.subr.mxu0 0.0
      %2088 = vmatpush1.msra.mxu0 0.0
      %2089 = vmatprep.subr.mxu0 0.0
      %2090 = vmatpush1.msra.mxu0 0.0
      %2091 = vmatprep.subr.mxu0 0.0
      %2092 = vmatpush1.msra.mxu0 0.0
      %2093 = vmatprep.subr.mxu0 0.0
      %2094 = vmatpush1.msra.mxu0 0.0
      %2095 = vmatprep.subr.mxu0 0.0
      %2096 = vmatpush1.msra.mxu0 0.0
      %2097 = vmatprep.subr.mxu0 0.0
      %2098 = vmatpush1.msra.mxu0 0.0
      %2099 = vmatprep.subr.mxu0 0.0
      %2100 = vmatpush1.msra.mxu0 0.0
      %2101 = vmatprep.subr.mxu0 0.0
      %2102 = vmatpush1.msra.mxu0 0.0
      %2103 = vmatprep.subr.mxu0 0.0
      %2104 = vmatpush1.msra.mxu0 0.0
      %2105 = vmatprep.subr.mxu0 0.0
      %2106 = vmatpush1.msra.mxu0 0.0
      %2107 = vmatprep.subr.mxu0 0.0
      %2108 = vmatpush1.msra.mxu0 0.0
      %2109 = vmatprep.subr.mxu0 0.0
      %2110 = vmatpush1.msra.mxu0 0.0
      %2111 = vmatprep.subr.mxu0 0.0
      %2112 = vmatpush1.msra.mxu0 0.0
      %2113 = vmatprep.subr.mxu0 0.0
      %2114 = vmatpush1.msra.mxu0 0.0
      %2115 = vmatprep.subr.mxu0 0.0
      %2116 = vmatpush1.msra.mxu0 0.0
      %2117 = vmatprep.subr.mxu0 0.0
      %2118 = vmatpush1.msra.mxu0 0.0
      %2119 = vmatprep.subr.mxu0 0.0
      %2120 = vmatpush1.msra.mxu0 0.0
      %2121 = vmatprep.subr.mxu0 0.0
      %2122 = vmatpush1.msra.mxu0 0.0
      %2123 = vmatprep.subr.mxu0 0.0
      %2124 = vmatpush1.msra.mxu0 0.0
      %2125 = vmatprep.subr.mxu0 0.0
      %2126 = vmatpush1.msra.mxu0 0.0
      %2127 = vmatprep.subr.mxu0 0.0
      %2128 = vmatpush1.msra.mxu0 0.0
      %2129 = vmatprep.subr.mxu0 0.0
      %2130 = vmatpush1.msra.mxu0 0.0
      %2131 = vmatprep.subr.mxu0 0.0
      %2132 = vmatpush1.msra.mxu0 0.0
      %2133 = vmatprep.subr.mxu0 0.0
      %2134 = vmatpush1.msra.mxu0 0.0
      %2135 = vmatprep.subr.mxu0 0.0
      %2136 = vmatpush1.msra.mxu0 0.0
      %2137 = vmatprep.subr.mxu0 0.0
      %2138 = vmatpush1.msra.mxu0 0.0
      %2139 = vmatprep.mubr.f32.mxu0 0.0
      %2140 = vmatmul.mubr.f32.gmra.mrb[0].mxu0 %v2049
      %v2141 = vpop.f32.mrb[0].mxu0
      %v2142 = vadd.f32 0.0, %v2141
      %v2143 = vpop.f32.mrb[0].mxu0
      %2144 = vmatprep.mubr.f32.mxu0 0.0
      %2145 = vmatmul.mubr.f32.gmra.mrb[0].mxu0 %v2052
      %v2146 = vpop.f32.mrb[0].mxu0
      %v2147 = vadd.f32 0.0, %v2146
      %v2148 = vpop.f32.mrb[0].mxu0
      %2149 = vmatprep.mubr.f32.mxu0 0.0
      %2150 = vmatmul.mubr.f32.gmra.mrb[0].mxu0 %v2055
      %v2151 = vpop.f32.mrb[0].mxu0
      %v2152 = vadd.f32 0.0, %v2151
      %v2153 = vpop.f32.mrb[0].mxu0
      %2154 = vmatprep.mubr.f32.mxu0 0.0
      %2155 = vmatmul.mubr.f32.gmra.mrb[0].mxu0 %v2058
      %v2156 = vpop.f32.mrb[0].mxu0
      %v2157 = vadd.f32 0.0, %v2156
      %v2158 = vpop.f32.mrb[0].mxu0
      %2159 = vmatprep.mubr.f32.mxu0 0.0
      %2160 = vmatmul.mubr.f32.gmra.mrb[0].mxu0 %v2061
      %v2161 = vpop.f32.mrb[0].mxu0
      %v2162 = vadd.f32 0.0, %v2161
      %v2163 = vpop.f32.mrb[0].mxu0
      %2164 = vmatprep.mubr.f32.mxu0 0.0
      %2165 = vmatmul.mubr.f32.gmra.mrb[0].mxu0 %v2064
      %v2166 = vpop.f32.mrb[0].mxu0
      %v2167 = vadd.f32 0.0, %v2166
      %v2168 = vpop.f32.mrb[0].mxu0
      %2169 = vmatprep.mubr.f32.mxu0 0.0
      %2170 = vmatmul.mubr.f32.gmra.mrb[0].mxu0 %v2067
      %v2171 = vpop.f32.mrb[0].mxu0
      %v2172 = vadd.f32 0.0, %v2171
      %v2173 = vpop.f32.mrb[0].mxu0
      %2174 = vmatprep.mubr.f32.mxu0 0.0
      %2175 = vmatmul.mubr.f32.gmra.mrb[0].mxu0 %v2070
      %v2176 = vpop.f32.mrb[0].mxu0
      %v2177 = vadd.f32 0.0, %v2176
      %v2178 = vpop.f32.mrb[0].mxu0
      %2179 = vdwg.mxu0
      %v2180 = vadd.f32 %v2038, %v2142
      %v2181 = vadd.f32 %v2039, %v2147
      %v2182 = vadd.f32 %v2040, %v2152
      %v2183 = vadd.f32 %v2041, %v2157
      %v2184 = vadd.f32 %v2042, %v2162
      %v2185 = vadd.f32 %v2043, %v2167
      %v2186 = vadd.f32 %v2044, %v2172
      %v2187 = vadd.f32 %v2045, %v2177
      %2188 = vst.msk [vmem:[#allocation2] sm:$0xff] %vm451, %v2180
      %2189 = vst.msk [vmem:[#allocation2 + $0x8] sm:$0xff] %vm451, %v2181
      %2190 = vst.msk [vmem:[#allocation2 + $0x10] sm:$0xff] %vm451, %v2182
      %2191 = vst.msk [vmem:[#allocation2 + $0x18] sm:$0xff] %vm451, %v2183
      %2192 = vst.msk [vmem:[#allocation2 + $0x20] sm:$0xff] %vm451, %v2184
      %2193 = vst.msk [vmem:[#allocation2 + $0x28] sm:$0xff] %vm451, %v2185
      %2194 = vst.msk [vmem:[#allocation2 + $0x30] sm:$0xff] %vm451, %v2186
      %2195 = vst.msk [vmem:[#allocation2 + $0x38] sm:$0xff] %vm451, %v2187
      %v2196 = vld [vmem:[%s646] sm:$0xff]
      %v2197 = vld [vmem:[%s646 + $0x8] sm:$0xff]
      %v2198 = vld [vmem:[%s646 + $0x10] sm:$0xff]
      %v2199 = vld [vmem:[%s646 + $0x18] sm:$0xff]
      %v2200 = vld [vmem:[%s646 + $0x20] sm:$0xff]
      %v2201 = vld [vmem:[%s646 + $0x28] sm:$0xff]
      %v2202 = vld [vmem:[%s646 + $0x30] sm:$0xff]
      %v2203 = vld [vmem:[%s646 + $0x38] sm:$0xff]
      %v2204 = vld [vmem:[#allocation2] sm:$0xff]
      %v2205 = vld [vmem:[#allocation2 + $0x8] sm:$0xff]
      %v2206 = vld [vmem:[#allocation2 + $0x10] sm:$0xff]
      %v2207 = vld [vmem:[#allocation2 + $0x18] sm:$0xff]
      %v2208 = vld [vmem:[#allocation2 + $0x20] sm:$0xff]
      %v2209 = vld [vmem:[#allocation2 + $0x28] sm:$0xff]
      %v2210 = vld [vmem:[#allocation2 + $0x30] sm:$0xff]
      %v2211 = vld [vmem:[#allocation2 + $0x38] sm:$0xff]
      %s2212 = scalar_lea.vmem %s3, 64
      %v2213 = vld [vmem:[%s2212] sm:$0xf]
      %v2215 = vsel %vm451, %v2196, 0
      %v2218 = vsel %vm451, %v2197, 0
      %v2221 = vsel %vm451, %v2198, 0
      %v2224 = vsel %vm451, %v2199, 0
      %v2227 = vsel %vm451, %v2200, 0
      %v2230 = vsel %vm451, %v2201, 0
      %v2233 = vsel %vm451, %v2202, 0
      %v2236 = vsel %vm451, %v2203, 0
      %v2239 = vsel %vm521, %v2213, 0
      %2241 = vmatprep.subr.mxu0 0.0
      %2242 = vmatpush1.msra.mxu0 %v2239
      %2243 = vmatprep.subr.mxu0 0.0
      %2244 = vmatpush1.msra.mxu0 0.0
      %2245 = vmatprep.subr.mxu0 0.0
      %2246 = vmatpush1.msra.mxu0 0.0
      %2247 = vmatprep.subr.mxu0 0.0
      %2248 = vmatpush1.msra.mxu0 0.0
      %2249 = vmatprep.subr.mxu0 0.0
      %2250 = vmatpush1.msra.mxu0 0.0
      %2251 = vmatprep.subr.mxu0 0.0
      %2252 = vmatpush1.msra.mxu0 0.0
      %2253 = vmatprep.subr.mxu0 0.0
      %2254 = vmatpush1.msra.mxu0 0.0
      %2255 = vmatprep.subr.mxu0 0.0
      %2256 = vmatpush1.msra.mxu0 0.0
      %2257 = vmatprep.subr.mxu0 0.0
      %2258 = vmatpush1.msra.mxu0 0.0
      %2259 = vmatprep.subr.mxu0 0.0
      %2260 = vmatpush1.msra.mxu0 0.0
      %2261 = vmatprep.subr.mxu0 0.0
      %2262 = vmatpush1.msra.mxu0 0.0
      %2263 = vmatprep.subr.mxu0 0.0
      %2264 = vmatpush1.msra.mxu0 0.0
      %2265 = vmatprep.subr.mxu0 0.0
      %2266 = vmatpush1.msra.mxu0 0.0
      %2267 = vmatprep.subr.mxu0 0.0
      %2268 = vmatpush1.msra.mxu0 0.0
      %2269 = vmatprep.subr.mxu0 0.0
      %2270 = vmatpush1.msra.mxu0 0.0
      %2271 = vmatprep.subr.mxu0 0.0
      %2272 = vmatpush1.msra.mxu0 0.0
      %2273 = vmatprep.subr.mxu0 0.0
      %2274 = vmatpush1.msra.mxu0 0.0
      %2275 = vmatprep.subr.mxu0 0.0
      %2276 = vmatpush1.msra.mxu0 0.0
      %2277 = vmatprep.subr.mxu0 0.0
      %2278 = vmatpush1.msra.mxu0 0.0
      %2279 = vmatprep.subr.mxu0 0.0
      %2280 = vmatpush1.msra.mxu0 0.0
      %2281 = vmatprep.subr.mxu0 0.0
      %2282 = vmatpush1.msra.mxu0 0.0
      %2283 = vmatprep.subr.mxu0 0.0
      %2284 = vmatpush1.msra.mxu0 0.0
      %2285 = vmatprep.subr.mxu0 0.0
      %2286 = vmatpush1.msra.mxu0 0.0
      %2287 = vmatprep.subr.mxu0 0.0
      %2288 = vmatpush1.msra.mxu0 0.0
      %2289 = vmatprep.subr.mxu0 0.0
      %2290 = vmatpush1.msra.mxu0 0.0
      %2291 = vmatprep.subr.mxu0 0.0
      %2292 = vmatpush1.msra.mxu0 0.0
      %2293 = vmatprep.subr.mxu0 0.0
      %2294 = vmatpush1.msra.mxu0 0.0
      %2295 = vmatprep.subr.mxu0 0.0
      %2296 = vmatpush1.msra.mxu0 0.0
      %2297 = vmatprep.subr.mxu0 0.0
      %2298 = vmatpush1.msra.mxu0 0.0
      %2299 = vmatprep.subr.mxu0 0.0
      %2300 = vmatpush1.msra.mxu0 0.0
      %2301 = vmatprep.subr.mxu0 0.0
      %2302 = vmatpush1.msra.mxu0 0.0
      %2303 = vmatprep.subr.mxu0 0.0
      %2304 = vmatpush1.msra.mxu0 0.0
      %2305 = vmatprep.mubr.f32.mxu0 0.0
      %2306 = vmatmul.mubr.f32.gmra.mrb[0].mxu0 %v2215
      %v2307 = vpop.f32.mrb[0].mxu0
      %v2308 = vadd.f32 0.0, %v2307
      %v2309 = vpop.f32.mrb[0].mxu0
      %2310 = vmatprep.mubr.f32.mxu0 0.0
      %2311 = vmatmul.mubr.f32.gmra.mrb[0].mxu0 %v2218
      %v2312 = vpop.f32.mrb[0].mxu0
      %v2313 = vadd.f32 0.0, %v2312
      %v2314 = vpop.f32.mrb[0].mxu0
      %2315 = vmatprep.mubr.f32.mxu0 0.0
      %2316 = vmatmul.mubr.f32.gmra.mrb[0].mxu0 %v2221
      %v2317 = vpop.f32.mrb[0].mxu0
      %v2318 = vadd.f32 0.0, %v2317
      %v2319 = vpop.f32.mrb[0].mxu0
      %2320 = vmatprep.mubr.f32.mxu0 0.0
      %2321 = vmatmul.mubr.f32.gmra.mrb[0].mxu0 %v2224
      %v2322 = vpop.f32.mrb[0].mxu0
      %v2323 = vadd.f32 0.0, %v2322
      %v2324 = vpop.f32.mrb[0].mxu0
      %2325 = vmatprep.mubr.f32.mxu0 0.0
      %2326 = vmatmul.mubr.f32.gmra.mrb[0].mxu0 %v2227
      %v2327 = vpop.f32.mrb[0].mxu0
      %v2328 = vadd.f32 0.0, %v2327
      %v2329 = vpop.f32.mrb[0].mxu0
      %2330 = vmatprep.mubr.f32.mxu0 0.0
      %2331 = vmatmul.mubr.f32.gmra.mrb[0].mxu0 %v2230
      %v2332 = vpop.f32.mrb[0].mxu0
      %v2333 = vadd.f32 0.0, %v2332
      %v2334 = vpop.f32.mrb[0].mxu0
      %2335 = vmatprep.mubr.f32.mxu0 0.0
      %2336 = vmatmul.mubr.f32.gmra.mrb[0].mxu0 %v2233
      %v2337 = vpop.f32.mrb[0].mxu0
      %v2338 = vadd.f32 0.0, %v2337
      %v2339 = vpop.f32.mrb[0].mxu0
      %2340 = vmatprep.mubr.f32.mxu0 0.0
      %2341 = vmatmul.mubr.f32.gmra.mrb[0].mxu0 %v2236
      %v2342 = vpop.f32.mrb[0].mxu0
      %v2343 = vadd.f32 0.0, %v2342
      %v2344 = vpop.f32.mrb[0].mxu0
      %2345 = vdwg.mxu0
      %v2346 = vadd.f32 %v2204, %v2308
      %v2347 = vadd.f32 %v2205, %v2313
      %v2348 = vadd.f32 %v2206, %v2318
      %v2349 = vadd.f32 %v2207, %v2323
      %v2350 = vadd.f32 %v2208, %v2328
      %v2351 = vadd.f32 %v2209, %v2333
      %v2352 = vadd.f32 %v2210, %v2338
      %v2353 = vadd.f32 %v2211, %v2343
      %2354 = vst.msk [vmem:[#allocation2] sm:$0xff] %vm451, %v2346
      %2355 = vst.msk [vmem:[#allocation2 + $0x8] sm:$0xff] %vm451, %v2347
      %2356 = vst.msk [vmem:[#allocation2 + $0x10] sm:$0xff] %vm451, %v2348
      %2357 = vst.msk [vmem:[#allocation2 + $0x18] sm:$0xff] %vm451, %v2349
      %2358 = vst.msk [vmem:[#allocation2 + $0x20] sm:$0xff] %vm451, %v2350
      %2359 = vst.msk [vmem:[#allocation2 + $0x28] sm:$0xff] %vm451, %v2351
      %2360 = vst.msk [vmem:[#allocation2 + $0x30] sm:$0xff] %vm451, %v2352
      %2361 = vst.msk [vmem:[#allocation2 + $0x38] sm:$0xff] %vm451, %v2353
      %v2362 = vld [vmem:[%s813] sm:$0xff]
      %v2363 = vld [vmem:[%s813 + $0x8] sm:$0xff]
      %v2364 = vld [vmem:[%s813 + $0x10] sm:$0xff]
      %v2365 = vld [vmem:[%s813 + $0x18] sm:$0xff]
      %v2366 = vld [vmem:[%s813 + $0x20] sm:$0xff]
      %v2367 = vld [vmem:[%s813 + $0x28] sm:$0xff]
      %v2368 = vld [vmem:[%s813 + $0x30] sm:$0xff]
      %v2369 = vld [vmem:[%s813 + $0x38] sm:$0xff]
      %v2370 = vld [vmem:[#allocation2] sm:$0xff]
      %v2371 = vld [vmem:[#allocation2 + $0x8] sm:$0xff]
      %v2372 = vld [vmem:[#allocation2 + $0x10] sm:$0xff]
      %v2373 = vld [vmem:[#allocation2 + $0x18] sm:$0xff]
      %v2374 = vld [vmem:[#allocation2 + $0x20] sm:$0xff]
      %v2375 = vld [vmem:[#allocation2 + $0x28] sm:$0xff]
      %v2376 = vld [vmem:[#allocation2 + $0x30] sm:$0xff]
      %v2377 = vld [vmem:[#allocation2 + $0x38] sm:$0xff]
      %s2378 = scalar_lea.vmem %s3, 80
      %v2379 = vld [vmem:[%s2378] sm:$0xf]
      %v2381 = vsel %vm451, %v2362, 0
      %v2384 = vsel %vm451, %v2363, 0
      %v2387 = vsel %vm451, %v2364, 0
      %v2390 = vsel %vm451, %v2365, 0
      %v2393 = vsel %vm451, %v2366, 0
      %v2396 = vsel %vm451, %v2367, 0
      %v2399 = vsel %vm451, %v2368, 0
      %v2402 = vsel %vm451, %v2369, 0
      %v2405 = vsel %vm521, %v2379, 0
      %2407 = vmatprep.subr.mxu0 0.0
      %2408 = vmatpush1.msra.mxu0 %v2405
      %2409 = vmatprep.subr.mxu0 0.0
      %2410 = vmatpush1.msra.mxu0 0.0
      %2411 = vmatprep.subr.mxu0 0.0
      %2412 = vmatpush1.msra.mxu0 0.0
      %2413 = vmatprep.subr.mxu0 0.0
      %2414 = vmatpush1.msra.mxu0 0.0
      %2415 = vmatprep.subr.mxu0 0.0
      %2416 = vmatpush1.msra.mxu0 0.0
      %2417 = vmatprep.subr.mxu0 0.0
      %2418 = vmatpush1.msra.mxu0 0.0
      %2419 = vmatprep.subr.mxu0 0.0
      %2420 = vmatpush1.msra.mxu0 0.0
      %2421 = vmatprep.subr.mxu0 0.0
      %2422 = vmatpush1.msra.mxu0 0.0
      %2423 = vmatprep.subr.mxu0 0.0
      %2424 = vmatpush1.msra.mxu0 0.0
      %2425 = vmatprep.subr.mxu0 0.0
      %2426 = vmatpush1.msra.mxu0 0.0
      %2427 = vmatprep.subr.mxu0 0.0
      %2428 = vmatpush1.msra.mxu0 0.0
      %2429 = vmatprep.subr.mxu0 0.0
      %2430 = vmatpush1.msra.mxu0 0.0
      %2431 = vmatprep.subr.mxu0 0.0
      %2432 = vmatpush1.msra.mxu0 0.0
      %2433 = vmatprep.subr.mxu0 0.0
      %2434 = vmatpush1.msra.mxu0 0.0
      %2435 = vmatprep.subr.mxu0 0.0
      %2436 = vmatpush1.msra.mxu0 0.0
      %2437 = vmatprep.subr.mxu0 0.0
      %2438 = vmatpush1.msra.mxu0 0.0
      %2439 = vmatprep.subr.mxu0 0.0
      %2440 = vmatpush1.msra.mxu0 0.0
      %2441 = vmatprep.subr.mxu0 0.0
      %2442 = vmatpush1.msra.mxu0 0.0
      %2443 = vmatprep.subr.mxu0 0.0
      %2444 = vmatpush1.msra.mxu0 0.0
      %2445 = vmatprep.subr.mxu0 0.0
      %2446 = vmatpush1.msra.mxu0 0.0
      %2447 = vmatprep.subr.mxu0 0.0
      %2448 = vmatpush1.msra.mxu0 0.0
      %2449 = vmatprep.subr.mxu0 0.0
      %2450 = vmatpush1.msra.mxu0 0.0
      %2451 = vmatprep.subr.mxu0 0.0
      %2452 = vmatpush1.msra.mxu0 0.0
      %2453 = vmatprep.subr.mxu0 0.0
      %2454 = vmatpush1.msra.mxu0 0.0
      %2455 = vmatprep.subr.mxu0 0.0
      %2456 = vmatpush1.msra.mxu0 0.0
      %2457 = vmatprep.subr.mxu0 0.0
      %2458 = vmatpush1.msra.mxu0 0.0
      %2459 = vmatprep.subr.mxu0 0.0
      %2460 = vmatpush1.msra.mxu0 0.0
      %2461 = vmatprep.subr.mxu0 0.0
      %2462 = vmatpush1.msra.mxu0 0.0
      %2463 = vmatprep.subr.mxu0 0.0
      %2464 = vmatpush1.msra.mxu0 0.0
      %2465 = vmatprep.subr.mxu0 0.0
      %2466 = vmatpush1.msra.mxu0 0.0
      %2467 = vmatprep.subr.mxu0 0.0
      %2468 = vmatpush1.msra.mxu0 0.0
      %2469 = vmatprep.subr.mxu0 0.0
      %2470 = vmatpush1.msra.mxu0 0.0
      %2471 = vmatprep.mubr.f32.mxu0 0.0
      %2472 = vmatmul.mubr.f32.gmra.mrb[0].mxu0 %v2381
      %v2473 = vpop.f32.mrb[0].mxu0
      %v2474 = vadd.f32 0.0, %v2473
      %v2475 = vpop.f32.mrb[0].mxu0
      %2476 = vmatprep.mubr.f32.mxu0 0.0
      %2477 = vmatmul.mubr.f32.gmra.mrb[0].mxu0 %v2384
      %v2478 = vpop.f32.mrb[0].mxu0
      %v2479 = vadd.f32 0.0, %v2478
      %v2480 = vpop.f32.mrb[0].mxu0
      %2481 = vmatprep.mubr.f32.mxu0 0.0
      %2482 = vmatmul.mubr.f32.gmra.mrb[0].mxu0 %v2387
      %v2483 = vpop.f32.mrb[0].mxu0
      %v2484 = vadd.f32 0.0, %v2483
      %v2485 = vpop.f32.mrb[0].mxu0
      %2486 = vmatprep.mubr.f32.mxu0 0.0
      %2487 = vmatmul.mubr.f32.gmra.mrb[0].mxu0 %v2390
      %v2488 = vpop.f32.mrb[0].mxu0
      %v2489 = vadd.f32 0.0, %v2488
      %v2490 = vpop.f32.mrb[0].mxu0
      %2491 = vmatprep.mubr.f32.mxu0 0.0
      %2492 = vmatmul.mubr.f32.gmra.mrb[0].mxu0 %v2393
      %v2493 = vpop.f32.mrb[0].mxu0
      %v2494 = vadd.f32 0.0, %v2493
      %v2495 = vpop.f32.mrb[0].mxu0
      %2496 = vmatprep.mubr.f32.mxu0 0.0
      %2497 = vmatmul.mubr.f32.gmra.mrb[0].mxu0 %v2396
      %v2498 = vpop.f32.mrb[0].mxu0
      %v2499 = vadd.f32 0.0, %v2498
      %v2500 = vpop.f32.mrb[0].mxu0
      %2501 = vmatprep.mubr.f32.mxu0 0.0
      %2502 = vmatmul.mubr.f32.gmra.mrb[0].mxu0 %v2399
      %v2503 = vpop.f32.mrb[0].mxu0
      %v2504 = vadd.f32 0.0, %v2503
      %v2505 = vpop.f32.mrb[0].mxu0
      %2506 = vmatprep.mubr.f32.mxu0 0.0
      %2507 = vmatmul.mubr.f32.gmra.mrb[0].mxu0 %v2402
      %v2508 = vpop.f32.mrb[0].mxu0
      %v2509 = vadd.f32 0.0, %v2508
      %v2510 = vpop.f32.mrb[0].mxu0
      %2511 = vdwg.mxu0
      %v2512 = vadd.f32 %v2370, %v2474
      %v2513 = vadd.f32 %v2371, %v2479
      %v2514 = vadd.f32 %v2372, %v2484
      %v2515 = vadd.f32 %v2373, %v2489
      %v2516 = vadd.f32 %v2374, %v2494
      %v2517 = vadd.f32 %v2375, %v2499
      %v2518 = vadd.f32 %v2376, %v2504
      %v2519 = vadd.f32 %v2377, %v2509
      %2520 = vst.msk [vmem:[#allocation2] sm:$0xff] %vm451, %v2512
      %2521 = vst.msk [vmem:[#allocation2 + $0x8] sm:$0xff] %vm451, %v2513
      %2522 = vst.msk [vmem:[#allocation2 + $0x10] sm:$0xff] %vm451, %v2514
      %2523 = vst.msk [vmem:[#allocation2 + $0x18] sm:$0xff] %vm451, %v2515
      %2524 = vst.msk [vmem:[#allocation2 + $0x20] sm:$0xff] %vm451, %v2516
      %2525 = vst.msk [vmem:[#allocation2 + $0x28] sm:$0xff] %vm451, %v2517
      %2526 = vst.msk [vmem:[#allocation2 + $0x30] sm:$0xff] %vm451, %v2518
      %2527 = vst.msk [vmem:[#allocation2 + $0x38] sm:$0xff] %vm451, %v2519
      %v2528 = vld [vmem:[%s394 + $0x1] sm:$0xff]
      %v2529 = vld [vmem:[%s394 + $0x11] sm:$0xff]
      %v2530 = vld [vmem:[%s394 + $0x21] sm:$0xff]
      %v2531 = vld [vmem:[%s394 + $0x31] sm:$0xff]
      %v2532 = vld [vmem:[%s394 + $0x41] sm:$0xff]
      %v2533 = vld [vmem:[%s394 + $0x51] sm:$0xff]
      %v2534 = vld [vmem:[%s394 + $0x61] sm:$0xff]
      %v2535 = vld [vmem:[%s394 + $0x71] sm:$0xff]
      %v2536 = vld [vmem:[%s394 + $0x81] sm:$0xff]
      %v2537 = vld [vmem:[%s394 + $0x91] sm:$0xff]
      %2538 = vst.msk [vmem:[#allocation3] sm:$0xff] %vm451, %v2528
      %2539 = vst.msk [vmem:[#allocation3 + $0x8] sm:$0xff] %vm451, %v2529
      %2540 = vst.msk [vmem:[#allocation3 + $0x10] sm:$0xff] %vm451, %v2530
      %2541 = vst.msk [vmem:[#allocation3 + $0x18] sm:$0xff] %vm451, %v2531
      %2542 = vst.msk [vmem:[#allocation3 + $0x20] sm:$0xff] %vm451, %v2532
      %2543 = vst.msk [vmem:[#allocation3 + $0x28] sm:$0xff] %vm451, %v2533
      %2544 = vst.msk [vmem:[#allocation3 + $0x30] sm:$0xff] %vm451, %v2534
      %2545 = vst.msk [vmem:[#allocation3 + $0x38] sm:$0xff] %vm451, %v2535
      %2546 = vst.msk [vmem:[#allocation3 + $0x40] sm:$0xff] %vm451, %v2536
      %2547 = vst.msk [vmem:[#allocation3 + $0x48] sm:$0xff] %vm451, %v2537
      %v2548 = vld [vmem:[#allocation3] sm:$0xff]
      %v2549 = vld [vmem:[#allocation3 + $0x8] sm:$0xff]
      %v2550 = vld [vmem:[#allocation3 + $0x10] sm:$0xff]
      %v2551 = vld [vmem:[#allocation3 + $0x18] sm:$0xff]
      %v2552 = vld [vmem:[#allocation3 + $0x20] sm:$0xff]
      %v2553 = vld [vmem:[#allocation3 + $0x28] sm:$0xff]
      %v2554 = vld [vmem:[#allocation3 + $0x30] sm:$0xff]
      %v2555 = vld [vmem:[#allocation3 + $0x38] sm:$0xff]
      %v2556 = vld [vmem:[#allocation2] sm:$0xff]
      %v2557 = vld [vmem:[#allocation2 + $0x8] sm:$0xff]
      %v2558 = vld [vmem:[#allocation2 + $0x10] sm:$0xff]
      %v2559 = vld [vmem:[#allocation2 + $0x18] sm:$0xff]
      %v2560 = vld [vmem:[#allocation2 + $0x20] sm:$0xff]
      %v2561 = vld [vmem:[#allocation2 + $0x28] sm:$0xff]
      %v2562 = vld [vmem:[#allocation2 + $0x30] sm:$0xff]
      %v2563 = vld [vmem:[#allocation2 + $0x38] sm:$0xff]
      %v2564 = vld [vmem:[%s2046 + $0x4] sm:$0xf]
      %v2566 = vsel %vm451, %v2548, 0
      %v2569 = vsel %vm451, %v2549, 0
      %v2572 = vsel %vm451, %v2550, 0
      %v2575 = vsel %vm451, %v2551, 0
      %v2578 = vsel %vm451, %v2552, 0
      %v2581 = vsel %vm451, %v2553, 0
      %v2584 = vsel %vm451, %v2554, 0
      %v2587 = vsel %vm451, %v2555, 0
      %v2590 = vsel %vm521, %v2564, 0
      %2592 = vmatprep.subr.mxu0 0.0
      %2593 = vmatpush1.msra.mxu0 %v2590
      %2594 = vmatprep.subr.mxu0 0.0
      %2595 = vmatpush1.msra.mxu0 0.0
      %2596 = vmatprep.subr.mxu0 0.0
      %2597 = vmatpush1.msra.mxu0 0.0
      %2598 = vmatprep.subr.mxu0 0.0
      %2599 = vmatpush1.msra.mxu0 0.0
      %2600 = vmatprep.subr.mxu0 0.0
      %2601 = vmatpush1.msra.mxu0 0.0
      %2602 = vmatprep.subr.mxu0 0.0
      %2603 = vmatpush1.msra.mxu0 0.0
      %2604 = vmatprep.subr.mxu0 0.0
      %2605 = vmatpush1.msra.mxu0 0.0
      %2606 = vmatprep.subr.mxu0 0.0
      %2607 = vmatpush1.msra.mxu0 0.0
      %2608 = vmatprep.subr.mxu0 0.0
      %2609 = vmatpush1.msra.mxu0 0.0
      %2610 = vmatprep.subr.mxu0 0.0
      %2611 = vmatpush1.msra.mxu0 0.0
      %2612 = vmatprep.subr.mxu0 0.0
      %2613 = vmatpush1.msra.mxu0 0.0
      %2614 = vmatprep.subr.mxu0 0.0
      %2615 = vmatpush1.msra.mxu0 0.0
      %2616 = vmatprep.subr.mxu0 0.0
      %2617 = vmatpush1.msra.mxu0 0.0
      %2618 = vmatprep.subr.mxu0 0.0
      %2619 = vmatpush1.msra.mxu0 0.0
      %2620 = vmatprep.subr.mxu0 0.0
      %2621 = vmatpush1.msra.mxu0 0.0
      %2622 = vmatprep.subr.mxu0 0.0
      %2623 = vmatpush1.msra.mxu0 0.0
      %2624 = vmatprep.subr.mxu0 0.0
      %2625 = vmatpush1.msra.mxu0 0.0
      %2626 = vmatprep.subr.mxu0 0.0
      %2627 = vmatpush1.msra.mxu0 0.0
      %2628 = vmatprep.subr.mxu0 0.0
      %2629 = vmatpush1.msra.mxu0 0.0
      %2630 = vmatprep.subr.mxu0 0.0
      %2631 = vmatpush1.msra.mxu0 0.0
      %2632 = vmatprep.subr.mxu0 0.0
      %2633 = vmatpush1.msra.mxu0 0.0
      %2634 = vmatprep.subr.mxu0 0.0
      %2635 = vmatpush1.msra.mxu0 0.0
      %2636 = vmatprep.subr.mxu0 0.0
      %2637 = vmatpush1.msra.mxu0 0.0
      %2638 = vmatprep.subr.mxu0 0.0
      %2639 = vmatpush1.msra.mxu0 0.0
      %2640 = vmatprep.subr.mxu0 0.0
      %2641 = vmatpush1.msra.mxu0 0.0
      %2642 = vmatprep.subr.mxu0 0.0
      %2643 = vmatpush1.msra.mxu0 0.0
      %2644 = vmatprep.subr.mxu0 0.0
      %2645 = vmatpush1.msra.mxu0 0.0
      %2646 = vmatprep.subr.mxu0 0.0
      %2647 = vmatpush1.msra.mxu0 0.0
      %2648 = vmatprep.subr.mxu0 0.0
      %2649 = vmatpush1.msra.mxu0 0.0
      %2650 = vmatprep.subr.mxu0 0.0
      %2651 = vmatpush1.msra.mxu0 0.0
      %2652 = vmatprep.subr.mxu0 0.0
      %2653 = vmatpush1.msra.mxu0 0.0
      %2654 = vmatprep.subr.mxu0 0.0
      %2655 = vmatpush1.msra.mxu0 0.0
      %2656 = vmatprep.mubr.f32.mxu0 0.0
      %2657 = vmatmul.mubr.f32.gmra.mrb[0].mxu0 %v2566
      %v2658 = vpop.f32.mrb[0].mxu0
      %v2659 = vadd.f32 0.0, %v2658
      %v2660 = vpop.f32.mrb[0].mxu0
      %2661 = vmatprep.mubr.f32.mxu0 0.0
      %2662 = vmatmul.mubr.f32.gmra.mrb[0].mxu0 %v2569
      %v2663 = vpop.f32.mrb[0].mxu0
      %v2664 = vadd.f32 0.0, %v2663
      %v2665 = vpop.f32.mrb[0].mxu0
      %2666 = vmatprep.mubr.f32.mxu0 0.0
      %2667 = vmatmul.mubr.f32.gmra.mrb[0].mxu0 %v2572
      %v2668 = vpop.f32.mrb[0].mxu0
      %v2669 = vadd.f32 0.0, %v2668
      %v2670 = vpop.f32.mrb[0].mxu0
      %2671 = vmatprep.mubr.f32.mxu0 0.0
      %2672 = vmatmul.mubr.f32.gmra.mrb[0].mxu0 %v2575
      %v2673 = vpop.f32.mrb[0].mxu0
      %v2674 = vadd.f32 0.0, %v2673
      %v2675 = vpop.f32.mrb[0].mxu0
      %2676 = vmatprep.mubr.f32.mxu0 0.0
      %2677 = vmatmul.mubr.f32.gmra.mrb[0].mxu0 %v2578
      %v2678 = vpop.f32.mrb[0].mxu0
      %v2679 = vadd.f32 0.0, %v2678
      %v2680 = vpop.f32.mrb[0].mxu0
      %2681 = vmatprep.mubr.f32.mxu0 0.0
      %2682 = vmatmul.mubr.f32.gmra.mrb[0].mxu0 %v2581
      %v2683 = vpop.f32.mrb[0].mxu0
      %v2684 = vadd.f32 0.0, %v2683
      %v2685 = vpop.f32.mrb[0].mxu0
      %2686 = vmatprep.mubr.f32.mxu0 0.0
      %2687 = vmatmul.mubr.f32.gmra.mrb[0].mxu0 %v2584
      %v2688 = vpop.f32.mrb[0].mxu0
      %v2689 = vadd.f32 0.0, %v2688
      %v2690 = vpop.f32.mrb[0].mxu0
      %2691 = vmatprep.mubr.f32.mxu0 0.0
      %2692 = vmatmul.mubr.f32.gmra.mrb[0].mxu0 %v2587
      %v2693 = vpop.f32.mrb[0].mxu0
      %v2694 = vadd.f32 0.0, %v2693
      %v2695 = vpop.f32.mrb[0].mxu0
      %2696 = vdwg.mxu0
      %v2697 = vadd.f32 %v2556, %v2659
      %v2698 = vadd.f32 %v2557, %v2664
      %v2699 = vadd.f32 %v2558, %v2669
      %v2700 = vadd.f32 %v2559, %v2674
      %v2701 = vadd.f32 %v2560, %v2679
      %v2702 = vadd.f32 %v2561, %v2684
      %v2703 = vadd.f32 %v2562, %v2689
      %v2704 = vadd.f32 %v2563, %v2694
      %2705 = vst.msk [vmem:[#allocation2] sm:$0xff] %vm451, %v2697
      %2706 = vst.msk [vmem:[#allocation2 + $0x8] sm:$0xff] %vm451, %v2698
      %2707 = vst.msk [vmem:[#allocation2 + $0x10] sm:$0xff] %vm451, %v2699
      %2708 = vst.msk [vmem:[#allocation2 + $0x18] sm:$0xff] %vm451, %v2700
      %2709 = vst.msk [vmem:[#allocation2 + $0x20] sm:$0xff] %vm451, %v2701
      %2710 = vst.msk [vmem:[#allocation2 + $0x28] sm:$0xff] %vm451, %v2702
      %2711 = vst.msk [vmem:[#allocation2 + $0x30] sm:$0xff] %vm451, %v2703
      %2712 = vst.msk [vmem:[#allocation2 + $0x38] sm:$0xff] %vm451, %v2704
      %v2713 = vld [vmem:[%s646] sm:$0xff]
      %v2714 = vld [vmem:[%s646 + $0x8] sm:$0xff]
      %v2715 = vld [vmem:[%s646 + $0x10] sm:$0xff]
      %v2716 = vld [vmem:[%s646 + $0x18] sm:$0xff]
      %v2717 = vld [vmem:[%s646 + $0x20] sm:$0xff]
      %v2718 = vld [vmem:[%s646 + $0x28] sm:$0xff]
      %v2719 = vld [vmem:[%s646 + $0x30] sm:$0xff]
      %v2720 = vld [vmem:[%s646 + $0x38] sm:$0xff]
      %v2721 = vld [vmem:[#allocation2] sm:$0xff]
      %v2722 = vld [vmem:[#allocation2 + $0x8] sm:$0xff]
      %v2723 = vld [vmem:[#allocation2 + $0x10] sm:$0xff]
      %v2724 = vld [vmem:[#allocation2 + $0x18] sm:$0xff]
      %v2725 = vld [vmem:[#allocation2 + $0x20] sm:$0xff]
      %v2726 = vld [vmem:[#allocation2 + $0x28] sm:$0xff]
      %v2727 = vld [vmem:[#allocation2 + $0x30] sm:$0xff]
      %v2728 = vld [vmem:[#allocation2 + $0x38] sm:$0xff]
      %v2729 = vld [vmem:[%s2212 + $0x4] sm:$0xf]
      %v2731 = vsel %vm451, %v2713, 0
      %v2734 = vsel %vm451, %v2714, 0
      %v2737 = vsel %vm451, %v2715, 0
      %v2740 = vsel %vm451, %v2716, 0
      %v2743 = vsel %vm451, %v2717, 0
      %v2746 = vsel %vm451, %v2718, 0
      %v2749 = vsel %vm451, %v2719, 0
      %v2752 = vsel %vm451, %v2720, 0
      %v2755 = vsel %vm521, %v2729, 0
      %2757 = vmatprep.subr.mxu0 0.0
      %2758 = vmatpush1.msra.mxu0 %v2755
      %2759 = vmatprep.subr.mxu0 0.0
      %2760 = vmatpush1.msra.mxu0 0.0
      %2761 = vmatprep.subr.mxu0 0.0
      %2762 = vmatpush1.msra.mxu0 0.0
      %2763 = vmatprep.subr.mxu0 0.0
      %2764 = vmatpush1.msra.mxu0 0.0
      %2765 = vmatprep.subr.mxu0 0.0
      %2766 = vmatpush1.msra.mxu0 0.0
      %2767 = vmatprep.subr.mxu0 0.0
      %2768 = vmatpush1.msra.mxu0 0.0
      %2769 = vmatprep.subr.mxu0 0.0
      %2770 = vmatpush1.msra.mxu0 0.0
      %2771 = vmatprep.subr.mxu0 0.0
      %2772 = vmatpush1.msra.mxu0 0.0
      %2773 = vmatprep.subr.mxu0 0.0
      %2774 = vmatpush1.msra.mxu0 0.0
      %2775 = vmatprep.subr.mxu0 0.0
      %2776 = vmatpush1.msra.mxu0 0.0
      %2777 = vmatprep.subr.mxu0 0.0
      %2778 = vmatpush1.msra.mxu0 0.0
      %2779 = vmatprep.subr.mxu0 0.0
      %2780 = vmatpush1.msra.mxu0 0.0
      %2781 = vmatprep.subr.mxu0 0.0
      %2782 = vmatpush1.msra.mxu0 0.0
      %2783 = vmatprep.subr.mxu0 0.0
      %2784 = vmatpush1.msra.mxu0 0.0
      %2785 = vmatprep.subr.mxu0 0.0
      %2786 = vmatpush1.msra.mxu0 0.0
      %2787 = vmatprep.subr.mxu0 0.0
      %2788 = vmatpush1.msra.mxu0 0.0
      %2789 = vmatprep.subr.mxu0 0.0
      %2790 = vmatpush1.msra.mxu0 0.0
      %2791 = vmatprep.subr.mxu0 0.0
      %2792 = vmatpush1.msra.mxu0 0.0
      %2793 = vmatprep.subr.mxu0 0.0
      %2794 = vmatpush1.msra.mxu0 0.0
      %2795 = vmatprep.subr.mxu0 0.0
      %2796 = vmatpush1.msra.mxu0 0.0
      %2797 = vmatprep.subr.mxu0 0.0
      %2798 = vmatpush1.msra.mxu0 0.0
      %2799 = vmatprep.subr.mxu0 0.0
      %2800 = vmatpush1.msra.mxu0 0.0
      %2801 = vmatprep.subr.mxu0 0.0
      %2802 = vmatpush1.msra.mxu0 0.0
      %2803 = vmatprep.subr.mxu0 0.0
      %2804 = vmatpush1.msra.mxu0 0.0
      %2805 = vmatprep.subr.mxu0 0.0
      %2806 = vmatpush1.msra.mxu0 0.0
      %2807 = vmatprep.subr.mxu0 0.0
      %2808 = vmatpush1.msra.mxu0 0.0
      %2809 = vmatprep.subr.mxu0 0.0
      %2810 = vmatpush1.msra.mxu0 0.0
      %2811 = vmatprep.subr.mxu0 0.0
      %2812 = vmatpush1.msra.mxu0 0.0
      %2813 = vmatprep.subr.mxu0 0.0
      %2814 = vmatpush1.msra.mxu0 0.0
      %2815 = vmatprep.subr.mxu0 0.0
      %2816 = vmatpush1.msra.mxu0 0.0
      %2817 = vmatprep.subr.mxu0 0.0
      %2818 = vmatpush1.msra.mxu0 0.0
      %2819 = vmatprep.subr.mxu0 0.0
      %2820 = vmatpush1.msra.mxu0 0.0
      %2821 = vmatprep.mubr.f32.mxu0 0.0
      %2822 = vmatmul.mubr.f32.gmra.mrb[0].mxu0 %v2731
      %v2823 = vpop.f32.mrb[0].mxu0
      %v2824 = vadd.f32 0.0, %v2823
      %v2825 = vpop.f32.mrb[0].mxu0
      %2826 = vmatprep.mubr.f32.mxu0 0.0
      %2827 = vmatmul.mubr.f32.gmra.mrb[0].mxu0 %v2734
      %v2828 = vpop.f32.mrb[0].mxu0
      %v2829 = vadd.f32 0.0, %v2828
      %v2830 = vpop.f32.mrb[0].mxu0
      %2831 = vmatprep.mubr.f32.mxu0 0.0
      %2832 = vmatmul.mubr.f32.gmra.mrb[0].mxu0 %v2737
      %v2833 = vpop.f32.mrb[0].mxu0
      %v2834 = vadd.f32 0.0, %v2833
      %v2835 = vpop.f32.mrb[0].mxu0
      %2836 = vmatprep.mubr.f32.mxu0 0.0
      %2837 = vmatmul.mubr.f32.gmra.mrb[0].mxu0 %v2740
      %v2838 = vpop.f32.mrb[0].mxu0
      %v2839 = vadd.f32 0.0, %v2838
      %v2840 = vpop.f32.mrb[0].mxu0
      %2841 = vmatprep.mubr.f32.mxu0 0.0
      %2842 = vmatmul.mubr.f32.gmra.mrb[0].mxu0 %v2743
      %v2843 = vpop.f32.mrb[0].mxu0
      %v2844 = vadd.f32 0.0, %v2843
      %v2845 = vpop.f32.mrb[0].mxu0
      %2846 = vmatprep.mubr.f32.mxu0 0.0
      %2847 = vmatmul.mubr.f32.gmra.mrb[0].mxu0 %v2746
      %v2848 = vpop.f32.mrb[0].mxu0
      %v2849 = vadd.f32 0.0, %v2848
      %v2850 = vpop.f32.mrb[0].mxu0
      %2851 = vmatprep.mubr.f32.mxu0 0.0
      %2852 = vmatmul.mubr.f32.gmra.mrb[0].mxu0 %v2749
      %v2853 = vpop.f32.mrb[0].mxu0
      %v2854 = vadd.f32 0.0, %v2853
      %v2855 = vpop.f32.mrb[0].mxu0
      %2856 = vmatprep.mubr.f32.mxu0 0.0
      %2857 = vmatmul.mubr.f32.gmra.mrb[0].mxu0 %v2752
      %v2858 = vpop.f32.mrb[0].mxu0
      %v2859 = vadd.f32 0.0, %v2858
      %v2860 = vpop.f32.mrb[0].mxu0
      %2861 = vdwg.mxu0
      %v2862 = vadd.f32 %v2721, %v2824
      %v2863 = vadd.f32 %v2722, %v2829
      %v2864 = vadd.f32 %v2723, %v2834
      %v2865 = vadd.f32 %v2724, %v2839
      %v2866 = vadd.f32 %v2725, %v2844
      %v2867 = vadd.f32 %v2726, %v2849
      %v2868 = vadd.f32 %v2727, %v2854
      %v2869 = vadd.f32 %v2728, %v2859
      %2870 = vst.msk [vmem:[#allocation2] sm:$0xff] %vm451, %v2862
      %2871 = vst.msk [vmem:[#allocation2 + $0x8] sm:$0xff] %vm451, %v2863
      %2872 = vst.msk [vmem:[#allocation2 + $0x10] sm:$0xff] %vm451, %v2864
      %2873 = vst.msk [vmem:[#allocation2 + $0x18] sm:$0xff] %vm451, %v2865
      %2874 = vst.msk [vmem:[#allocation2 + $0x20] sm:$0xff] %vm451, %v2866
      %2875 = vst.msk [vmem:[#allocation2 + $0x28] sm:$0xff] %vm451, %v2867
      %2876 = vst.msk [vmem:[#allocation2 + $0x30] sm:$0xff] %vm451, %v2868
      %2877 = vst.msk [vmem:[#allocation2 + $0x38] sm:$0xff] %vm451, %v2869
      %v2878 = vld [vmem:[%s813] sm:$0xff]
      %v2879 = vld [vmem:[%s813 + $0x8] sm:$0xff]
      %v2880 = vld [vmem:[%s813 + $0x10] sm:$0xff]
      %v2881 = vld [vmem:[%s813 + $0x18] sm:$0xff]
      %v2882 = vld [vmem:[%s813 + $0x20] sm:$0xff]
      %v2883 = vld [vmem:[%s813 + $0x28] sm:$0xff]
      %v2884 = vld [vmem:[%s813 + $0x30] sm:$0xff]
      %v2885 = vld [vmem:[%s813 + $0x38] sm:$0xff]
      %v2886 = vld [vmem:[#allocation2] sm:$0xff]
      %v2887 = vld [vmem:[#allocation2 + $0x8] sm:$0xff]
      %v2888 = vld [vmem:[#allocation2 + $0x10] sm:$0xff]
      %v2889 = vld [vmem:[#allocation2 + $0x18] sm:$0xff]
      %v2890 = vld [vmem:[#allocation2 + $0x20] sm:$0xff]
      %v2891 = vld [vmem:[#allocation2 + $0x28] sm:$0xff]
      %v2892 = vld [vmem:[#allocation2 + $0x30] sm:$0xff]
      %v2893 = vld [vmem:[#allocation2 + $0x38] sm:$0xff]
      %v2894 = vld [vmem:[%s2378 + $0x4] sm:$0xf]
      %v2896 = vsel %vm451, %v2878, 0
      %v2899 = vsel %vm451, %v2879, 0
      %v2902 = vsel %vm451, %v2880, 0
      %v2905 = vsel %vm451, %v2881, 0
      %v2908 = vsel %vm451, %v2882, 0
      %v2911 = vsel %vm451, %v2883, 0
      %v2914 = vsel %vm451, %v2884, 0
      %v2917 = vsel %vm451, %v2885, 0
      %v2920 = vsel %vm521, %v2894, 0
      %2922 = vmatprep.subr.mxu0 0.0
      %2923 = vmatpush1.msra.mxu0 %v2920
      %2924 = vmatprep.subr.mxu0 0.0
      %2925 = vmatpush1.msra.mxu0 0.0
      %2926 = vmatprep.subr.mxu0 0.0
      %2927 = vmatpush1.msra.mxu0 0.0
      %2928 = vmatprep.subr.mxu0 0.0
      %2929 = vmatpush1.msra.mxu0 0.0
      %2930 = vmatprep.subr.mxu0 0.0
      %2931 = vmatpush1.msra.mxu0 0.0
      %2932 = vmatprep.subr.mxu0 0.0
      %2933 = vmatpush1.msra.mxu0 0.0
      %2934 = vmatprep.subr.mxu0 0.0
      %2935 = vmatpush1.msra.mxu0 0.0
      %2936 = vmatprep.subr.mxu0 0.0
      %2937 = vmatpush1.msra.mxu0 0.0
      %2938 = vmatprep.subr.mxu0 0.0
      %2939 = vmatpush1.msra.mxu0 0.0
      %2940 = vmatprep.subr.mxu0 0.0
      %2941 = vmatpush1.msra.mxu0 0.0
      %2942 = vmatprep.subr.mxu0 0.0
      %2943 = vmatpush1.msra.mxu0 0.0
      %2944 = vmatprep.subr.mxu0 0.0
      %2945 = vmatpush1.msra.mxu0 0.0
      %2946 = vmatprep.subr.mxu0 0.0
      %2947 = vmatpush1.msra.mxu0 0.0
      %2948 = vmatprep.subr.mxu0 0.0
      %2949 = vmatpush1.msra.mxu0 0.0
      %2950 = vmatprep.subr.mxu0 0.0
      %2951 = vmatpush1.msra.mxu0 0.0
      %2952 = vmatprep.subr.mxu0 0.0
      %2953 = vmatpush1.msra.mxu0 0.0
      %2954 = vmatprep.subr.mxu0 0.0
      %2955 = vmatpush1.msra.mxu0 0.0
      %2956 = vmatprep.subr.mxu0 0.0
      %2957 = vmatpush1.msra.mxu0 0.0
      %2958 = vmatprep.subr.mxu0 0.0
      %2959 = vmatpush1.msra.mxu0 0.0
      %2960 = vmatprep.subr.mxu0 0.0
      %2961 = vmatpush1.msra.mxu0 0.0
      %2962 = vmatprep.subr.mxu0 0.0
      %2963 = vmatpush1.msra.mxu0 0.0
      %2964 = vmatprep.subr.mxu0 0.0
      %2965 = vmatpush1.msra.mxu0 0.0
      %2966 = vmatprep.subr.mxu0 0.0
      %2967 = vmatpush1.msra.mxu0 0.0
      %2968 = vmatprep.subr.mxu0 0.0
      %2969 = vmatpush1.msra.mxu0 0.0
      %2970 = vmatprep.subr.mxu0 0.0
      %2971 = vmatpush1.msra.mxu0 0.0
      %2972 = vmatprep.subr.mxu0 0.0
      %2973 = vmatpush1.msra.mxu0 0.0
      %2974 = vmatprep.subr.mxu0 0.0
      %2975 = vmatpush1.msra.mxu0 0.0
      %2976 = vmatprep.subr.mxu0 0.0
      %2977 = vmatpush1.msra.mxu0 0.0
      %2978 = vmatprep.subr.mxu0 0.0
      %2979 = vmatpush1.msra.mxu0 0.0
      %2980 = vmatprep.subr.mxu0 0.0
      %2981 = vmatpush1.msra.mxu0 0.0
      %2982 = vmatprep.subr.mxu0 0.0
      %2983 = vmatpush1.msra.mxu0 0.0
      %2984 = vmatprep.subr.mxu0 0.0
      %2985 = vmatpush1.msra.mxu0 0.0
      %2986 = vmatprep.mubr.f32.mxu0 0.0
      %2987 = vmatmul.mubr.f32.gmra.mrb[0].mxu0 %v2896
      %v2988 = vpop.f32.mrb[0].mxu0
      %v2989 = vadd.f32 0.0, %v2988
      %v2990 = vpop.f32.mrb[0].mxu0
      %2991 = vmatprep.mubr.f32.mxu0 0.0
      %2992 = vmatmul.mubr.f32.gmra.mrb[0].mxu0 %v2899
      %v2993 = vpop.f32.mrb[0].mxu0
      %v2994 = vadd.f32 0.0, %v2993
      %v2995 = vpop.f32.mrb[0].mxu0
      %2996 = vmatprep.mubr.f32.mxu0 0.0
      %2997 = vmatmul.mubr.f32.gmra.mrb[0].mxu0 %v2902
      %v2998 = vpop.f32.mrb[0].mxu0
      %v2999 = vadd.f32 0.0, %v2998
      %v3000 = vpop.f32.mrb[0].mxu0
      %3001 = vmatprep.mubr.f32.mxu0 0.0
      %3002 = vmatmul.mubr.f32.gmra.mrb[0].mxu0 %v2905
      %v3003 = vpop.f32.mrb[0].mxu0
      %v3004 = vadd.f32 0.0, %v3003
      %v3005 = vpop.f32.mrb[0].mxu0
      %3006 = vmatprep.mubr.f32.mxu0 0.0
      %3007 = vmatmul.mubr.f32.gmra.mrb[0].mxu0 %v2908
      %v3008 = vpop.f32.mrb[0].mxu0
      %v3009 = vadd.f32 0.0, %v3008
      %v3010 = vpop.f32.mrb[0].mxu0
      %3011 = vmatprep.mubr.f32.mxu0 0.0
      %3012 = vmatmul.mubr.f32.gmra.mrb[0].mxu0 %v2911
      %v3013 = vpop.f32.mrb[0].mxu0
      %v3014 = vadd.f32 0.0, %v3013
      %v3015 = vpop.f32.mrb[0].mxu0
      %3016 = vmatprep.mubr.f32.mxu0 0.0
      %3017 = vmatmul.mubr.f32.gmra.mrb[0].mxu0 %v2914
      %v3018 = vpop.f32.mrb[0].mxu0
      %v3019 = vadd.f32 0.0, %v3018
      %v3020 = vpop.f32.mrb[0].mxu0
      %3021 = vmatprep.mubr.f32.mxu0 0.0
      %3022 = vmatmul.mubr.f32.gmra.mrb[0].mxu0 %v2917
      %v3023 = vpop.f32.mrb[0].mxu0
      %v3024 = vadd.f32 0.0, %v3023
      %v3025 = vpop.f32.mrb[0].mxu0
      %3026 = vdwg.mxu0
      %v3027 = vadd.f32 %v2886, %v2989
      %v3028 = vadd.f32 %v2887, %v2994
      %v3029 = vadd.f32 %v2888, %v2999
      %v3030 = vadd.f32 %v2889, %v3004
      %v3031 = vadd.f32 %v2890, %v3009
      %v3032 = vadd.f32 %v2891, %v3014
      %v3033 = vadd.f32 %v2892, %v3019
      %v3034 = vadd.f32 %v2893, %v3024
      %3035 = vst.msk [vmem:[#allocation2] sm:$0xff] %vm451, %v3027
      %3036 = vst.msk [vmem:[#allocation2 + $0x8] sm:$0xff] %vm451, %v3028
      %3037 = vst.msk [vmem:[#allocation2 + $0x10] sm:$0xff] %vm451, %v3029
      %3038 = vst.msk [vmem:[#allocation2 + $0x18] sm:$0xff] %vm451, %v3030
      %3039 = vst.msk [vmem:[#allocation2 + $0x20] sm:$0xff] %vm451, %v3031
      %3040 = vst.msk [vmem:[#allocation2 + $0x28] sm:$0xff] %vm451, %v3032
      %3041 = vst.msk [vmem:[#allocation2 + $0x30] sm:$0xff] %vm451, %v3033
      %3042 = vst.msk [vmem:[#allocation2 + $0x38] sm:$0xff] %vm451, %v3034
      %v3043 = vld [vmem:[%s394 + $0x2] sm:$0xff]
      %v3044 = vld [vmem:[%s394 + $0x12] sm:$0xff]
      %v3045 = vld [vmem:[%s394 + $0x22] sm:$0xff]
      %v3046 = vld [vmem:[%s394 + $0x32] sm:$0xff]
      %v3047 = vld [vmem:[%s394 + $0x42] sm:$0xff]
      %v3048 = vld [vmem:[%s394 + $0x52] sm:$0xff]
      %v3049 = vld [vmem:[%s394 + $0x62] sm:$0xff]
      %v3050 = vld [vmem:[%s394 + $0x72] sm:$0xff]
      %v3051 = vld [vmem:[%s394 + $0x82] sm:$0xff]
      %v3052 = vld [vmem:[%s394 + $0x92] sm:$0xff]
      %3053 = vst.msk [vmem:[#allocation3] sm:$0xff] %vm451, %v3043
      %3054 = vst.msk [vmem:[#allocation3 + $0x8] sm:$0xff] %vm451, %v3044
      %3055 = vst.msk [vmem:[#allocation3 + $0x10] sm:$0xff] %vm451, %v3045
      %3056 = vst.msk [vmem:[#allocation3 + $0x18] sm:$0xff] %vm451, %v3046
      %3057 = vst.msk [vmem:[#allocation3 + $0x20] sm:$0xff] %vm451, %v3047
      %3058 = vst.msk [vmem:[#allocation3 + $0x28] sm:$0xff] %vm451, %v3048
      %3059 = vst.msk [vmem:[#allocation3 + $0x30] sm:$0xff] %vm451, %v3049
      %3060 = vst.msk [vmem:[#allocation3 + $0x38] sm:$0xff] %vm451, %v3050
      %3061 = vst.msk [vmem:[#allocation3 + $0x40] sm:$0xff] %vm451, %v3051
      %3062 = vst.msk [vmem:[#allocation3 + $0x48] sm:$0xff] %vm451, %v3052
      %v3063 = vld [vmem:[#allocation3] sm:$0xff]
      %v3064 = vld [vmem:[#allocation3 + $0x8] sm:$0xff]
      %v3065 = vld [vmem:[#allocation3 + $0x10] sm:$0xff]
      %v3066 = vld [vmem:[#allocation3 + $0x18] sm:$0xff]
      %v3067 = vld [vmem:[#allocation3 + $0x20] sm:$0xff]
      %v3068 = vld [vmem:[#allocation3 + $0x28] sm:$0xff]
      %v3069 = vld [vmem:[#allocation3 + $0x30] sm:$0xff]
      %v3070 = vld [vmem:[#allocation3 + $0x38] sm:$0xff]
      %v3071 = vld [vmem:[#allocation2] sm:$0xff]
      %v3072 = vld [vmem:[#allocation2 + $0x8] sm:$0xff]
      %v3073 = vld [vmem:[#allocation2 + $0x10] sm:$0xff]
      %v3074 = vld [vmem:[#allocation2 + $0x18] sm:$0xff]
      %v3075 = vld [vmem:[#allocation2 + $0x20] sm:$0xff]
      %v3076 = vld [vmem:[#allocation2 + $0x28] sm:$0xff]
      %v3077 = vld [vmem:[#allocation2 + $0x30] sm:$0xff]
      %v3078 = vld [vmem:[#allocation2 + $0x38] sm:$0xff]
      %v3079 = vld [vmem:[%s2046 + $0x8] sm:$0xf]
      %v3081 = vsel %vm451, %v3063, 0
      %v3084 = vsel %vm451, %v3064, 0
      %v3087 = vsel %vm451, %v3065, 0
      %v3090 = vsel %vm451, %v3066, 0
      %v3093 = vsel %vm451, %v3067, 0
      %v3096 = vsel %vm451, %v3068, 0
      %v3099 = vsel %vm451, %v3069, 0
      %v3102 = vsel %vm451, %v3070, 0
      %v3105 = vsel %vm521, %v3079, 0
      %3107 = vmatprep.subr.mxu0 0.0
      %3108 = vmatpush1.msra.mxu0 %v3105
      %3109 = vmatprep.subr.mxu0 0.0
      %3110 = vmatpush1.msra.mxu0 0.0
      %3111 = vmatprep.subr.mxu0 0.0
      %3112 = vmatpush1.msra.mxu0 0.0
      %3113 = vmatprep.subr.mxu0 0.0
      %3114 = vmatpush1.msra.mxu0 0.0
      %3115 = vmatprep.subr.mxu0 0.0
      %3116 = vmatpush1.msra.mxu0 0.0
      %3117 = vmatprep.subr.mxu0 0.0
      %3118 = vmatpush1.msra.mxu0 0.0
      %3119 = vmatprep.subr.mxu0 0.0
      %3120 = vmatpush1.msra.mxu0 0.0
      %3121 = vmatprep.subr.mxu0 0.0
      %3122 = vmatpush1.msra.mxu0 0.0
      %3123 = vmatprep.subr.mxu0 0.0
      %3124 = vmatpush1.msra.mxu0 0.0
      %3125 = vmatprep.subr.mxu0 0.0
      %3126 = vmatpush1.msra.mxu0 0.0
      %3127 = vmatprep.subr.mxu0 0.0
      %3128 = vmatpush1.msra.mxu0 0.0
      %3129 = vmatprep.subr.mxu0 0.0
      %3130 = vmatpush1.msra.mxu0 0.0
      %3131 = vmatprep.subr.mxu0 0.0
      %3132 = vmatpush1.msra.mxu0 0.0
      %3133 = vmatprep.subr.mxu0 0.0
      %3134 = vmatpush1.msra.mxu0 0.0
      %3135 = vmatprep.subr.mxu0 0.0
      %3136 = vmatpush1.msra.mxu0 0.0
      %3137 = vmatprep.subr.mxu0 0.0
      %3138 = vmatpush1.msra.mxu0 0.0
      %3139 = vmatprep.subr.mxu0 0.0
      %3140 = vmatpush1.msra.mxu0 0.0
      %3141 = vmatprep.subr.mxu0 0.0
      %3142 = vmatpush1.msra.mxu0 0.0
      %3143 = vmatprep.subr.mxu0 0.0
      %3144 = vmatpush1.msra.mxu0 0.0
      %3145 = vmatprep.subr.mxu0 0.0
      %3146 = vmatpush1.msra.mxu0 0.0
      %3147 = vmatprep.subr.mxu0 0.0
      %3148 = vmatpush1.msra.mxu0 0.0
      %3149 = vmatprep.subr.mxu0 0.0
      %3150 = vmatpush1.msra.mxu0 0.0
      %3151 = vmatprep.subr.mxu0 0.0
      %3152 = vmatpush1.msra.mxu0 0.0
      %3153 = vmatprep.subr.mxu0 0.0
      %3154 = vmatpush1.msra.mxu0 0.0
      %3155 = vmatprep.subr.mxu0 0.0
      %3156 = vmatpush1.msra.mxu0 0.0
      %3157 = vmatprep.subr.mxu0 0.0
      %3158 = vmatpush1.msra.mxu0 0.0
      %3159 = vmatprep.subr.mxu0 0.0
      %3160 = vmatpush1.msra.mxu0 0.0
      %3161 = vmatprep.subr.mxu0 0.0
      %3162 = vmatpush1.msra.mxu0 0.0
      %3163 = vmatprep.subr.mxu0 0.0
      %3164 = vmatpush1.msra.mxu0 0.0
      %3165 = vmatprep.subr.mxu0 0.0
      %3166 = vmatpush1.msra.mxu0 0.0
      %3167 = vmatprep.subr.mxu0 0.0
      %3168 = vmatpush1.msra.mxu0 0.0
      %3169 = vmatprep.subr.mxu0 0.0
      %3170 = vmatpush1.msra.mxu0 0.0
      %3171 = vmatprep.mubr.f32.mxu0 0.0
      %3172 = vmatmul.mubr.f32.gmra.mrb[0].mxu0 %v3081
      %v3173 = vpop.f32.mrb[0].mxu0
      %v3174 = vadd.f32 0.0, %v3173
      %v3175 = vpop.f32.mrb[0].mxu0
      %3176 = vmatprep.mubr.f32.mxu0 0.0
      %3177 = vmatmul.mubr.f32.gmra.mrb[0].mxu0 %v3084
      %v3178 = vpop.f32.mrb[0].mxu0
      %v3179 = vadd.f32 0.0, %v3178
      %v3180 = vpop.f32.mrb[0].mxu0
      %3181 = vmatprep.mubr.f32.mxu0 0.0
      %3182 = vmatmul.mubr.f32.gmra.mrb[0].mxu0 %v3087
      %v3183 = vpop.f32.mrb[0].mxu0
      %v3184 = vadd.f32 0.0, %v3183
      %v3185 = vpop.f32.mrb[0].mxu0
      %3186 = vmatprep.mubr.f32.mxu0 0.0
      %3187 = vmatmul.mubr.f32.gmra.mrb[0].mxu0 %v3090
      %v3188 = vpop.f32.mrb[0].mxu0
      %v3189 = vadd.f32 0.0, %v3188
      %v3190 = vpop.f32.mrb[0].mxu0
      %3191 = vmatprep.mubr.f32.mxu0 0.0
      %3192 = vmatmul.mubr.f32.gmra.mrb[0].mxu0 %v3093
      %v3193 = vpop.f32.mrb[0].mxu0
      %v3194 = vadd.f32 0.0, %v3193
      %v3195 = vpop.f32.mrb[0].mxu0
      %3196 = vmatprep.mubr.f32.mxu0 0.0
      %3197 = vmatmul.mubr.f32.gmra.mrb[0].mxu0 %v3096
      %v3198 = vpop.f32.mrb[0].mxu0
      %v3199 = vadd.f32 0.0, %v3198
      %v3200 = vpop.f32.mrb[0].mxu0
      %3201 = vmatprep.mubr.f32.mxu0 0.0
      %3202 = vmatmul.mubr.f32.gmra.mrb[0].mxu0 %v3099
      %v3203 = vpop.f32.mrb[0].mxu0
      %v3204 = vadd.f32 0.0, %v3203
      %v3205 = vpop.f32.mrb[0].mxu0
      %3206 = vmatprep.mubr.f32.mxu0 0.0
      %3207 = vmatmul.mubr.f32.gmra.mrb[0].mxu0 %v3102
      %v3208 = vpop.f32.mrb[0].mxu0
      %v3209 = vadd.f32 0.0, %v3208
      %v3210 = vpop.f32.mrb[0].mxu0
      %3211 = vdwg.mxu0
      %v3212 = vadd.f32 %v3071, %v3174
      %v3213 = vadd.f32 %v3072, %v3179
      %v3214 = vadd.f32 %v3073, %v3184
      %v3215 = vadd.f32 %v3074, %v3189
      %v3216 = vadd.f32 %v3075, %v3194
      %v3217 = vadd.f32 %v3076, %v3199
      %v3218 = vadd.f32 %v3077, %v3204
      %v3219 = vadd.f32 %v3078, %v3209
      %3220 = vst.msk [vmem:[#allocation2] sm:$0xff] %vm451, %v3212
      %3221 = vst.msk [vmem:[#allocation2 + $0x8] sm:$0xff] %vm451, %v3213
      %3222 = vst.msk [vmem:[#allocation2 + $0x10] sm:$0xff] %vm451, %v3214
      %3223 = vst.msk [vmem:[#allocation2 + $0x18] sm:$0xff] %vm451, %v3215
      %3224 = vst.msk [vmem:[#allocation2 + $0x20] sm:$0xff] %vm451, %v3216
      %3225 = vst.msk [vmem:[#allocation2 + $0x28] sm:$0xff] %vm451, %v3217
      %3226 = vst.msk [vmem:[#allocation2 + $0x30] sm:$0xff] %vm451, %v3218
      %3227 = vst.msk [vmem:[#allocation2 + $0x38] sm:$0xff] %vm451, %v3219
      %v3228 = vld [vmem:[%s646] sm:$0xff]
      %v3229 = vld [vmem:[%s646 + $0x8] sm:$0xff]
      %v3230 = vld [vmem:[%s646 + $0x10] sm:$0xff]
      %v3231 = vld [vmem:[%s646 + $0x18] sm:$0xff]
      %v3232 = vld [vmem:[%s646 + $0x20] sm:$0xff]
      %v3233 = vld [vmem:[%s646 + $0x28] sm:$0xff]
      %v3234 = vld [vmem:[%s646 + $0x30] sm:$0xff]
      %v3235 = vld [vmem:[%s646 + $0x38] sm:$0xff]
      %v3236 = vld [vmem:[#allocation2] sm:$0xff]
      %v3237 = vld [vmem:[#allocation2 + $0x8] sm:$0xff]
      %v3238 = vld [vmem:[#allocation2 + $0x10] sm:$0xff]
      %v3239 = vld [vmem:[#allocation2 + $0x18] sm:$0xff]
      %v3240 = vld [vmem:[#allocation2 + $0x20] sm:$0xff]
      %v3241 = vld [vmem:[#allocation2 + $0x28] sm:$0xff]
      %v3242 = vld [vmem:[#allocation2 + $0x30] sm:$0xff]
      %v3243 = vld [vmem:[#allocation2 + $0x38] sm:$0xff]
      %v3244 = vld [vmem:[%s2212 + $0x8] sm:$0xf]
      %v3246 = vsel %vm451, %v3228, 0
      %v3249 = vsel %vm451, %v3229, 0
      %v3252 = vsel %vm451, %v3230, 0
      %v3255 = vsel %vm451, %v3231, 0
      %v3258 = vsel %vm451, %v3232, 0
      %v3261 = vsel %vm451, %v3233, 0
      %v3264 = vsel %vm451, %v3234, 0
      %v3267 = vsel %vm451, %v3235, 0
      %v3270 = vsel %vm521, %v3244, 0
      %3272 = vmatprep.subr.mxu0 0.0
      %3273 = vmatpush1.msra.mxu0 %v3270
      %3274 = vmatprep.subr.mxu0 0.0
      %3275 = vmatpush1.msra.mxu0 0.0
      %3276 = vmatprep.subr.mxu0 0.0
      %3277 = vmatpush1.msra.mxu0 0.0
      %3278 = vmatprep.subr.mxu0 0.0
      %3279 = vmatpush1.msra.mxu0 0.0
      %3280 = vmatprep.subr.mxu0 0.0
      %3281 = vmatpush1.msra.mxu0 0.0
      %3282 = vmatprep.subr.mxu0 0.0
      %3283 = vmatpush1.msra.mxu0 0.0
      %3284 = vmatprep.subr.mxu0 0.0
      %3285 = vmatpush1.msra.mxu0 0.0
      %3286 = vmatprep.subr.mxu0 0.0
      %3287 = vmatpush1.msra.mxu0 0.0
      %3288 = vmatprep.subr.mxu0 0.0
      %3289 = vmatpush1.msra.mxu0 0.0
      %3290 = vmatprep.subr.mxu0 0.0
      %3291 = vmatpush1.msra.mxu0 0.0
      %3292 = vmatprep.subr.mxu0 0.0
      %3293 = vmatpush1.msra.mxu0 0.0
      %3294 = vmatprep.subr.mxu0 0.0
      %3295 = vmatpush1.msra.mxu0 0.0
      %3296 = vmatprep.subr.mxu0 0.0
      %3297 = vmatpush1.msra.mxu0 0.0
      %3298 = vmatprep.subr.mxu0 0.0
      %3299 = vmatpush1.msra.mxu0 0.0
      %3300 = vmatprep.subr.mxu0 0.0
      %3301 = vmatpush1.msra.mxu0 0.0
      %3302 = vmatprep.subr.mxu0 0.0
      %3303 = vmatpush1.msra.mxu0 0.0
      %3304 = vmatprep.subr.mxu0 0.0
      %3305 = vmatpush1.msra.mxu0 0.0
      %3306 = vmatprep.subr.mxu0 0.0
      %3307 = vmatpush1.msra.mxu0 0.0
      %3308 = vmatprep.subr.mxu0 0.0
      %3309 = vmatpush1.msra.mxu0 0.0
      %3310 = vmatprep.subr.mxu0 0.0
      %3311 = vmatpush1.msra.mxu0 0.0
      %3312 = vmatprep.subr.mxu0 0.0
      %3313 = vmatpush1.msra.mxu0 0.0
      %3314 = vmatprep.subr.mxu0 0.0
      %3315 = vmatpush1.msra.mxu0 0.0
      %3316 = vmatprep.subr.mxu0 0.0
      %3317 = vmatpush1.msra.mxu0 0.0
      %3318 = vmatprep.subr.mxu0 0.0
      %3319 = vmatpush1.msra.mxu0 0.0
      %3320 = vmatprep.subr.mxu0 0.0
      %3321 = vmatpush1.msra.mxu0 0.0
      %3322 = vmatprep.subr.mxu0 0.0
      %3323 = vmatpush1.msra.mxu0 0.0
      %3324 = vmatprep.subr.mxu0 0.0
      %3325 = vmatpush1.msra.mxu0 0.0
      %3326 = vmatprep.subr.mxu0 0.0
      %3327 = vmatpush1.msra.mxu0 0.0
      %3328 = vmatprep.subr.mxu0 0.0
      %3329 = vmatpush1.msra.mxu0 0.0
      %3330 = vmatprep.subr.mxu0 0.0
      %3331 = vmatpush1.msra.mxu0 0.0
      %3332 = vmatprep.subr.mxu0 0.0
      %3333 = vmatpush1.msra.mxu0 0.0
      %3334 = vmatprep.subr.mxu0 0.0
      %3335 = vmatpush1.msra.mxu0 0.0
      %3336 = vmatprep.mubr.f32.mxu0 0.0
      %3337 = vmatmul.mubr.f32.gmra.mrb[0].mxu0 %v3246
      %v3338 = vpop.f32.mrb[0].mxu0
      %v3339 = vadd.f32 0.0, %v3338
      %v3340 = vpop.f32.mrb[0].mxu0
      %3341 = vmatprep.mubr.f32.mxu0 0.0
      %3342 = vmatmul.mubr.f32.gmra.mrb[0].mxu0 %v3249
      %v3343 = vpop.f32.mrb[0].mxu0
      %v3344 = vadd.f32 0.0, %v3343
      %v3345 = vpop.f32.mrb[0].mxu0
      %3346 = vmatprep.mubr.f32.mxu0 0.0
      %3347 = vmatmul.mubr.f32.gmra.mrb[0].mxu0 %v3252
      %v3348 = vpop.f32.mrb[0].mxu0
      %v3349 = vadd.f32 0.0, %v3348
      %v3350 = vpop.f32.mrb[0].mxu0
      %3351 = vmatprep.mubr.f32.mxu0 0.0
      %3352 = vmatmul.mubr.f32.gmra.mrb[0].mxu0 %v3255
      %v3353 = vpop.f32.mrb[0].mxu0
      %v3354 = vadd.f32 0.0, %v3353
      %v3355 = vpop.f32.mrb[0].mxu0
      %3356 = vmatprep.mubr.f32.mxu0 0.0
      %3357 = vmatmul.mubr.f32.gmra.mrb[0].mxu0 %v3258
      %v3358 = vpop.f32.mrb[0].mxu0
      %v3359 = vadd.f32 0.0, %v3358
      %v3360 = vpop.f32.mrb[0].mxu0
      %3361 = vmatprep.mubr.f32.mxu0 0.0
      %3362 = vmatmul.mubr.f32.gmra.mrb[0].mxu0 %v3261
      %v3363 = vpop.f32.mrb[0].mxu0
      %v3364 = vadd.f32 0.0, %v3363
      %v3365 = vpop.f32.mrb[0].mxu0
      %3366 = vmatprep.mubr.f32.mxu0 0.0
      %3367 = vmatmul.mubr.f32.gmra.mrb[0].mxu0 %v3264
      %v3368 = vpop.f32.mrb[0].mxu0
      %v3369 = vadd.f32 0.0, %v3368
      %v3370 = vpop.f32.mrb[0].mxu0
      %3371 = vmatprep.mubr.f32.mxu0 0.0
      %3372 = vmatmul.mubr.f32.gmra.mrb[0].mxu0 %v3267
      %v3373 = vpop.f32.mrb[0].mxu0
      %v3374 = vadd.f32 0.0, %v3373
      %v3375 = vpop.f32.mrb[0].mxu0
      %3376 = vdwg.mxu0
      %v3377 = vadd.f32 %v3236, %v3339
      %v3378 = vadd.f32 %v3237, %v3344
      %v3379 = vadd.f32 %v3238, %v3349
      %v3380 = vadd.f32 %v3239, %v3354
      %v3381 = vadd.f32 %v3240, %v3359
      %v3382 = vadd.f32 %v3241, %v3364
      %v3383 = vadd.f32 %v3242, %v3369
      %v3384 = vadd.f32 %v3243, %v3374
      %3385 = vst.msk [vmem:[#allocation2] sm:$0xff] %vm451, %v3377
      %3386 = vst.msk [vmem:[#allocation2 + $0x8] sm:$0xff] %vm451, %v3378
      %3387 = vst.msk [vmem:[#allocation2 + $0x10] sm:$0xff] %vm451, %v3379
      %3388 = vst.msk [vmem:[#allocation2 + $0x18] sm:$0xff] %vm451, %v3380
      %3389 = vst.msk [vmem:[#allocation2 + $0x20] sm:$0xff] %vm451, %v3381
      %3390 = vst.msk [vmem:[#allocation2 + $0x28] sm:$0xff] %vm451, %v3382
      %3391 = vst.msk [vmem:[#allocation2 + $0x30] sm:$0xff] %vm451, %v3383
      %3392 = vst.msk [vmem:[#allocation2 + $0x38] sm:$0xff] %vm451, %v3384
      %v3393 = vld [vmem:[%s813] sm:$0xff]
      %v3394 = vld [vmem:[%s813 + $0x8] sm:$0xff]
      %v3395 = vld [vmem:[%s813 + $0x10] sm:$0xff]
      %v3396 = vld [vmem:[%s813 + $0x18] sm:$0xff]
      %v3397 = vld [vmem:[%s813 + $0x20] sm:$0xff]
      %v3398 = vld [vmem:[%s813 + $0x28] sm:$0xff]
      %v3399 = vld [vmem:[%s813 + $0x30] sm:$0xff]
      %v3400 = vld [vmem:[%s813 + $0x38] sm:$0xff]
      %v3401 = vld [vmem:[#allocation2] sm:$0xff]
      %v3402 = vld [vmem:[#allocation2 + $0x8] sm:$0xff]
      %v3403 = vld [vmem:[#allocation2 + $0x10] sm:$0xff]
      %v3404 = vld [vmem:[#allocation2 + $0x18] sm:$0xff]
      %v3405 = vld [vmem:[#allocation2 + $0x20] sm:$0xff]
      %v3406 = vld [vmem:[#allocation2 + $0x28] sm:$0xff]
      %v3407 = vld [vmem:[#allocation2 + $0x30] sm:$0xff]
      %v3408 = vld [vmem:[#allocation2 + $0x38] sm:$0xff]
      %v3409 = vld [vmem:[%s2378 + $0x8] sm:$0xf]
      %v3411 = vsel %vm451, %v3393, 0
      %v3414 = vsel %vm451, %v3394, 0
      %v3417 = vsel %vm451, %v3395, 0
      %v3420 = vsel %vm451, %v3396, 0
      %v3423 = vsel %vm451, %v3397, 0
      %v3426 = vsel %vm451, %v3398, 0
      %v3429 = vsel %vm451, %v3399, 0
      %v3432 = vsel %vm451, %v3400, 0
      %v3435 = vsel %vm521, %v3409, 0
      %3437 = vmatprep.subr.mxu0 0.0
      %3438 = vmatpush1.msra.mxu0 %v3435
      %3439 = vmatprep.subr.mxu0 0.0
      %3440 = vmatpush1.msra.mxu0 0.0
      %3441 = vmatprep.subr.mxu0 0.0
      %3442 = vmatpush1.msra.mxu0 0.0
      %3443 = vmatprep.subr.mxu0 0.0
      %3444 = vmatpush1.msra.mxu0 0.0
      %3445 = vmatprep.subr.mxu0 0.0
      %3446 = vmatpush1.msra.mxu0 0.0
      %3447 = vmatprep.subr.mxu0 0.0
      %3448 = vmatpush1.msra.mxu0 0.0
      %3449 = vmatprep.subr.mxu0 0.0
      %3450 = vmatpush1.msra.mxu0 0.0
      %3451 = vmatprep.subr.mxu0 0.0
      %3452 = vmatpush1.msra.mxu0 0.0
      %3453 = vmatprep.subr.mxu0 0.0
      %3454 = vmatpush1.msra.mxu0 0.0
      %3455 = vmatprep.subr.mxu0 0.0
      %3456 = vmatpush1.msra.mxu0 0.0
      %3457 = vmatprep.subr.mxu0 0.0
      %3458 = vmatpush1.msra.mxu0 0.0
      %3459 = vmatprep.subr.mxu0 0.0
      %3460 = vmatpush1.msra.mxu0 0.0
      %3461 = vmatprep.subr.mxu0 0.0
      %3462 = vmatpush1.msra.mxu0 0.0
      %3463 = vmatprep.subr.mxu0 0.0
      %3464 = vmatpush1.msra.mxu0 0.0
      %3465 = vmatprep.subr.mxu0 0.0
      %3466 = vmatpush1.msra.mxu0 0.0
      %3467 = vmatprep.subr.mxu0 0.0
      %3468 = vmatpush1.msra.mxu0 0.0
      %3469 = vmatprep.subr.mxu0 0.0
      %3470 = vmatpush1.msra.mxu0 0.0
      %3471 = vmatprep.subr.mxu0 0.0
      %3472 = vmatpush1.msra.mxu0 0.0
      %3473 = vmatprep.subr.mxu0 0.0
      %3474 = vmatpush1.msra.mxu0 0.0
      %3475 = vmatprep.subr.mxu0 0.0
      %3476 = vmatpush1.msra.mxu0 0.0
      %3477 = vmatprep.subr.mxu0 0.0
      %3478 = vmatpush1.msra.mxu0 0.0
      %3479 = vmatprep.subr.mxu0 0.0
      %3480 = vmatpush1.msra.mxu0 0.0
      %3481 = vmatprep.subr.mxu0 0.0
      %3482 = vmatpush1.msra.mxu0 0.0
      %3483 = vmatprep.subr.mxu0 0.0
      %3484 = vmatpush1.msra.mxu0 0.0
      %3485 = vmatprep.subr.mxu0 0.0
      %3486 = vmatpush1.msra.mxu0 0.0
      %3487 = vmatprep.subr.mxu0 0.0
      %3488 = vmatpush1.msra.mxu0 0.0
      %3489 = vmatprep.subr.mxu0 0.0
      %3490 = vmatpush1.msra.mxu0 0.0
      %3491 = vmatprep.subr.mxu0 0.0
      %3492 = vmatpush1.msra.mxu0 0.0
      %3493 = vmatprep.subr.mxu0 0.0
      %3494 = vmatpush1.msra.mxu0 0.0
      %3495 = vmatprep.subr.mxu0 0.0
      %3496 = vmatpush1.msra.mxu0 0.0
      %3497 = vmatprep.subr.mxu0 0.0
      %3498 = vmatpush1.msra.mxu0 0.0
      %3499 = vmatprep.subr.mxu0 0.0
      %3500 = vmatpush1.msra.mxu0 0.0
      %3501 = vmatprep.mubr.f32.mxu0 0.0
      %3502 = vmatmul.mubr.f32.gmra.mrb[0].mxu0 %v3411
      %v3503 = vpop.f32.mrb[0].mxu0
      %v3504 = vadd.f32 0.0, %v3503
      %v3505 = vpop.f32.mrb[0].mxu0
      %3506 = vmatprep.mubr.f32.mxu0 0.0
      %3507 = vmatmul.mubr.f32.gmra.mrb[0].mxu0 %v3414
      %v3508 = vpop.f32.mrb[0].mxu0
      %v3509 = vadd.f32 0.0, %v3508
      %v3510 = vpop.f32.mrb[0].mxu0
      %3511 = vmatprep.mubr.f32.mxu0 0.0
      %3512 = vmatmul.mubr.f32.gmra.mrb[0].mxu0 %v3417
      %v3513 = vpop.f32.mrb[0].mxu0
      %v3514 = vadd.f32 0.0, %v3513
      %v3515 = vpop.f32.mrb[0].mxu0
      %3516 = vmatprep.mubr.f32.mxu0 0.0
      %3517 = vmatmul.mubr.f32.gmra.mrb[0].mxu0 %v3420
      %v3518 = vpop.f32.mrb[0].mxu0
      %v3519 = vadd.f32 0.0, %v3518
      %v3520 = vpop.f32.mrb[0].mxu0
      %3521 = vmatprep.mubr.f32.mxu0 0.0
      %3522 = vmatmul.mubr.f32.gmra.mrb[0].mxu0 %v3423
      %v3523 = vpop.f32.mrb[0].mxu0
      %v3524 = vadd.f32 0.0, %v3523
      %v3525 = vpop.f32.mrb[0].mxu0
      %3526 = vmatprep.mubr.f32.mxu0 0.0
      %3527 = vmatmul.mubr.f32.gmra.mrb[0].mxu0 %v3426
      %v3528 = vpop.f32.mrb[0].mxu0
      %v3529 = vadd.f32 0.0, %v3528
      %v3530 = vpop.f32.mrb[0].mxu0
      %3531 = vmatprep.mubr.f32.mxu0 0.0
      %3532 = vmatmul.mubr.f32.gmra.mrb[0].mxu0 %v3429
      %v3533 = vpop.f32.mrb[0].mxu0
      %v3534 = vadd.f32 0.0, %v3533
      %v3535 = vpop.f32.mrb[0].mxu0
      %3536 = vmatprep.mubr.f32.mxu0 0.0
      %3537 = vmatmul.mubr.f32.gmra.mrb[0].mxu0 %v3432
      %v3538 = vpop.f32.mrb[0].mxu0
      %v3539 = vadd.f32 0.0, %v3538
      %v3540 = vpop.f32.mrb[0].mxu0
      %3541 = vdwg.mxu0
      %v3542 = vadd.f32 %v3401, %v3504
      %v3543 = vadd.f32 %v3402, %v3509
      %v3544 = vadd.f32 %v3403, %v3514
      %v3545 = vadd.f32 %v3404, %v3519
      %v3546 = vadd.f32 %v3405, %v3524
      %v3547 = vadd.f32 %v3406, %v3529
      %v3548 = vadd.f32 %v3407, %v3534
      %v3549 = vadd.f32 %v3408, %v3539
      %3550 = vst.msk [vmem:[#allocation2] sm:$0xff] %vm451, %v3542
      %3551 = vst.msk [vmem:[#allocation2 + $0x8] sm:$0xff] %vm451, %v3543
      %3552 = vst.msk [vmem:[#allocation2 + $0x10] sm:$0xff] %vm451, %v3544
      %3553 = vst.msk [vmem:[#allocation2 + $0x18] sm:$0xff] %vm451, %v3545
      %3554 = vst.msk [vmem:[#allocation2 + $0x20] sm:$0xff] %vm451, %v3546
      %3555 = vst.msk [vmem:[#allocation2 + $0x28] sm:$0xff] %vm451, %v3547
      %3556 = vst.msk [vmem:[#allocation2 + $0x30] sm:$0xff] %vm451, %v3548
      %3557 = vst.msk [vmem:[#allocation2 + $0x38] sm:$0xff] %vm451, %v3549
      %v3558 = vld [vmem:[%s412] sm:$0xff]
      %v3559 = vld [vmem:[%s412 + $0x10] sm:$0xff]
      %v3560 = vld [vmem:[%s412 + $0x20] sm:$0xff]
      %v3561 = vld [vmem:[%s412 + $0x30] sm:$0xff]
      %v3562 = vld [vmem:[%s412 + $0x40] sm:$0xff]
      %v3563 = vld [vmem:[%s412 + $0x50] sm:$0xff]
      %v3564 = vld [vmem:[%s412 + $0x60] sm:$0xff]
      %v3565 = vld [vmem:[%s412 + $0x70] sm:$0xff]
      %v3566 = vld [vmem:[%s412 + $0x80] sm:$0xff]
      %v3567 = vld [vmem:[%s412 + $0x90] sm:$0xff]
      %3568 = vst.msk [vmem:[#allocation3] sm:$0xff] %vm451, %v3558
      %3569 = vst.msk [vmem:[#allocation3 + $0x8] sm:$0xff] %vm451, %v3559
      %3570 = vst.msk [vmem:[#allocation3 + $0x10] sm:$0xff] %vm451, %v3560
      %3571 = vst.msk [vmem:[#allocation3 + $0x18] sm:$0xff] %vm451, %v3561
      %3572 = vst.msk [vmem:[#allocation3 + $0x20] sm:$0xff] %vm451, %v3562
      %3573 = vst.msk [vmem:[#allocation3 + $0x28] sm:$0xff] %vm451, %v3563
      %3574 = vst.msk [vmem:[#allocation3 + $0x30] sm:$0xff] %vm451, %v3564
      %3575 = vst.msk [vmem:[#allocation3 + $0x38] sm:$0xff] %vm451, %v3565
      %3576 = vst.msk [vmem:[#allocation3 + $0x40] sm:$0xff] %vm451, %v3566
      %3577 = vst.msk [vmem:[#allocation3 + $0x48] sm:$0xff] %vm451, %v3567
      %v3578 = vld [vmem:[#allocation3] sm:$0xff]
      %v3579 = vld [vmem:[#allocation3 + $0x8] sm:$0xff]
      %v3580 = vld [vmem:[#allocation3 + $0x10] sm:$0xff]
      %v3581 = vld [vmem:[#allocation3 + $0x18] sm:$0xff]
      %v3582 = vld [vmem:[#allocation3 + $0x20] sm:$0xff]
      %v3583 = vld [vmem:[#allocation3 + $0x28] sm:$0xff]
      %v3584 = vld [vmem:[#allocation3 + $0x30] sm:$0xff]
      %v3585 = vld [vmem:[#allocation3 + $0x38] sm:$0xff]
      %v3586 = vld [vmem:[#allocation2] sm:$0xff]
      %v3587 = vld [vmem:[#allocation2 + $0x8] sm:$0xff]
      %v3588 = vld [vmem:[#allocation2 + $0x10] sm:$0xff]
      %v3589 = vld [vmem:[#allocation2 + $0x18] sm:$0xff]
      %v3590 = vld [vmem:[#allocation2 + $0x20] sm:$0xff]
      %v3591 = vld [vmem:[#allocation2 + $0x28] sm:$0xff]
      %v3592 = vld [vmem:[#allocation2 + $0x30] sm:$0xff]
      %v3593 = vld [vmem:[#allocation2 + $0x38] sm:$0xff]
      %s3594 = scalar_lea.vmem %s3, 96
      %v3595 = vld [vmem:[%s3594] sm:$0xf]
      %v3597 = vsel %vm451, %v3578, 0
      %v3600 = vsel %vm451, %v3579, 0
      %v3603 = vsel %vm451, %v3580, 0
      %v3606 = vsel %vm451, %v3581, 0
      %v3609 = vsel %vm451, %v3582, 0
      %v3612 = vsel %vm451, %v3583, 0
      %v3615 = vsel %vm451, %v3584, 0
      %v3618 = vsel %vm451, %v3585, 0
      %v3621 = vsel %vm521, %v3595, 0
      %3623 = vmatprep.subr.mxu0 0.0
      %3624 = vmatpush1.msra.mxu0 %v3621
      %3625 = vmatprep.subr.mxu0 0.0
      %3626 = vmatpush1.msra.mxu0 0.0
      %3627 = vmatprep.subr.mxu0 0.0
      %3628 = vmatpush1.msra.mxu0 0.0
      %3629 = vmatprep.subr.mxu0 0.0
      %3630 = vmatpush1.msra.mxu0 0.0
      %3631 = vmatprep.subr.mxu0 0.0
      %3632 = vmatpush1.msra.mxu0 0.0
      %3633 = vmatprep.subr.mxu0 0.0
      %3634 = vmatpush1.msra.mxu0 0.0
      %3635 = vmatprep.subr.mxu0 0.0
      %3636 = vmatpush1.msra.mxu0 0.0
      %3637 = vmatprep.subr.mxu0 0.0
      %3638 = vmatpush1.msra.mxu0 0.0
      %3639 = vmatprep.subr.mxu0 0.0
      %3640 = vmatpush1.msra.mxu0 0.0
      %3641 = vmatprep.subr.mxu0 0.0
      %3642 = vmatpush1.msra.mxu0 0.0
      %3643 = vmatprep.subr.mxu0 0.0
      %3644 = vmatpush1.msra.mxu0 0.0
      %3645 = vmatprep.subr.mxu0 0.0
      %3646 = vmatpush1.msra.mxu0 0.0
      %3647 = vmatprep.subr.mxu0 0.0
      %3648 = vmatpush1.msra.mxu0 0.0
      %3649 = vmatprep.subr.mxu0 0.0
      %3650 = vmatpush1.msra.mxu0 0.0
      %3651 = vmatprep.subr.mxu0 0.0
      %3652 = vmatpush1.msra.mxu0 0.0
      %3653 = vmatprep.subr.mxu0 0.0
      %3654 = vmatpush1.msra.mxu0 0.0
      %3655 = vmatprep.subr.mxu0 0.0
      %3656 = vmatpush1.msra.mxu0 0.0
      %3657 = vmatprep.subr.mxu0 0.0
      %3658 = vmatpush1.msra.mxu0 0.0
      %3659 = vmatprep.subr.mxu0 0.0
      %3660 = vmatpush1.msra.mxu0 0.0
      %3661 = vmatprep.subr.mxu0 0.0
      %3662 = vmatpush1.msra.mxu0 0.0
      %3663 = vmatprep.subr.mxu0 0.0
      %3664 = vmatpush1.msra.mxu0 0.0
      %3665 = vmatprep.subr.mxu0 0.0
      %3666 = vmatpush1.msra.mxu0 0.0
      %3667 = vmatprep.subr.mxu0 0.0
      %3668 = vmatpush1.msra.mxu0 0.0
      %3669 = vmatprep.subr.mxu0 0.0
      %3670 = vmatpush1.msra.mxu0 0.0
      %3671 = vmatprep.subr.mxu0 0.0
      %3672 = vmatpush1.msra.mxu0 0.0
      %3673 = vmatprep.subr.mxu0 0.0
      %3674 = vmatpush1.msra.mxu0 0.0
      %3675 = vmatprep.subr.mxu0 0.0
      %3676 = vmatpush1.msra.mxu0 0.0
      %3677 = vmatprep.subr.mxu0 0.0
      %3678 = vmatpush1.msra.mxu0 0.0
      %3679 = vmatprep.subr.mxu0 0.0
      %3680 = vmatpush1.msra.mxu0 0.0
      %3681 = vmatprep.subr.mxu0 0.0
      %3682 = vmatpush1.msra.mxu0 0.0
      %3683 = vmatprep.subr.mxu0 0.0
      %3684 = vmatpush1.msra.mxu0 0.0
      %3685 = vmatprep.subr.mxu0 0.0
      %3686 = vmatpush1.msra.mxu0 0.0
      %3687 = vmatprep.mubr.f32.mxu0 0.0
      %3688 = vmatmul.mubr.f32.gmra.mrb[0].mxu0 %v3597
      %v3689 = vpop.f32.mrb[0].mxu0
      %v3690 = vadd.f32 0.0, %v3689
      %v3691 = vpop.f32.mrb[0].mxu0
      %3692 = vmatprep.mubr.f32.mxu0 0.0
      %3693 = vmatmul.mubr.f32.gmra.mrb[0].mxu0 %v3600
      %v3694 = vpop.f32.mrb[0].mxu0
      %v3695 = vadd.f32 0.0, %v3694
      %v3696 = vpop.f32.mrb[0].mxu0
      %3697 = vmatprep.mubr.f32.mxu0 0.0
      %3698 = vmatmul.mubr.f32.gmra.mrb[0].mxu0 %v3603
      %v3699 = vpop.f32.mrb[0].mxu0
      %v3700 = vadd.f32 0.0, %v3699
      %v3701 = vpop.f32.mrb[0].mxu0
      %3702 = vmatprep.mubr.f32.mxu0 0.0
      %3703 = vmatmul.mubr.f32.gmra.mrb[0].mxu0 %v3606
      %v3704 = vpop.f32.mrb[0].mxu0
      %v3705 = vadd.f32 0.0, %v3704
      %v3706 = vpop.f32.mrb[0].mxu0
      %3707 = vmatprep.mubr.f32.mxu0 0.0
      %3708 = vmatmul.mubr.f32.gmra.mrb[0].mxu0 %v3609
      %v3709 = vpop.f32.mrb[0].mxu0
      %v3710 = vadd.f32 0.0, %v3709
      %v3711 = vpop.f32.mrb[0].mxu0
      %3712 = vmatprep.mubr.f32.mxu0 0.0
      %3713 = vmatmul.mubr.f32.gmra.mrb[0].mxu0 %v3612
      %v3714 = vpop.f32.mrb[0].mxu0
      %v3715 = vadd.f32 0.0, %v3714
      %v3716 = vpop.f32.mrb[0].mxu0
      %3717 = vmatprep.mubr.f32.mxu0 0.0
      %3718 = vmatmul.mubr.f32.gmra.mrb[0].mxu0 %v3615
      %v3719 = vpop.f32.mrb[0].mxu0
      %v3720 = vadd.f32 0.0, %v3719
      %v3721 = vpop.f32.mrb[0].mxu0
      %3722 = vmatprep.mubr.f32.mxu0 0.0
      %3723 = vmatmul.mubr.f32.gmra.mrb[0].mxu0 %v3618
      %v3724 = vpop.f32.mrb[0].mxu0
      %v3725 = vadd.f32 0.0, %v3724
      %v3726 = vpop.f32.mrb[0].mxu0
      %3727 = vdwg.mxu0
      %v3728 = vadd.f32 %v3586, %v3690
      %v3729 = vadd.f32 %v3587, %v3695
      %v3730 = vadd.f32 %v3588, %v3700
      %v3731 = vadd.f32 %v3589, %v3705
      %v3732 = vadd.f32 %v3590, %v3710
      %v3733 = vadd.f32 %v3591, %v3715
      %v3734 = vadd.f32 %v3592, %v3720
      %v3735 = vadd.f32 %v3593, %v3725
      %3736 = vst.msk [vmem:[#allocation2] sm:$0xff] %vm451, %v3728
      %3737 = vst.msk [vmem:[#allocation2 + $0x8] sm:$0xff] %vm451, %v3729
      %3738 = vst.msk [vmem:[#allocation2 + $0x10] sm:$0xff] %vm451, %v3730
      %3739 = vst.msk [vmem:[#allocation2 + $0x18] sm:$0xff] %vm451, %v3731
      %3740 = vst.msk [vmem:[#allocation2 + $0x20] sm:$0xff] %vm451, %v3732
      %3741 = vst.msk [vmem:[#allocation2 + $0x28] sm:$0xff] %vm451, %v3733
      %3742 = vst.msk [vmem:[#allocation2 + $0x30] sm:$0xff] %vm451, %v3734
      %3743 = vst.msk [vmem:[#allocation2 + $0x38] sm:$0xff] %vm451, %v3735
      %v3744 = vld [vmem:[%s646] sm:$0xff]
      %v3745 = vld [vmem:[%s646 + $0x8] sm:$0xff]
      %v3746 = vld [vmem:[%s646 + $0x10] sm:$0xff]
      %v3747 = vld [vmem:[%s646 + $0x18] sm:$0xff]
      %v3748 = vld [vmem:[%s646 + $0x20] sm:$0xff]
      %v3749 = vld [vmem:[%s646 + $0x28] sm:$0xff]
      %v3750 = vld [vmem:[%s646 + $0x30] sm:$0xff]
      %v3751 = vld [vmem:[%s646 + $0x38] sm:$0xff]
      %v3752 = vld [vmem:[#allocation2] sm:$0xff]
      %v3753 = vld [vmem:[#allocation2 + $0x8] sm:$0xff]
      %v3754 = vld [vmem:[#allocation2 + $0x10] sm:$0xff]
      %v3755 = vld [vmem:[#allocation2 + $0x18] sm:$0xff]
      %v3756 = vld [vmem:[#allocation2 + $0x20] sm:$0xff]
      %v3757 = vld [vmem:[#allocation2 + $0x28] sm:$0xff]
      %v3758 = vld [vmem:[#allocation2 + $0x30] sm:$0xff]
      %v3759 = vld [vmem:[#allocation2 + $0x38] sm:$0xff]
      %s3760 = scalar_lea.vmem %s3, 112
      %v3761 = vld [vmem:[%s3760] sm:$0xf]
      %v3763 = vsel %vm451, %v3744, 0
      %v3766 = vsel %vm451, %v3745, 0
      %v3769 = vsel %vm451, %v3746, 0
      %v3772 = vsel %vm451, %v3747, 0
      %v3775 = vsel %vm451, %v3748, 0
      %v3778 = vsel %vm451, %v3749, 0
      %v3781 = vsel %vm451, %v3750, 0
      %v3784 = vsel %vm451, %v3751, 0
      %v3787 = vsel %vm521, %v3761, 0
      %3789 = vmatprep.subr.mxu0 0.0
      %3790 = vmatpush1.msra.mxu0 %v3787
      %3791 = vmatprep.subr.mxu0 0.0
      %3792 = vmatpush1.msra.mxu0 0.0
      %3793 = vmatprep.subr.mxu0 0.0
      %3794 = vmatpush1.msra.mxu0 0.0
      %3795 = vmatprep.subr.mxu0 0.0
      %3796 = vmatpush1.msra.mxu0 0.0
      %3797 = vmatprep.subr.mxu0 0.0
      %3798 = vmatpush1.msra.mxu0 0.0
      %3799 = vmatprep.subr.mxu0 0.0
      %3800 = vmatpush1.msra.mxu0 0.0
      %3801 = vmatprep.subr.mxu0 0.0
      %3802 = vmatpush1.msra.mxu0 0.0
      %3803 = vmatprep.subr.mxu0 0.0
      %3804 = vmatpush1.msra.mxu0 0.0
      %3805 = vmatprep.subr.mxu0 0.0
      %3806 = vmatpush1.msra.mxu0 0.0
      %3807 = vmatprep.subr.mxu0 0.0
      %3808 = vmatpush1.msra.mxu0 0.0
      %3809 = vmatprep.subr.mxu0 0.0
      %3810 = vmatpush1.msra.mxu0 0.0
      %3811 = vmatprep.subr.mxu0 0.0
      %3812 = vmatpush1.msra.mxu0 0.0
      %3813 = vmatprep.subr.mxu0 0.0
      %3814 = vmatpush1.msra.mxu0 0.0
      %3815 = vmatprep.subr.mxu0 0.0
      %3816 = vmatpush1.msra.mxu0 0.0
      %3817 = vmatprep.subr.mxu0 0.0
      %3818 = vmatpush1.msra.mxu0 0.0
      %3819 = vmatprep.subr.mxu0 0.0
      %3820 = vmatpush1.msra.mxu0 0.0
      %3821 = vmatprep.subr.mxu0 0.0
      %3822 = vmatpush1.msra.mxu0 0.0
      %3823 = vmatprep.subr.mxu0 0.0
      %3824 = vmatpush1.msra.mxu0 0.0
      %3825 = vmatprep.subr.mxu0 0.0
      %3826 = vmatpush1.msra.mxu0 0.0
      %3827 = vmatprep.subr.mxu0 0.0
      %3828 = vmatpush1.msra.mxu0 0.0
      %3829 = vmatprep.subr.mxu0 0.0
      %3830 = vmatpush1.msra.mxu0 0.0
      %3831 = vmatprep.subr.mxu0 0.0
      %3832 = vmatpush1.msra.mxu0 0.0
      %3833 = vmatprep.subr.mxu0 0.0
      %3834 = vmatpush1.msra.mxu0 0.0
      %3835 = vmatprep.subr.mxu0 0.0
      %3836 = vmatpush1.msra.mxu0 0.0
      %3837 = vmatprep.subr.mxu0 0.0
      %3838 = vmatpush1.msra.mxu0 0.0
      %3839 = vmatprep.subr.mxu0 0.0
      %3840 = vmatpush1.msra.mxu0 0.0
      %3841 = vmatprep.subr.mxu0 0.0
      %3842 = vmatpush1.msra.mxu0 0.0
      %3843 = vmatprep.subr.mxu0 0.0
      %3844 = vmatpush1.msra.mxu0 0.0
      %3845 = vmatprep.subr.mxu0 0.0
      %3846 = vmatpush1.msra.mxu0 0.0
      %3847 = vmatprep.subr.mxu0 0.0
      %3848 = vmatpush1.msra.mxu0 0.0
      %3849 = vmatprep.subr.mxu0 0.0
      %3850 = vmatpush1.msra.mxu0 0.0
      %3851 = vmatprep.subr.mxu0 0.0
      %3852 = vmatpush1.msra.mxu0 0.0
      %3853 = vmatprep.mubr.f32.mxu0 0.0
      %3854 = vmatmul.mubr.f32.gmra.mrb[0].mxu0 %v3763
      %v3855 = vpop.f32.mrb[0].mxu0
      %v3856 = vadd.f32 0.0, %v3855
      %v3857 = vpop.f32.mrb[0].mxu0
      %3858 = vmatprep.mubr.f32.mxu0 0.0
      %3859 = vmatmul.mubr.f32.gmra.mrb[0].mxu0 %v3766
      %v3860 = vpop.f32.mrb[0].mxu0
      %v3861 = vadd.f32 0.0, %v3860
      %v3862 = vpop.f32.mrb[0].mxu0
      %3863 = vmatprep.mubr.f32.mxu0 0.0
      %3864 = vmatmul.mubr.f32.gmra.mrb[0].mxu0 %v3769
      %v3865 = vpop.f32.mrb[0].mxu0
      %v3866 = vadd.f32 0.0, %v3865
      %v3867 = vpop.f32.mrb[0].mxu0
      %3868 = vmatprep.mubr.f32.mxu0 0.0
      %3869 = vmatmul.mubr.f32.gmra.mrb[0].mxu0 %v3772
      %v3870 = vpop.f32.mrb[0].mxu0
      %v3871 = vadd.f32 0.0, %v3870
      %v3872 = vpop.f32.mrb[0].mxu0
      %3873 = vmatprep.mubr.f32.mxu0 0.0
      %3874 = vmatmul.mubr.f32.gmra.mrb[0].mxu0 %v3775
      %v3875 = vpop.f32.mrb[0].mxu0
      %v3876 = vadd.f32 0.0, %v3875
      %v3877 = vpop.f32.mrb[0].mxu0
      %3878 = vmatprep.mubr.f32.mxu0 0.0
      %3879 = vmatmul.mubr.f32.gmra.mrb[0].mxu0 %v3778
      %v3880 = vpop.f32.mrb[0].mxu0
      %v3881 = vadd.f32 0.0, %v3880
      %v3882 = vpop.f32.mrb[0].mxu0
      %3883 = vmatprep.mubr.f32.mxu0 0.0
      %3884 = vmatmul.mubr.f32.gmra.mrb[0].mxu0 %v3781
      %v3885 = vpop.f32.mrb[0].mxu0
      %v3886 = vadd.f32 0.0, %v3885
      %v3887 = vpop.f32.mrb[0].mxu0
      %3888 = vmatprep.mubr.f32.mxu0 0.0
      %3889 = vmatmul.mubr.f32.gmra.mrb[0].mxu0 %v3784
      %v3890 = vpop.f32.mrb[0].mxu0
      %v3891 = vadd.f32 0.0, %v3890
      %v3892 = vpop.f32.mrb[0].mxu0
      %3893 = vdwg.mxu0
      %v3894 = vadd.f32 %v3752, %v3856
      %v3895 = vadd.f32 %v3753, %v3861
      %v3896 = vadd.f32 %v3754, %v3866
      %v3897 = vadd.f32 %v3755, %v3871
      %v3898 = vadd.f32 %v3756, %v3876
      %v3899 = vadd.f32 %v3757, %v3881
      %v3900 = vadd.f32 %v3758, %v3886
      %v3901 = vadd.f32 %v3759, %v3891
      %3902 = vst.msk [vmem:[#allocation2] sm:$0xff] %vm451, %v3894
      %3903 = vst.msk [vmem:[#allocation2 + $0x8] sm:$0xff] %vm451, %v3895
      %3904 = vst.msk [vmem:[#allocation2 + $0x10] sm:$0xff] %vm451, %v3896
      %3905 = vst.msk [vmem:[#allocation2 + $0x18] sm:$0xff] %vm451, %v3897
      %3906 = vst.msk [vmem:[#allocation2 + $0x20] sm:$0xff] %vm451, %v3898
      %3907 = vst.msk [vmem:[#allocation2 + $0x28] sm:$0xff] %vm451, %v3899
      %3908 = vst.msk [vmem:[#allocation2 + $0x30] sm:$0xff] %vm451, %v3900
      %3909 = vst.msk [vmem:[#allocation2 + $0x38] sm:$0xff] %vm451, %v3901
      %v3910 = vld [vmem:[%s813] sm:$0xff]
      %v3911 = vld [vmem:[%s813 + $0x8] sm:$0xff]
      %v3912 = vld [vmem:[%s813 + $0x10] sm:$0xff]
      %v3913 = vld [vmem:[%s813 + $0x18] sm:$0xff]
      %v3914 = vld [vmem:[%s813 + $0x20] sm:$0xff]
      %v3915 = vld [vmem:[%s813 + $0x28] sm:$0xff]
      %v3916 = vld [vmem:[%s813 + $0x30] sm:$0xff]
      %v3917 = vld [vmem:[%s813 + $0x38] sm:$0xff]
      %v3918 = vld [vmem:[#allocation2] sm:$0xff]
      %v3919 = vld [vmem:[#allocation2 + $0x8] sm:$0xff]
      %v3920 = vld [vmem:[#allocation2 + $0x10] sm:$0xff]
      %v3921 = vld [vmem:[#allocation2 + $0x18] sm:$0xff]
      %v3922 = vld [vmem:[#allocation2 + $0x20] sm:$0xff]
      %v3923 = vld [vmem:[#allocation2 + $0x28] sm:$0xff]
      %v3924 = vld [vmem:[#allocation2 + $0x30] sm:$0xff]
      %v3925 = vld [vmem:[#allocation2 + $0x38] sm:$0xff]
      %s3926 = scalar_lea.vmem %s3, 128
      %v3927 = vld [vmem:[%s3926] sm:$0xf]
      %v3929 = vsel %vm451, %v3910, 0
      %v3932 = vsel %vm451, %v3911, 0
      %v3935 = vsel %vm451, %v3912, 0
      %v3938 = vsel %vm451, %v3913, 0
      %v3941 = vsel %vm451, %v3914, 0
      %v3944 = vsel %vm451, %v3915, 0
      %v3947 = vsel %vm451, %v3916, 0
      %v3950 = vsel %vm451, %v3917, 0
      %v3953 = vsel %vm521, %v3927, 0
      %3955 = vmatprep.subr.mxu0 0.0
      %3956 = vmatpush1.msra.mxu0 %v3953
      %3957 = vmatprep.subr.mxu0 0.0
      %3958 = vmatpush1.msra.mxu0 0.0
      %3959 = vmatprep.subr.mxu0 0.0
      %3960 = vmatpush1.msra.mxu0 0.0
      %3961 = vmatprep.subr.mxu0 0.0
      %3962 = vmatpush1.msra.mxu0 0.0
      %3963 = vmatprep.subr.mxu0 0.0
      %3964 = vmatpush1.msra.mxu0 0.0
      %3965 = vmatprep.subr.mxu0 0.0
      %3966 = vmatpush1.msra.mxu0 0.0
      %3967 = vmatprep.subr.mxu0 0.0
      %3968 = vmatpush1.msra.mxu0 0.0
      %3969 = vmatprep.subr.mxu0 0.0
      %3970 = vmatpush1.msra.mxu0 0.0
      %3971 = vmatprep.subr.mxu0 0.0
      %3972 = vmatpush1.msra.mxu0 0.0
      %3973 = vmatprep.subr.mxu0 0.0
      %3974 = vmatpush1.msra.mxu0 0.0
      %3975 = vmatprep.subr.mxu0 0.0
      %3976 = vmatpush1.msra.mxu0 0.0
      %3977 = vmatprep.subr.mxu0 0.0
      %3978 = vmatpush1.msra.mxu0 0.0
      %3979 = vmatprep.subr.mxu0 0.0
      %3980 = vmatpush1.msra.mxu0 0.0
      %3981 = vmatprep.subr.mxu0 0.0
      %3982 = vmatpush1.msra.mxu0 0.0
      %3983 = vmatprep.subr.mxu0 0.0
      %3984 = vmatpush1.msra.mxu0 0.0
      %3985 = vmatprep.subr.mxu0 0.0
      %3986 = vmatpush1.msra.mxu0 0.0
      %3987 = vmatprep.subr.mxu0 0.0
      %3988 = vmatpush1.msra.mxu0 0.0
      %3989 = vmatprep.subr.mxu0 0.0
      %3990 = vmatpush1.msra.mxu0 0.0
      %3991 = vmatprep.subr.mxu0 0.0
      %3992 = vmatpush1.msra.mxu0 0.0
      %3993 = vmatprep.subr.mxu0 0.0
      %3994 = vmatpush1.msra.mxu0 0.0
      %3995 = vmatprep.subr.mxu0 0.0
      %3996 = vmatpush1.msra.mxu0 0.0
      %3997 = vmatprep.subr.mxu0 0.0
      %3998 = vmatpush1.msra.mxu0 0.0
      %3999 = vmatprep.subr.mxu0 0.0
      %4000 = vmatpush1.msra.mxu0 0.0
      %4001 = vmatprep.subr.mxu0 0.0
      %4002 = vmatpush1.msra.mxu0 0.0
      %4003 = vmatprep.subr.mxu0 0.0
      %4004 = vmatpush1.msra.mxu0 0.0
      %4005 = vmatprep.subr.mxu0 0.0
      %4006 = vmatpush1.msra.mxu0 0.0
      %4007 = vmatprep.subr.mxu0 0.0
      %4008 = vmatpush1.msra.mxu0 0.0
      %4009 = vmatprep.subr.mxu0 0.0
      %4010 = vmatpush1.msra.mxu0 0.0
      %4011 = vmatprep.subr.mxu0 0.0
      %4012 = vmatpush1.msra.mxu0 0.0
      %4013 = vmatprep.subr.mxu0 0.0
      %4014 = vmatpush1.msra.mxu0 0.0
      %4015 = vmatprep.subr.mxu0 0.0
      %4016 = vmatpush1.msra.mxu0 0.0
      %4017 = vmatprep.subr.mxu0 0.0
      %4018 = vmatpush1.msra.mxu0 0.0
      %4019 = vmatprep.mubr.f32.mxu0 0.0
      %4020 = vmatmul.mubr.f32.gmra.mrb[0].mxu0 %v3929
      %v4021 = vpop.f32.mrb[0].mxu0
      %v4022 = vadd.f32 0.0, %v4021
      %v4023 = vpop.f32.mrb[0].mxu0
      %4024 = vmatprep.mubr.f32.mxu0 0.0
      %4025 = vmatmul.mubr.f32.gmra.mrb[0].mxu0 %v3932
      %v4026 = vpop.f32.mrb[0].mxu0
      %v4027 = vadd.f32 0.0, %v4026
      %v4028 = vpop.f32.mrb[0].mxu0
      %4029 = vmatprep.mubr.f32.mxu0 0.0
      %4030 = vmatmul.mubr.f32.gmra.mrb[0].mxu0 %v3935
      %v4031 = vpop.f32.mrb[0].mxu0
      %v4032 = vadd.f32 0.0, %v4031
      %v4033 = vpop.f32.mrb[0].mxu0
      %4034 = vmatprep.mubr.f32.mxu0 0.0
      %4035 = vmatmul.mubr.f32.gmra.mrb[0].mxu0 %v3938
      %v4036 = vpop.f32.mrb[0].mxu0
      %v4037 = vadd.f32 0.0, %v4036
      %v4038 = vpop.f32.mrb[0].mxu0
      %4039 = vmatprep.mubr.f32.mxu0 0.0
      %4040 = vmatmul.mubr.f32.gmra.mrb[0].mxu0 %v3941
      %v4041 = vpop.f32.mrb[0].mxu0
      %v4042 = vadd.f32 0.0, %v4041
      %v4043 = vpop.f32.mrb[0].mxu0
      %4044 = vmatprep.mubr.f32.mxu0 0.0
      %4045 = vmatmul.mubr.f32.gmra.mrb[0].mxu0 %v3944
      %v4046 = vpop.f32.mrb[0].mxu0
      %v4047 = vadd.f32 0.0, %v4046
      %v4048 = vpop.f32.mrb[0].mxu0
      %4049 = vmatprep.mubr.f32.mxu0 0.0
      %4050 = vmatmul.mubr.f32.gmra.mrb[0].mxu0 %v3947
      %v4051 = vpop.f32.mrb[0].mxu0
      %v4052 = vadd.f32 0.0, %v4051
      %v4053 = vpop.f32.mrb[0].mxu0
      %4054 = vmatprep.mubr.f32.mxu0 0.0
      %4055 = vmatmul.mubr.f32.gmra.mrb[0].mxu0 %v3950
      %v4056 = vpop.f32.mrb[0].mxu0
      %v4057 = vadd.f32 0.0, %v4056
      %v4058 = vpop.f32.mrb[0].mxu0
      %4059 = vdwg.mxu0
      %v4060 = vadd.f32 %v3918, %v4022
      %v4061 = vadd.f32 %v3919, %v4027
      %v4062 = vadd.f32 %v3920, %v4032
      %v4063 = vadd.f32 %v3921, %v4037
      %v4064 = vadd.f32 %v3922, %v4042
      %v4065 = vadd.f32 %v3923, %v4047
      %v4066 = vadd.f32 %v3924, %v4052
      %v4067 = vadd.f32 %v3925, %v4057
      %4068 = vst.msk [vmem:[#allocation2] sm:$0xff] %vm451, %v4060
      %4069 = vst.msk [vmem:[#allocation2 + $0x8] sm:$0xff] %vm451, %v4061
      %4070 = vst.msk [vmem:[#allocation2 + $0x10] sm:$0xff] %vm451, %v4062
      %4071 = vst.msk [vmem:[#allocation2 + $0x18] sm:$0xff] %vm451, %v4063
      %4072 = vst.msk [vmem:[#allocation2 + $0x20] sm:$0xff] %vm451, %v4064
      %4073 = vst.msk [vmem:[#allocation2 + $0x28] sm:$0xff] %vm451, %v4065
      %4074 = vst.msk [vmem:[#allocation2 + $0x30] sm:$0xff] %vm451, %v4066
      %4075 = vst.msk [vmem:[#allocation2 + $0x38] sm:$0xff] %vm451, %v4067
      %v4076 = vld [vmem:[%s412 + $0x1] sm:$0xff]
      %v4077 = vld [vmem:[%s412 + $0x11] sm:$0xff]
      %v4078 = vld [vmem:[%s412 + $0x21] sm:$0xff]
      %v4079 = vld [vmem:[%s412 + $0x31] sm:$0xff]
      %v4080 = vld [vmem:[%s412 + $0x41] sm:$0xff]
      %v4081 = vld [vmem:[%s412 + $0x51] sm:$0xff]
      %v4082 = vld [vmem:[%s412 + $0x61] sm:$0xff]
      %v4083 = vld [vmem:[%s412 + $0x71] sm:$0xff]
      %v4084 = vld [vmem:[%s412 + $0x81] sm:$0xff]
      %v4085 = vld [vmem:[%s412 + $0x91] sm:$0xff]
      %4086 = vst.msk [vmem:[#allocation3] sm:$0xff] %vm451, %v4076
      %4087 = vst.msk [vmem:[#allocation3 + $0x8] sm:$0xff] %vm451, %v4077
      %4088 = vst.msk [vmem:[#allocation3 + $0x10] sm:$0xff] %vm451, %v4078
      %4089 = vst.msk [vmem:[#allocation3 + $0x18] sm:$0xff] %vm451, %v4079
      %4090 = vst.msk [vmem:[#allocation3 + $0x20] sm:$0xff] %vm451, %v4080
      %4091 = vst.msk [vmem:[#allocation3 + $0x28] sm:$0xff] %vm451, %v4081
      %4092 = vst.msk [vmem:[#allocation3 + $0x30] sm:$0xff] %vm451, %v4082
      %4093 = vst.msk [vmem:[#allocation3 + $0x38] sm:$0xff] %vm451, %v4083
      %4094 = vst.msk [vmem:[#allocation3 + $0x40] sm:$0xff] %vm451, %v4084
      %4095 = vst.msk [vmem:[#allocation3 + $0x48] sm:$0xff] %vm451, %v4085
      %v4096 = vld [vmem:[#allocation3] sm:$0xff]
      %v4097 = vld [vmem:[#allocation3 + $0x8] sm:$0xff]
      %v4098 = vld [vmem:[#allocation3 + $0x10] sm:$0xff]
      %v4099 = vld [vmem:[#allocation3 + $0x18] sm:$0xff]
      %v4100 = vld [vmem:[#allocation3 + $0x20] sm:$0xff]
      %v4101 = vld [vmem:[#allocation3 + $0x28] sm:$0xff]
      %v4102 = vld [vmem:[#allocation3 + $0x30] sm:$0xff]
      %v4103 = vld [vmem:[#allocation3 + $0x38] sm:$0xff]
      %v4104 = vld [vmem:[#allocation2] sm:$0xff]
      %v4105 = vld [vmem:[#allocation2 + $0x8] sm:$0xff]
      %v4106 = vld [vmem:[#allocation2 + $0x10] sm:$0xff]
      %v4107 = vld [vmem:[#allocation2 + $0x18] sm:$0xff]
      %v4108 = vld [vmem:[#allocation2 + $0x20] sm:$0xff]
      %v4109 = vld [vmem:[#allocation2 + $0x28] sm:$0xff]
      %v4110 = vld [vmem:[#allocation2 + $0x30] sm:$0xff]
      %v4111 = vld [vmem:[#allocation2 + $0x38] sm:$0xff]
      %v4112 = vld [vmem:[%s3594 + $0x4] sm:$0xf]
      %v4114 = vsel %vm451, %v4096, 0
      %v4117 = vsel %vm451, %v4097, 0
      %v4120 = vsel %vm451, %v4098, 0
      %v4123 = vsel %vm451, %v4099, 0
      %v4126 = vsel %vm451, %v4100, 0
      %v4129 = vsel %vm451, %v4101, 0
      %v4132 = vsel %vm451, %v4102, 0
      %v4135 = vsel %vm451, %v4103, 0
      %v4138 = vsel %vm521, %v4112, 0
      %4140 = vmatprep.subr.mxu0 0.0
      %4141 = vmatpush1.msra.mxu0 %v4138
      %4142 = vmatprep.subr.mxu0 0.0
      %4143 = vmatpush1.msra.mxu0 0.0
      %4144 = vmatprep.subr.mxu0 0.0
      %4145 = vmatpush1.msra.mxu0 0.0
      %4146 = vmatprep.subr.mxu0 0.0
      %4147 = vmatpush1.msra.mxu0 0.0
      %4148 = vmatprep.subr.mxu0 0.0
      %4149 = vmatpush1.msra.mxu0 0.0
      %4150 = vmatprep.subr.mxu0 0.0
      %4151 = vmatpush1.msra.mxu0 0.0
      %4152 = vmatprep.subr.mxu0 0.0
      %4153 = vmatpush1.msra.mxu0 0.0
      %4154 = vmatprep.subr.mxu0 0.0
      %4155 = vmatpush1.msra.mxu0 0.0
      %4156 = vmatprep.subr.mxu0 0.0
      %4157 = vmatpush1.msra.mxu0 0.0
      %4158 = vmatprep.subr.mxu0 0.0
      %4159 = vmatpush1.msra.mxu0 0.0
      %4160 = vmatprep.subr.mxu0 0.0
      %4161 = vmatpush1.msra.mxu0 0.0
      %4162 = vmatprep.subr.mxu0 0.0
      %4163 = vmatpush1.msra.mxu0 0.0
      %4164 = vmatprep.subr.mxu0 0.0
      %4165 = vmatpush1.msra.mxu0 0.0
      %4166 = vmatprep.subr.mxu0 0.0
      %4167 = vmatpush1.msra.mxu0 0.0
      %4168 = vmatprep.subr.mxu0 0.0
      %4169 = vmatpush1.msra.mxu0 0.0
      %4170 = vmatprep.subr.mxu0 0.0
      %4171 = vmatpush1.msra.mxu0 0.0
      %4172 = vmatprep.subr.mxu0 0.0
      %4173 = vmatpush1.msra.mxu0 0.0
      %4174 = vmatprep.subr.mxu0 0.0
      %4175 = vmatpush1.msra.mxu0 0.0
      %4176 = vmatprep.subr.mxu0 0.0
      %4177 = vmatpush1.msra.mxu0 0.0
      %4178 = vmatprep.subr.mxu0 0.0
      %4179 = vmatpush1.msra.mxu0 0.0
      %4180 = vmatprep.subr.mxu0 0.0
      %4181 = vmatpush1.msra.mxu0 0.0
      %4182 = vmatprep.subr.mxu0 0.0
      %4183 = vmatpush1.msra.mxu0 0.0
      %4184 = vmatprep.subr.mxu0 0.0
      %4185 = vmatpush1.msra.mxu0 0.0
      %4186 = vmatprep.subr.mxu0 0.0
      %4187 = vmatpush1.msra.mxu0 0.0
      %4188 = vmatprep.subr.mxu0 0.0
      %4189 = vmatpush1.msra.mxu0 0.0
      %4190 = vmatprep.subr.mxu0 0.0
      %4191 = vmatpush1.msra.mxu0 0.0
      %4192 = vmatprep.subr.mxu0 0.0
      %4193 = vmatpush1.msra.mxu0 0.0
      %4194 = vmatprep.subr.mxu0 0.0
      %4195 = vmatpush1.msra.mxu0 0.0
      %4196 = vmatprep.subr.mxu0 0.0
      %4197 = vmatpush1.msra.mxu0 0.0
      %4198 = vmatprep.subr.mxu0 0.0
      %4199 = vmatpush1.msra.mxu0 0.0
      %4200 = vmatprep.subr.mxu0 0.0
      %4201 = vmatpush1.msra.mxu0 0.0
      %4202 = vmatprep.subr.mxu0 0.0
      %4203 = vmatpush1.msra.mxu0 0.0
      %4204 = vmatprep.mubr.f32.mxu0 0.0
      %4205 = vmatmul.mubr.f32.gmra.mrb[0].mxu0 %v4114
      %v4206 = vpop.f32.mrb[0].mxu0
      %v4207 = vadd.f32 0.0, %v4206
      %v4208 = vpop.f32.mrb[0].mxu0
      %4209 = vmatprep.mubr.f32.mxu0 0.0
      %4210 = vmatmul.mubr.f32.gmra.mrb[0].mxu0 %v4117
      %v4211 = vpop.f32.mrb[0].mxu0
      %v4212 = vadd.f32 0.0, %v4211
      %v4213 = vpop.f32.mrb[0].mxu0
      %4214 = vmatprep.mubr.f32.mxu0 0.0
      %4215 = vmatmul.mubr.f32.gmra.mrb[0].mxu0 %v4120
      %v4216 = vpop.f32.mrb[0].mxu0
      %v4217 = vadd.f32 0.0, %v4216
      %v4218 = vpop.f32.mrb[0].mxu0
      %4219 = vmatprep.mubr.f32.mxu0 0.0
      %4220 = vmatmul.mubr.f32.gmra.mrb[0].mxu0 %v4123
      %v4221 = vpop.f32.mrb[0].mxu0
      %v4222 = vadd.f32 0.0, %v4221
      %v4223 = vpop.f32.mrb[0].mxu0
      %4224 = vmatprep.mubr.f32.mxu0 0.0
      %4225 = vmatmul.mubr.f32.gmra.mrb[0].mxu0 %v4126
      %v4226 = vpop.f32.mrb[0].mxu0
      %v4227 = vadd.f32 0.0, %v4226
      %v4228 = vpop.f32.mrb[0].mxu0
      %4229 = vmatprep.mubr.f32.mxu0 0.0
      %4230 = vmatmul.mubr.f32.gmra.mrb[0].mxu0 %v4129
      %v4231 = vpop.f32.mrb[0].mxu0
      %v4232 = vadd.f32 0.0, %v4231
      %v4233 = vpop.f32.mrb[0].mxu0
      %4234 = vmatprep.mubr.f32.mxu0 0.0
      %4235 = vmatmul.mubr.f32.gmra.mrb[0].mxu0 %v4132
      %v4236 = vpop.f32.mrb[0].mxu0
      %v4237 = vadd.f32 0.0, %v4236
      %v4238 = vpop.f32.mrb[0].mxu0
      %4239 = vmatprep.mubr.f32.mxu0 0.0
      %4240 = vmatmul.mubr.f32.gmra.mrb[0].mxu0 %v4135
      %v4241 = vpop.f32.mrb[0].mxu0
      %v4242 = vadd.f32 0.0, %v4241
      %v4243 = vpop.f32.mrb[0].mxu0
      %4244 = vdwg.mxu0
      %v4245 = vadd.f32 %v4104, %v4207
      %v4246 = vadd.f32 %v4105, %v4212
      %v4247 = vadd.f32 %v4106, %v4217
      %v4248 = vadd.f32 %v4107, %v4222
      %v4249 = vadd.f32 %v4108, %v4227
      %v4250 = vadd.f32 %v4109, %v4232
      %v4251 = vadd.f32 %v4110, %v4237
      %v4252 = vadd.f32 %v4111, %v4242
      %4253 = vst.msk [vmem:[#allocation2] sm:$0xff] %vm451, %v4245
      %4254 = vst.msk [vmem:[#allocation2 + $0x8] sm:$0xff] %vm451, %v4246
      %4255 = vst.msk [vmem:[#allocation2 + $0x10] sm:$0xff] %vm451, %v4247
      %4256 = vst.msk [vmem:[#allocation2 + $0x18] sm:$0xff] %vm451, %v4248
      %4257 = vst.msk [vmem:[#allocation2 + $0x20] sm:$0xff] %vm451, %v4249
      %4258 = vst.msk [vmem:[#allocation2 + $0x28] sm:$0xff] %vm451, %v4250
      %4259 = vst.msk [vmem:[#allocation2 + $0x30] sm:$0xff] %vm451, %v4251
      %4260 = vst.msk [vmem:[#allocation2 + $0x38] sm:$0xff] %vm451, %v4252
      %v4261 = vld [vmem:[%s646] sm:$0xff]
      %v4262 = vld [vmem:[%s646 + $0x8] sm:$0xff]
      %v4263 = vld [vmem:[%s646 + $0x10] sm:$0xff]
      %v4264 = vld [vmem:[%s646 + $0x18] sm:$0xff]
      %v4265 = vld [vmem:[%s646 + $0x20] sm:$0xff]
      %v4266 = vld [vmem:[%s646 + $0x28] sm:$0xff]
      %v4267 = vld [vmem:[%s646 + $0x30] sm:$0xff]
      %v4268 = vld [vmem:[%s646 + $0x38] sm:$0xff]
      %v4269 = vld [vmem:[#allocation2] sm:$0xff]
      %v4270 = vld [vmem:[#allocation2 + $0x8] sm:$0xff]
      %v4271 = vld [vmem:[#allocation2 + $0x10] sm:$0xff]
      %v4272 = vld [vmem:[#allocation2 + $0x18] sm:$0xff]
      %v4273 = vld [vmem:[#allocation2 + $0x20] sm:$0xff]
      %v4274 = vld [vmem:[#allocation2 + $0x28] sm:$0xff]
      %v4275 = vld [vmem:[#allocation2 + $0x30] sm:$0xff]
      %v4276 = vld [vmem:[#allocation2 + $0x38] sm:$0xff]
      %v4277 = vld [vmem:[%s3760 + $0x4] sm:$0xf]
      %v4279 = vsel %vm451, %v4261, 0
      %v4282 = vsel %vm451, %v4262, 0
      %v4285 = vsel %vm451, %v4263, 0
      %v4288 = vsel %vm451, %v4264, 0
      %v4291 = vsel %vm451, %v4265, 0
      %v4294 = vsel %vm451, %v4266, 0
      %v4297 = vsel %vm451, %v4267, 0
      %v4300 = vsel %vm451, %v4268, 0
      %v4303 = vsel %vm521, %v4277, 0
      %4305 = vmatprep.subr.mxu0 0.0
      %4306 = vmatpush1.msra.mxu0 %v4303
      %4307 = vmatprep.subr.mxu0 0.0
      %4308 = vmatpush1.msra.mxu0 0.0
      %4309 = vmatprep.subr.mxu0 0.0
      %4310 = vmatpush1.msra.mxu0 0.0
      %4311 = vmatprep.subr.mxu0 0.0
      %4312 = vmatpush1.msra.mxu0 0.0
      %4313 = vmatprep.subr.mxu0 0.0
      %4314 = vmatpush1.msra.mxu0 0.0
      %4315 = vmatprep.subr.mxu0 0.0
      %4316 = vmatpush1.msra.mxu0 0.0
      %4317 = vmatprep.subr.mxu0 0.0
      %4318 = vmatpush1.msra.mxu0 0.0
      %4319 = vmatprep.subr.mxu0 0.0
      %4320 = vmatpush1.msra.mxu0 0.0
      %4321 = vmatprep.subr.mxu0 0.0
      %4322 = vmatpush1.msra.mxu0 0.0
      %4323 = vmatprep.subr.mxu0 0.0
      %4324 = vmatpush1.msra.mxu0 0.0
      %4325 = vmatprep.subr.mxu0 0.0
      %4326 = vmatpush1.msra.mxu0 0.0
      %4327 = vmatprep.subr.mxu0 0.0
      %4328 = vmatpush1.msra.mxu0 0.0
      %4329 = vmatprep.subr.mxu0 0.0
      %4330 = vmatpush1.msra.mxu0 0.0
      %4331 = vmatprep.subr.mxu0 0.0
      %4332 = vmatpush1.msra.mxu0 0.0
      %4333 = vmatprep.subr.mxu0 0.0
      %4334 = vmatpush1.msra.mxu0 0.0
      %4335 = vmatprep.subr.mxu0 0.0
      %4336 = vmatpush1.msra.mxu0 0.0
      %4337 = vmatprep.subr.mxu0 0.0
      %4338 = vmatpush1.msra.mxu0 0.0
      %4339 = vmatprep.subr.mxu0 0.0
      %4340 = vmatpush1.msra.mxu0 0.0
      %4341 = vmatprep.subr.mxu0 0.0
      %4342 = vmatpush1.msra.mxu0 0.0
      %4343 = vmatprep.subr.mxu0 0.0
      %4344 = vmatpush1.msra.mxu0 0.0
      %4345 = vmatprep.subr.mxu0 0.0
      %4346 = vmatpush1.msra.mxu0 0.0
      %4347 = vmatprep.subr.mxu0 0.0
      %4348 = vmatpush1.msra.mxu0 0.0
      %4349 = vmatprep.subr.mxu0 0.0
      %4350 = vmatpush1.msra.mxu0 0.0
      %4351 = vmatprep.subr.mxu0 0.0
      %4352 = vmatpush1.msra.mxu0 0.0
      %4353 = vmatprep.subr.mxu0 0.0
      %4354 = vmatpush1.msra.mxu0 0.0
      %4355 = vmatprep.subr.mxu0 0.0
      %4356 = vmatpush1.msra.mxu0 0.0
      %4357 = vmatprep.subr.mxu0 0.0
      %4358 = vmatpush1.msra.mxu0 0.0
      %4359 = vmatprep.subr.mxu0 0.0
      %4360 = vmatpush1.msra.mxu0 0.0
      %4361 = vmatprep.subr.mxu0 0.0
      %4362 = vmatpush1.msra.mxu0 0.0
      %4363 = vmatprep.subr.mxu0 0.0
      %4364 = vmatpush1.msra.mxu0 0.0
      %4365 = vmatprep.subr.mxu0 0.0
      %4366 = vmatpush1.msra.mxu0 0.0
      %4367 = vmatprep.subr.mxu0 0.0
      %4368 = vmatpush1.msra.mxu0 0.0
      %4369 = vmatprep.mubr.f32.mxu0 0.0
      %4370 = vmatmul.mubr.f32.gmra.mrb[0].mxu0 %v4279
      %v4371 = vpop.f32.mrb[0].mxu0
      %v4372 = vadd.f32 0.0, %v4371
      %v4373 = vpop.f32.mrb[0].mxu0
      %4374 = vmatprep.mubr.f32.mxu0 0.0
      %4375 = vmatmul.mubr.f32.gmra.mrb[0].mxu0 %v4282
      %v4376 = vpop.f32.mrb[0].mxu0
      %v4377 = vadd.f32 0.0, %v4376
      %v4378 = vpop.f32.mrb[0].mxu0
      %4379 = vmatprep.mubr.f32.mxu0 0.0
      %4380 = vmatmul.mubr.f32.gmra.mrb[0].mxu0 %v4285
      %v4381 = vpop.f32.mrb[0].mxu0
      %v4382 = vadd.f32 0.0, %v4381
      %v4383 = vpop.f32.mrb[0].mxu0
      %4384 = vmatprep.mubr.f32.mxu0 0.0
      %4385 = vmatmul.mubr.f32.gmra.mrb[0].mxu0 %v4288
      %v4386 = vpop.f32.mrb[0].mxu0
      %v4387 = vadd.f32 0.0, %v4386
      %v4388 = vpop.f32.mrb[0].mxu0
      %4389 = vmatprep.mubr.f32.mxu0 0.0
      %4390 = vmatmul.mubr.f32.gmra.mrb[0].mxu0 %v4291
      %v4391 = vpop.f32.mrb[0].mxu0
      %v4392 = vadd.f32 0.0, %v4391
      %v4393 = vpop.f32.mrb[0].mxu0
      %4394 = vmatprep.mubr.f32.mxu0 0.0
      %4395 = vmatmul.mubr.f32.gmra.mrb[0].mxu0 %v4294
      %v4396 = vpop.f32.mrb[0].mxu0
      %v4397 = vadd.f32 0.0, %v4396
      %v4398 = vpop.f32.mrb[0].mxu0
      %4399 = vmatprep.mubr.f32.mxu0 0.0
      %4400 = vmatmul.mubr.f32.gmra.mrb[0].mxu0 %v4297
      %v4401 = vpop.f32.mrb[0].mxu0
      %v4402 = vadd.f32 0.0, %v4401
      %v4403 = vpop.f32.mrb[0].mxu0
      %4404 = vmatprep.mubr.f32.mxu0 0.0
      %4405 = vmatmul.mubr.f32.gmra.mrb[0].mxu0 %v4300
      %v4406 = vpop.f32.mrb[0].mxu0
      %v4407 = vadd.f32 0.0, %v4406
      %v4408 = vpop.f32.mrb[0].mxu0
      %4409 = vdwg.mxu0
      %v4410 = vadd.f32 %v4269, %v4372
      %v4411 = vadd.f32 %v4270, %v4377
      %v4412 = vadd.f32 %v4271, %v4382
      %v4413 = vadd.f32 %v4272, %v4387
      %v4414 = vadd.f32 %v4273, %v4392
      %v4415 = vadd.f32 %v4274, %v4397
      %v4416 = vadd.f32 %v4275, %v4402
      %v4417 = vadd.f32 %v4276, %v4407
      %4418 = vst.msk [vmem:[#allocation2] sm:$0xff] %vm451, %v4410
      %4419 = vst.msk [vmem:[#allocation2 + $0x8] sm:$0xff] %vm451, %v4411
      %4420 = vst.msk [vmem:[#allocation2 + $0x10] sm:$0xff] %vm451, %v4412
      %4421 = vst.msk [vmem:[#allocation2 + $0x18] sm:$0xff] %vm451, %v4413
      %4422 = vst.msk [vmem:[#allocation2 + $0x20] sm:$0xff] %vm451, %v4414
      %4423 = vst.msk [vmem:[#allocation2 + $0x28] sm:$0xff] %vm451, %v4415
      %4424 = vst.msk [vmem:[#allocation2 + $0x30] sm:$0xff] %vm451, %v4416
      %4425 = vst.msk [vmem:[#allocation2 + $0x38] sm:$0xff] %vm451, %v4417
      %v4426 = vld [vmem:[%s813] sm:$0xff]
      %v4427 = vld [vmem:[%s813 + $0x8] sm:$0xff]
      %v4428 = vld [vmem:[%s813 + $0x10] sm:$0xff]
      %v4429 = vld [vmem:[%s813 + $0x18] sm:$0xff]
      %v4430 = vld [vmem:[%s813 + $0x20] sm:$0xff]
      %v4431 = vld [vmem:[%s813 + $0x28] sm:$0xff]
      %v4432 = vld [vmem:[%s813 + $0x30] sm:$0xff]
      %v4433 = vld [vmem:[%s813 + $0x38] sm:$0xff]
      %v4434 = vld [vmem:[#allocation2] sm:$0xff]
      %v4435 = vld [vmem:[#allocation2 + $0x8] sm:$0xff]
      %v4436 = vld [vmem:[#allocation2 + $0x10] sm:$0xff]
      %v4437 = vld [vmem:[#allocation2 + $0x18] sm:$0xff]
      %v4438 = vld [vmem:[#allocation2 + $0x20] sm:$0xff]
      %v4439 = vld [vmem:[#allocation2 + $0x28] sm:$0xff]
      %v4440 = vld [vmem:[#allocation2 + $0x30] sm:$0xff]
      %v4441 = vld [vmem:[#allocation2 + $0x38] sm:$0xff]
      %v4442 = vld [vmem:[%s3926 + $0x4] sm:$0xf]
      %v4444 = vsel %vm451, %v4426, 0
      %v4447 = vsel %vm451, %v4427, 0
      %v4450 = vsel %vm451, %v4428, 0
      %v4453 = vsel %vm451, %v4429, 0
      %v4456 = vsel %vm451, %v4430, 0
      %v4459 = vsel %vm451, %v4431, 0
      %v4462 = vsel %vm451, %v4432, 0
      %v4465 = vsel %vm451, %v4433, 0
      %v4468 = vsel %vm521, %v4442, 0
      %4470 = vmatprep.subr.mxu0 0.0
      %4471 = vmatpush1.msra.mxu0 %v4468
      %4472 = vmatprep.subr.mxu0 0.0
      %4473 = vmatpush1.msra.mxu0 0.0
      %4474 = vmatprep.subr.mxu0 0.0
      %4475 = vmatpush1.msra.mxu0 0.0
      %4476 = vmatprep.subr.mxu0 0.0
      %4477 = vmatpush1.msra.mxu0 0.0
      %4478 = vmatprep.subr.mxu0 0.0
      %4479 = vmatpush1.msra.mxu0 0.0
      %4480 = vmatprep.subr.mxu0 0.0
      %4481 = vmatpush1.msra.mxu0 0.0
      %4482 = vmatprep.subr.mxu0 0.0
      %4483 = vmatpush1.msra.mxu0 0.0
      %4484 = vmatprep.subr.mxu0 0.0
      %4485 = vmatpush1.msra.mxu0 0.0
      %4486 = vmatprep.subr.mxu0 0.0
      %4487 = vmatpush1.msra.mxu0 0.0
      %4488 = vmatprep.subr.mxu0 0.0
      %4489 = vmatpush1.msra.mxu0 0.0
      %4490 = vmatprep.subr.mxu0 0.0
      %4491 = vmatpush1.msra.mxu0 0.0
      %4492 = vmatprep.subr.mxu0 0.0
      %4493 = vmatpush1.msra.mxu0 0.0
      %4494 = vmatprep.subr.mxu0 0.0
      %4495 = vmatpush1.msra.mxu0 0.0
      %4496 = vmatprep.subr.mxu0 0.0
      %4497 = vmatpush1.msra.mxu0 0.0
      %4498 = vmatprep.subr.mxu0 0.0
      %4499 = vmatpush1.msra.mxu0 0.0
      %4500 = vmatprep.subr.mxu0 0.0
      %4501 = vmatpush1.msra.mxu0 0.0
      %4502 = vmatprep.subr.mxu0 0.0
      %4503 = vmatpush1.msra.mxu0 0.0
      %4504 = vmatprep.subr.mxu0 0.0
      %4505 = vmatpush1.msra.mxu0 0.0
      %4506 = vmatprep.subr.mxu0 0.0
      %4507 = vmatpush1.msra.mxu0 0.0
      %4508 = vmatprep.subr.mxu0 0.0
      %4509 = vmatpush1.msra.mxu0 0.0
      %4510 = vmatprep.subr.mxu0 0.0
      %4511 = vmatpush1.msra.mxu0 0.0
      %4512 = vmatprep.subr.mxu0 0.0
      %4513 = vmatpush1.msra.mxu0 0.0
      %4514 = vmatprep.subr.mxu0 0.0
      %4515 = vmatpush1.msra.mxu0 0.0
      %4516 = vmatprep.subr.mxu0 0.0
      %4517 = vmatpush1.msra.mxu0 0.0
      %4518 = vmatprep.subr.mxu0 0.0
      %4519 = vmatpush1.msra.mxu0 0.0
      %4520 = vmatprep.subr.mxu0 0.0
      %4521 = vmatpush1.msra.mxu0 0.0
      %4522 = vmatprep.subr.mxu0 0.0
      %4523 = vmatpush1.msra.mxu0 0.0
      %4524 = vmatprep.subr.mxu0 0.0
      %4525 = vmatpush1.msra.mxu0 0.0
      %4526 = vmatprep.subr.mxu0 0.0
      %4527 = vmatpush1.msra.mxu0 0.0
      %4528 = vmatprep.subr.mxu0 0.0
      %4529 = vmatpush1.msra.mxu0 0.0
      %4530 = vmatprep.subr.mxu0 0.0
      %4531 = vmatpush1.msra.mxu0 0.0
      %4532 = vmatprep.subr.mxu0 0.0
      %4533 = vmatpush1.msra.mxu0 0.0
      %4534 = vmatprep.mubr.f32.mxu0 0.0
      %4535 = vmatmul.mubr.f32.gmra.mrb[0].mxu0 %v4444
      %v4536 = vpop.f32.mrb[0].mxu0
      %v4537 = vadd.f32 0.0, %v4536
      %v4538 = vpop.f32.mrb[0].mxu0
      %4539 = vmatprep.mubr.f32.mxu0 0.0
      %4540 = vmatmul.mubr.f32.gmra.mrb[0].mxu0 %v4447
      %v4541 = vpop.f32.mrb[0].mxu0
      %v4542 = vadd.f32 0.0, %v4541
      %v4543 = vpop.f32.mrb[0].mxu0
      %4544 = vmatprep.mubr.f32.mxu0 0.0
      %4545 = vmatmul.mubr.f32.gmra.mrb[0].mxu0 %v4450
      %v4546 = vpop.f32.mrb[0].mxu0
      %v4547 = vadd.f32 0.0, %v4546
      %v4548 = vpop.f32.mrb[0].mxu0
      %4549 = vmatprep.mubr.f32.mxu0 0.0
      %4550 = vmatmul.mubr.f32.gmra.mrb[0].mxu0 %v4453
      %v4551 = vpop.f32.mrb[0].mxu0
      %v4552 = vadd.f32 0.0, %v4551
      %v4553 = vpop.f32.mrb[0].mxu0
      %4554 = vmatprep.mubr.f32.mxu0 0.0
      %4555 = vmatmul.mubr.f32.gmra.mrb[0].mxu0 %v4456
      %v4556 = vpop.f32.mrb[0].mxu0
      %v4557 = vadd.f32 0.0, %v4556
      %v4558 = vpop.f32.mrb[0].mxu0
      %4559 = vmatprep.mubr.f32.mxu0 0.0
      %4560 = vmatmul.mubr.f32.gmra.mrb[0].mxu0 %v4459
      %v4561 = vpop.f32.mrb[0].mxu0
      %v4562 = vadd.f32 0.0, %v4561
      %v4563 = vpop.f32.mrb[0].mxu0
      %4564 = vmatprep.mubr.f32.mxu0 0.0
      %4565 = vmatmul.mubr.f32.gmra.mrb[0].mxu0 %v4462
      %v4566 = vpop.f32.mrb[0].mxu0
      %v4567 = vadd.f32 0.0, %v4566
      %v4568 = vpop.f32.mrb[0].mxu0
      %4569 = vmatprep.mubr.f32.mxu0 0.0
      %4570 = vmatmul.mubr.f32.gmra.mrb[0].mxu0 %v4465
      %v4571 = vpop.f32.mrb[0].mxu0
      %v4572 = vadd.f32 0.0, %v4571
      %v4573 = vpop.f32.mrb[0].mxu0
      %4574 = vdwg.mxu0
      %v4575 = vadd.f32 %v4434, %v4537
      %v4576 = vadd.f32 %v4435, %v4542
      %v4577 = vadd.f32 %v4436, %v4547
      %v4578 = vadd.f32 %v4437, %v4552
      %v4579 = vadd.f32 %v4438, %v4557
      %v4580 = vadd.f32 %v4439, %v4562
      %v4581 = vadd.f32 %v4440, %v4567
      %v4582 = vadd.f32 %v4441, %v4572
      %4583 = vst.msk [vmem:[#allocation2] sm:$0xff] %vm451, %v4575
      %4584 = vst.msk [vmem:[#allocation2 + $0x8] sm:$0xff] %vm451, %v4576
      %4585 = vst.msk [vmem:[#allocation2 + $0x10] sm:$0xff] %vm451, %v4577
      %4586 = vst.msk [vmem:[#allocation2 + $0x18] sm:$0xff] %vm451, %v4578
      %4587 = vst.msk [vmem:[#allocation2 + $0x20] sm:$0xff] %vm451, %v4579
      %4588 = vst.msk [vmem:[#allocation2 + $0x28] sm:$0xff] %vm451, %v4580
      %4589 = vst.msk [vmem:[#allocation2 + $0x30] sm:$0xff] %vm451, %v4581
      %4590 = vst.msk [vmem:[#allocation2 + $0x38] sm:$0xff] %vm451, %v4582
      %v4591 = vld [vmem:[%s412 + $0x2] sm:$0xff]
      %v4592 = vld [vmem:[%s412 + $0x12] sm:$0xff]
      %v4593 = vld [vmem:[%s412 + $0x22] sm:$0xff]
      %v4594 = vld [vmem:[%s412 + $0x32] sm:$0xff]
      %v4595 = vld [vmem:[%s412 + $0x42] sm:$0xff]
      %v4596 = vld [vmem:[%s412 + $0x52] sm:$0xff]
      %v4597 = vld [vmem:[%s412 + $0x62] sm:$0xff]
      %v4598 = vld [vmem:[%s412 + $0x72] sm:$0xff]
      %v4599 = vld [vmem:[%s412 + $0x82] sm:$0xff]
      %v4600 = vld [vmem:[%s412 + $0x92] sm:$0xff]
      %4601 = vst.msk [vmem:[#allocation3] sm:$0xff] %vm451, %v4591
      %4602 = vst.msk [vmem:[#allocation3 + $0x8] sm:$0xff] %vm451, %v4592
      %4603 = vst.msk [vmem:[#allocation3 + $0x10] sm:$0xff] %vm451, %v4593
      %4604 = vst.msk [vmem:[#allocation3 + $0x18] sm:$0xff] %vm451, %v4594
      %4605 = vst.msk [vmem:[#allocation3 + $0x20] sm:$0xff] %vm451, %v4595
      %4606 = vst.msk [vmem:[#allocation3 + $0x28] sm:$0xff] %vm451, %v4596
      %4607 = vst.msk [vmem:[#allocation3 + $0x30] sm:$0xff] %vm451, %v4597
      %4608 = vst.msk [vmem:[#allocation3 + $0x38] sm:$0xff] %vm451, %v4598
      %4609 = vst.msk [vmem:[#allocation3 + $0x40] sm:$0xff] %vm451, %v4599
      %4610 = vst.msk [vmem:[#allocation3 + $0x48] sm:$0xff] %vm451, %v4600
      %v4611 = vld [vmem:[#allocation3] sm:$0xff]
      %v4612 = vld [vmem:[#allocation3 + $0x8] sm:$0xff]
      %v4613 = vld [vmem:[#allocation3 + $0x10] sm:$0xff]
      %v4614 = vld [vmem:[#allocation3 + $0x18] sm:$0xff]
      %v4615 = vld [vmem:[#allocation3 + $0x20] sm:$0xff]
      %v4616 = vld [vmem:[#allocation3 + $0x28] sm:$0xff]
      %v4617 = vld [vmem:[#allocation3 + $0x30] sm:$0xff]
      %v4618 = vld [vmem:[#allocation3 + $0x38] sm:$0xff]
      %v4619 = vld [vmem:[#allocation2] sm:$0xff]
      %v4620 = vld [vmem:[#allocation2 + $0x8] sm:$0xff]
      %v4621 = vld [vmem:[#allocation2 + $0x10] sm:$0xff]
      %v4622 = vld [vmem:[#allocation2 + $0x18] sm:$0xff]
      %v4623 = vld [vmem:[#allocation2 + $0x20] sm:$0xff]
      %v4624 = vld [vmem:[#allocation2 + $0x28] sm:$0xff]
      %v4625 = vld [vmem:[#allocation2 + $0x30] sm:$0xff]
      %v4626 = vld [vmem:[#allocation2 + $0x38] sm:$0xff]
      %v4627 = vld [vmem:[%s3594 + $0x8] sm:$0xf]
      %v4629 = vsel %vm451, %v4611, 0
      %v4632 = vsel %vm451, %v4612, 0
      %v4635 = vsel %vm451, %v4613, 0
      %v4638 = vsel %vm451, %v4614, 0
      %v4641 = vsel %vm451, %v4615, 0
      %v4644 = vsel %vm451, %v4616, 0
      %v4647 = vsel %vm451, %v4617, 0
      %v4650 = vsel %vm451, %v4618, 0
      %v4653 = vsel %vm521, %v4627, 0
      %4655 = vmatprep.subr.mxu0 0.0
      %4656 = vmatpush1.msra.mxu0 %v4653
      %4657 = vmatprep.subr.mxu0 0.0
      %4658 = vmatpush1.msra.mxu0 0.0
      %4659 = vmatprep.subr.mxu0 0.0
      %4660 = vmatpush1.msra.mxu0 0.0
      %4661 = vmatprep.subr.mxu0 0.0
      %4662 = vmatpush1.msra.mxu0 0.0
      %4663 = vmatprep.subr.mxu0 0.0
      %4664 = vmatpush1.msra.mxu0 0.0
      %4665 = vmatprep.subr.mxu0 0.0
      %4666 = vmatpush1.msra.mxu0 0.0
      %4667 = vmatprep.subr.mxu0 0.0
      %4668 = vmatpush1.msra.mxu0 0.0
      %4669 = vmatprep.subr.mxu0 0.0
      %4670 = vmatpush1.msra.mxu0 0.0
      %4671 = vmatprep.subr.mxu0 0.0
      %4672 = vmatpush1.msra.mxu0 0.0
      %4673 = vmatprep.subr.mxu0 0.0
      %4674 = vmatpush1.msra.mxu0 0.0
      %4675 = vmatprep.subr.mxu0 0.0
      %4676 = vmatpush1.msra.mxu0 0.0
      %4677 = vmatprep.subr.mxu0 0.0
      %4678 = vmatpush1.msra.mxu0 0.0
      %4679 = vmatprep.subr.mxu0 0.0
      %4680 = vmatpush1.msra.mxu0 0.0
      %4681 = vmatprep.subr.mxu0 0.0
      %4682 = vmatpush1.msra.mxu0 0.0
      %4683 = vmatprep.subr.mxu0 0.0
      %4684 = vmatpush1.msra.mxu0 0.0
      %4685 = vmatprep.subr.mxu0 0.0
      %4686 = vmatpush1.msra.mxu0 0.0
      %4687 = vmatprep.subr.mxu0 0.0
      %4688 = vmatpush1.msra.mxu0 0.0
      %4689 = vmatprep.subr.mxu0 0.0
      %4690 = vmatpush1.msra.mxu0 0.0
      %4691 = vmatprep.subr.mxu0 0.0
      %4692 = vmatpush1.msra.mxu0 0.0
      %4693 = vmatprep.subr.mxu0 0.0
      %4694 = vmatpush1.msra.mxu0 0.0
      %4695 = vmatprep.subr.mxu0 0.0
      %4696 = vmatpush1.msra.mxu0 0.0
      %4697 = vmatprep.subr.mxu0 0.0
      %4698 = vmatpush1.msra.mxu0 0.0
      %4699 = vmatprep.subr.mxu0 0.0
      %4700 = vmatpush1.msra.mxu0 0.0
      %4701 = vmatprep.subr.mxu0 0.0
      %4702 = vmatpush1.msra.mxu0 0.0
      %4703 = vmatprep.subr.mxu0 0.0
      %4704 = vmatpush1.msra.mxu0 0.0
      %4705 = vmatprep.subr.mxu0 0.0
      %4706 = vmatpush1.msra.mxu0 0.0
      %4707 = vmatprep.subr.mxu0 0.0
      %4708 = vmatpush1.msra.mxu0 0.0
      %4709 = vmatprep.subr.mxu0 0.0
      %4710 = vmatpush1.msra.mxu0 0.0
      %4711 = vmatprep.subr.mxu0 0.0
      %4712 = vmatpush1.msra.mxu0 0.0
      %4713 = vmatprep.subr.mxu0 0.0
      %4714 = vmatpush1.msra.mxu0 0.0
      %4715 = vmatprep.subr.mxu0 0.0
      %4716 = vmatpush1.msra.mxu0 0.0
      %4717 = vmatprep.subr.mxu0 0.0
      %4718 = vmatpush1.msra.mxu0 0.0
      %4719 = vmatprep.mubr.f32.mxu0 0.0
      %4720 = vmatmul.mubr.f32.gmra.mrb[0].mxu0 %v4629
      %v4721 = vpop.f32.mrb[0].mxu0
      %v4722 = vadd.f32 0.0, %v4721
      %v4723 = vpop.f32.mrb[0].mxu0
      %4724 = vmatprep.mubr.f32.mxu0 0.0
      %4725 = vmatmul.mubr.f32.gmra.mrb[0].mxu0 %v4632
      %v4726 = vpop.f32.mrb[0].mxu0
      %v4727 = vadd.f32 0.0, %v4726
      %v4728 = vpop.f32.mrb[0].mxu0
      %4729 = vmatprep.mubr.f32.mxu0 0.0
      %4730 = vmatmul.mubr.f32.gmra.mrb[0].mxu0 %v4635
      %v4731 = vpop.f32.mrb[0].mxu0
      %v4732 = vadd.f32 0.0, %v4731
      %v4733 = vpop.f32.mrb[0].mxu0
      %4734 = vmatprep.mubr.f32.mxu0 0.0
      %4735 = vmatmul.mubr.f32.gmra.mrb[0].mxu0 %v4638
      %v4736 = vpop.f32.mrb[0].mxu0
      %v4737 = vadd.f32 0.0, %v4736
      %v4738 = vpop.f32.mrb[0].mxu0
      %4739 = vmatprep.mubr.f32.mxu0 0.0
      %4740 = vmatmul.mubr.f32.gmra.mrb[0].mxu0 %v4641
      %v4741 = vpop.f32.mrb[0].mxu0
      %v4742 = vadd.f32 0.0, %v4741
      %v4743 = vpop.f32.mrb[0].mxu0
      %4744 = vmatprep.mubr.f32.mxu0 0.0
      %4745 = vmatmul.mubr.f32.gmra.mrb[0].mxu0 %v4644
      %v4746 = vpop.f32.mrb[0].mxu0
      %v4747 = vadd.f32 0.0, %v4746
      %v4748 = vpop.f32.mrb[0].mxu0
      %4749 = vmatprep.mubr.f32.mxu0 0.0
      %4750 = vmatmul.mubr.f32.gmra.mrb[0].mxu0 %v4647
      %v4751 = vpop.f32.mrb[0].mxu0
      %v4752 = vadd.f32 0.0, %v4751
      %v4753 = vpop.f32.mrb[0].mxu0
      %4754 = vmatprep.mubr.f32.mxu0 0.0
      %4755 = vmatmul.mubr.f32.gmra.mrb[0].mxu0 %v4650
      %v4756 = vpop.f32.mrb[0].mxu0
      %v4757 = vadd.f32 0.0, %v4756
      %v4758 = vpop.f32.mrb[0].mxu0
      %4759 = vdwg.mxu0
      %v4760 = vadd.f32 %v4619, %v4722
      %v4761 = vadd.f32 %v4620, %v4727
      %v4762 = vadd.f32 %v4621, %v4732
      %v4763 = vadd.f32 %v4622, %v4737
      %v4764 = vadd.f32 %v4623, %v4742
      %v4765 = vadd.f32 %v4624, %v4747
      %v4766 = vadd.f32 %v4625, %v4752
      %v4767 = vadd.f32 %v4626, %v4757
      %4768 = vst.msk [vmem:[#allocation2] sm:$0xff] %vm451, %v4760
      %4769 = vst.msk [vmem:[#allocation2 + $0x8] sm:$0xff] %vm451, %v4761
      %4770 = vst.msk [vmem:[#allocation2 + $0x10] sm:$0xff] %vm451, %v4762
      %4771 = vst.msk [vmem:[#allocation2 + $0x18] sm:$0xff] %vm451, %v4763
      %4772 = vst.msk [vmem:[#allocation2 + $0x20] sm:$0xff] %vm451, %v4764
      %4773 = vst.msk [vmem:[#allocation2 + $0x28] sm:$0xff] %vm451, %v4765
      %4774 = vst.msk [vmem:[#allocation2 + $0x30] sm:$0xff] %vm451, %v4766
      %4775 = vst.msk [vmem:[#allocation2 + $0x38] sm:$0xff] %vm451, %v4767
      %v4776 = vld [vmem:[%s646] sm:$0xff]
      %v4777 = vld [vmem:[%s646 + $0x8] sm:$0xff]
      %v4778 = vld [vmem:[%s646 + $0x10] sm:$0xff]
      %v4779 = vld [vmem:[%s646 + $0x18] sm:$0xff]
      %v4780 = vld [vmem:[%s646 + $0x20] sm:$0xff]
      %v4781 = vld [vmem:[%s646 + $0x28] sm:$0xff]
      %v4782 = vld [vmem:[%s646 + $0x30] sm:$0xff]
      %v4783 = vld [vmem:[%s646 + $0x38] sm:$0xff]
      %v4784 = vld [vmem:[#allocation2] sm:$0xff]
      %v4785 = vld [vmem:[#allocation2 + $0x8] sm:$0xff]
      %v4786 = vld [vmem:[#allocation2 + $0x10] sm:$0xff]
      %v4787 = vld [vmem:[#allocation2 + $0x18] sm:$0xff]
      %v4788 = vld [vmem:[#allocation2 + $0x20] sm:$0xff]
      %v4789 = vld [vmem:[#allocation2 + $0x28] sm:$0xff]
      %v4790 = vld [vmem:[#allocation2 + $0x30] sm:$0xff]
      %v4791 = vld [vmem:[#allocation2 + $0x38] sm:$0xff]
      %v4792 = vld [vmem:[%s3760 + $0x8] sm:$0xf]
      %v4794 = vsel %vm451, %v4776, 0
      %v4797 = vsel %vm451, %v4777, 0
      %v4800 = vsel %vm451, %v4778, 0
      %v4803 = vsel %vm451, %v4779, 0
      %v4806 = vsel %vm451, %v4780, 0
      %v4809 = vsel %vm451, %v4781, 0
      %v4812 = vsel %vm451, %v4782, 0
      %v4815 = vsel %vm451, %v4783, 0
      %v4818 = vsel %vm521, %v4792, 0
      %4820 = vmatprep.subr.mxu0 0.0
      %4821 = vmatpush1.msra.mxu0 %v4818
      %4822 = vmatprep.subr.mxu0 0.0
      %4823 = vmatpush1.msra.mxu0 0.0
      %4824 = vmatprep.subr.mxu0 0.0
      %4825 = vmatpush1.msra.mxu0 0.0
      %4826 = vmatprep.subr.mxu0 0.0
      %4827 = vmatpush1.msra.mxu0 0.0
      %4828 = vmatprep.subr.mxu0 0.0
      %4829 = vmatpush1.msra.mxu0 0.0
      %4830 = vmatprep.subr.mxu0 0.0
      %4831 = vmatpush1.msra.mxu0 0.0
      %4832 = vmatprep.subr.mxu0 0.0
      %4833 = vmatpush1.msra.mxu0 0.0
      %4834 = vmatprep.subr.mxu0 0.0
      %4835 = vmatpush1.msra.mxu0 0.0
      %4836 = vmatprep.subr.mxu0 0.0
      %4837 = vmatpush1.msra.mxu0 0.0
      %4838 = vmatprep.subr.mxu0 0.0
      %4839 = vmatpush1.msra.mxu0 0.0
      %4840 = vmatprep.subr.mxu0 0.0
      %4841 = vmatpush1.msra.mxu0 0.0
      %4842 = vmatprep.subr.mxu0 0.0
      %4843 = vmatpush1.msra.mxu0 0.0
      %4844 = vmatprep.subr.mxu0 0.0
      %4845 = vmatpush1.msra.mxu0 0.0
      %4846 = vmatprep.subr.mxu0 0.0
      %4847 = vmatpush1.msra.mxu0 0.0
      %4848 = vmatprep.subr.mxu0 0.0
      %4849 = vmatpush1.msra.mxu0 0.0
      %4850 = vmatprep.subr.mxu0 0.0
      %4851 = vmatpush1.msra.mxu0 0.0
      %4852 = vmatprep.subr.mxu0 0.0
      %4853 = vmatpush1.msra.mxu0 0.0
      %4854 = vmatprep.subr.mxu0 0.0
      %4855 = vmatpush1.msra.mxu0 0.0
      %4856 = vmatprep.subr.mxu0 0.0
      %4857 = vmatpush1.msra.mxu0 0.0
      %4858 = vmatprep.subr.mxu0 0.0
      %4859 = vmatpush1.msra.mxu0 0.0
      %4860 = vmatprep.subr.mxu0 0.0
      %4861 = vmatpush1.msra.mxu0 0.0
      %4862 = vmatprep.subr.mxu0 0.0
      %4863 = vmatpush1.msra.mxu0 0.0
      %4864 = vmatprep.subr.mxu0 0.0
      %4865 = vmatpush1.msra.mxu0 0.0
      %4866 = vmatprep.subr.mxu0 0.0
      %4867 = vmatpush1.msra.mxu0 0.0
      %4868 = vmatprep.subr.mxu0 0.0
      %4869 = vmatpush1.msra.mxu0 0.0
      %4870 = vmatprep.subr.mxu0 0.0
      %4871 = vmatpush1.msra.mxu0 0.0
      %4872 = vmatprep.subr.mxu0 0.0
      %4873 = vmatpush1.msra.mxu0 0.0
      %4874 = vmatprep.subr.mxu0 0.0
      %4875 = vmatpush1.msra.mxu0 0.0
      %4876 = vmatprep.subr.mxu0 0.0
      %4877 = vmatpush1.msra.mxu0 0.0
      %4878 = vmatprep.subr.mxu0 0.0
      %4879 = vmatpush1.msra.mxu0 0.0
      %4880 = vmatprep.subr.mxu0 0.0
      %4881 = vmatpush1.msra.mxu0 0.0
      %4882 = vmatprep.subr.mxu0 0.0
      %4883 = vmatpush1.msra.mxu0 0.0
      %4884 = vmatprep.mubr.f32.mxu0 0.0
      %4885 = vmatmul.mubr.f32.gmra.mrb[0].mxu0 %v4794
      %v4886 = vpop.f32.mrb[0].mxu0
      %v4887 = vadd.f32 0.0, %v4886
      %v4888 = vpop.f32.mrb[0].mxu0
      %4889 = vmatprep.mubr.f32.mxu0 0.0
      %4890 = vmatmul.mubr.f32.gmra.mrb[0].mxu0 %v4797
      %v4891 = vpop.f32.mrb[0].mxu0
      %v4892 = vadd.f32 0.0, %v4891
      %v4893 = vpop.f32.mrb[0].mxu0
      %4894 = vmatprep.mubr.f32.mxu0 0.0
      %4895 = vmatmul.mubr.f32.gmra.mrb[0].mxu0 %v4800
      %v4896 = vpop.f32.mrb[0].mxu0
      %v4897 = vadd.f32 0.0, %v4896
      %v4898 = vpop.f32.mrb[0].mxu0
      %4899 = vmatprep.mubr.f32.mxu0 0.0
      %4900 = vmatmul.mubr.f32.gmra.mrb[0].mxu0 %v4803
      %v4901 = vpop.f32.mrb[0].mxu0
      %v4902 = vadd.f32 0.0, %v4901
      %v4903 = vpop.f32.mrb[0].mxu0
      %4904 = vmatprep.mubr.f32.mxu0 0.0
      %4905 = vmatmul.mubr.f32.gmra.mrb[0].mxu0 %v4806
      %v4906 = vpop.f32.mrb[0].mxu0
      %v4907 = vadd.f32 0.0, %v4906
      %v4908 = vpop.f32.mrb[0].mxu0
      %4909 = vmatprep.mubr.f32.mxu0 0.0
      %4910 = vmatmul.mubr.f32.gmra.mrb[0].mxu0 %v4809
      %v4911 = vpop.f32.mrb[0].mxu0
      %v4912 = vadd.f32 0.0, %v4911
      %v4913 = vpop.f32.mrb[0].mxu0
      %4914 = vmatprep.mubr.f32.mxu0 0.0
      %4915 = vmatmul.mubr.f32.gmra.mrb[0].mxu0 %v4812
      %v4916 = vpop.f32.mrb[0].mxu0
      %v4917 = vadd.f32 0.0, %v4916
      %v4918 = vpop.f32.mrb[0].mxu0
      %4919 = vmatprep.mubr.f32.mxu0 0.0
      %4920 = vmatmul.mubr.f32.gmra.mrb[0].mxu0 %v4815
      %v4921 = vpop.f32.mrb[0].mxu0
      %v4922 = vadd.f32 0.0, %v4921
      %v4923 = vpop.f32.mrb[0].mxu0
      %4924 = vdwg.mxu0
      %v4925 = vadd.f32 %v4784, %v4887
      %v4926 = vadd.f32 %v4785, %v4892
      %v4927 = vadd.f32 %v4786, %v4897
      %v4928 = vadd.f32 %v4787, %v4902
      %v4929 = vadd.f32 %v4788, %v4907
      %v4930 = vadd.f32 %v4789, %v4912
      %v4931 = vadd.f32 %v4790, %v4917
      %v4932 = vadd.f32 %v4791, %v4922
      %4933 = vst.msk [vmem:[#allocation2] sm:$0xff] %vm451, %v4925
      %4934 = vst.msk [vmem:[#allocation2 + $0x8] sm:$0xff] %vm451, %v4926
      %4935 = vst.msk [vmem:[#allocation2 + $0x10] sm:$0xff] %vm451, %v4927
      %4936 = vst.msk [vmem:[#allocation2 + $0x18] sm:$0xff] %vm451, %v4928
      %4937 = vst.msk [vmem:[#allocation2 + $0x20] sm:$0xff] %vm451, %v4929
      %4938 = vst.msk [vmem:[#allocation2 + $0x28] sm:$0xff] %vm451, %v4930
      %4939 = vst.msk [vmem:[#allocation2 + $0x30] sm:$0xff] %vm451, %v4931
      %4940 = vst.msk [vmem:[#allocation2 + $0x38] sm:$0xff] %vm451, %v4932
      %v4941 = vld [vmem:[%s813] sm:$0xff]
      %v4942 = vld [vmem:[%s813 + $0x8] sm:$0xff]
      %v4943 = vld [vmem:[%s813 + $0x10] sm:$0xff]
      %v4944 = vld [vmem:[%s813 + $0x18] sm:$0xff]
      %v4945 = vld [vmem:[%s813 + $0x20] sm:$0xff]
      %v4946 = vld [vmem:[%s813 + $0x28] sm:$0xff]
      %v4947 = vld [vmem:[%s813 + $0x30] sm:$0xff]
      %v4948 = vld [vmem:[%s813 + $0x38] sm:$0xff]
      %v4949 = vld [vmem:[#allocation2] sm:$0xff]
      %v4950 = vld [vmem:[#allocation2 + $0x8] sm:$0xff]
      %v4951 = vld [vmem:[#allocation2 + $0x10] sm:$0xff]
      %v4952 = vld [vmem:[#allocation2 + $0x18] sm:$0xff]
      %v4953 = vld [vmem:[#allocation2 + $0x20] sm:$0xff]
      %v4954 = vld [vmem:[#allocation2 + $0x28] sm:$0xff]
      %v4955 = vld [vmem:[#allocation2 + $0x30] sm:$0xff]
      %v4956 = vld [vmem:[#allocation2 + $0x38] sm:$0xff]
      %v4957 = vld [vmem:[%s3926 + $0x8] sm:$0xf]
      %v4959 = vsel %vm451, %v4941, 0
      %v4962 = vsel %vm451, %v4942, 0
      %v4965 = vsel %vm451, %v4943, 0
      %v4968 = vsel %vm451, %v4944, 0
      %v4971 = vsel %vm451, %v4945, 0
      %v4974 = vsel %vm451, %v4946, 0
      %v4977 = vsel %vm451, %v4947, 0
      %v4980 = vsel %vm451, %v4948, 0
      %v4983 = vsel %vm521, %v4957, 0
      %4985 = vmatprep.subr.mxu0 0.0
      %4986 = vmatpush1.msra.mxu0 %v4983
      %4987 = vmatprep.subr.mxu0 0.0
      %4988 = vmatpush1.msra.mxu0 0.0
      %4989 = vmatprep.subr.mxu0 0.0
      %4990 = vmatpush1.msra.mxu0 0.0
      %4991 = vmatprep.subr.mxu0 0.0
      %4992 = vmatpush1.msra.mxu0 0.0
      %4993 = vmatprep.subr.mxu0 0.0
      %4994 = vmatpush1.msra.mxu0 0.0
      %4995 = vmatprep.subr.mxu0 0.0
      %4996 = vmatpush1.msra.mxu0 0.0
      %4997 = vmatprep.subr.mxu0 0.0
      %4998 = vmatpush1.msra.mxu0 0.0
      %4999 = vmatprep.subr.mxu0 0.0
      %5000 = vmatpush1.msra.mxu0 0.0
      %5001 = vmatprep.subr.mxu0 0.0
      %5002 = vmatpush1.msra.mxu0 0.0
      %5003 = vmatprep.subr.mxu0 0.0
      %5004 = vmatpush1.msra.mxu0 0.0
      %5005 = vmatprep.subr.mxu0 0.0
      %5006 = vmatpush1.msra.mxu0 0.0
      %5007 = vmatprep.subr.mxu0 0.0
      %5008 = vmatpush1.msra.mxu0 0.0
      %5009 = vmatprep.subr.mxu0 0.0
      %5010 = vmatpush1.msra.mxu0 0.0
      %5011 = vmatprep.subr.mxu0 0.0
      %5012 = vmatpush1.msra.mxu0 0.0
      %5013 = vmatprep.subr.mxu0 0.0
      %5014 = vmatpush1.msra.mxu0 0.0
      %5015 = vmatprep.subr.mxu0 0.0
      %5016 = vmatpush1.msra.mxu0 0.0
      %5017 = vmatprep.subr.mxu0 0.0
      %5018 = vmatpush1.msra.mxu0 0.0
      %5019 = vmatprep.subr.mxu0 0.0
      %5020 = vmatpush1.msra.mxu0 0.0
      %5021 = vmatprep.subr.mxu0 0.0
      %5022 = vmatpush1.msra.mxu0 0.0
      %5023 = vmatprep.subr.mxu0 0.0
      %5024 = vmatpush1.msra.mxu0 0.0
      %5025 = vmatprep.subr.mxu0 0.0
      %5026 = vmatpush1.msra.mxu0 0.0
      %5027 = vmatprep.subr.mxu0 0.0
      %5028 = vmatpush1.msra.mxu0 0.0
      %5029 = vmatprep.subr.mxu0 0.0
      %5030 = vmatpush1.msra.mxu0 0.0
      %5031 = vmatprep.subr.mxu0 0.0
      %5032 = vmatpush1.msra.mxu0 0.0
      %5033 = vmatprep.subr.mxu0 0.0
      %5034 = vmatpush1.msra.mxu0 0.0
      %5035 = vmatprep.subr.mxu0 0.0
      %5036 = vmatpush1.msra.mxu0 0.0
      %5037 = vmatprep.subr.mxu0 0.0
      %5038 = vmatpush1.msra.mxu0 0.0
      %5039 = vmatprep.subr.mxu0 0.0
      %5040 = vmatpush1.msra.mxu0 0.0
      %5041 = vmatprep.subr.mxu0 0.0
      %5042 = vmatpush1.msra.mxu0 0.0
      %5043 = vmatprep.subr.mxu0 0.0
      %5044 = vmatpush1.msra.mxu0 0.0
      %5045 = vmatprep.subr.mxu0 0.0
      %5046 = vmatpush1.msra.mxu0 0.0
      %5047 = vmatprep.subr.mxu0 0.0
      %5048 = vmatpush1.msra.mxu0 0.0
      %5049 = vmatprep.mubr.f32.mxu0 0.0
      %5050 = vmatmul.mubr.f32.gmra.mrb[0].mxu0 %v4959
      %v5051 = vpop.f32.mrb[0].mxu0
      %v5052 = vadd.f32 0.0, %v5051
      %v5053 = vpop.f32.mrb[0].mxu0
      %5054 = vmatprep.mubr.f32.mxu0 0.0
      %5055 = vmatmul.mubr.f32.gmra.mrb[0].mxu0 %v4962
      %v5056 = vpop.f32.mrb[0].mxu0
      %v5057 = vadd.f32 0.0, %v5056
      %v5058 = vpop.f32.mrb[0].mxu0
      %5059 = vmatprep.mubr.f32.mxu0 0.0
      %5060 = vmatmul.mubr.f32.gmra.mrb[0].mxu0 %v4965
      %v5061 = vpop.f32.mrb[0].mxu0
      %v5062 = vadd.f32 0.0, %v5061
      %v5063 = vpop.f32.mrb[0].mxu0
      %5064 = vmatprep.mubr.f32.mxu0 0.0
      %5065 = vmatmul.mubr.f32.gmra.mrb[0].mxu0 %v4968
      %v5066 = vpop.f32.mrb[0].mxu0
      %v5067 = vadd.f32 0.0, %v5066
      %v5068 = vpop.f32.mrb[0].mxu0
      %5069 = vmatprep.mubr.f32.mxu0 0.0
      %5070 = vmatmul.mubr.f32.gmra.mrb[0].mxu0 %v4971
      %v5071 = vpop.f32.mrb[0].mxu0
      %v5072 = vadd.f32 0.0, %v5071
      %v5073 = vpop.f32.mrb[0].mxu0
      %5074 = vmatprep.mubr.f32.mxu0 0.0
      %5075 = vmatmul.mubr.f32.gmra.mrb[0].mxu0 %v4974
      %v5076 = vpop.f32.mrb[0].mxu0
      %v5077 = vadd.f32 0.0, %v5076
      %v5078 = vpop.f32.mrb[0].mxu0
      %5079 = vmatprep.mubr.f32.mxu0 0.0
      %5080 = vmatmul.mubr.f32.gmra.mrb[0].mxu0 %v4977
      %v5081 = vpop.f32.mrb[0].mxu0
      %v5082 = vadd.f32 0.0, %v5081
      %v5083 = vpop.f32.mrb[0].mxu0
      %5084 = vmatprep.mubr.f32.mxu0 0.0
      %5085 = vmatmul.mubr.f32.gmra.mrb[0].mxu0 %v4980
      %v5086 = vpop.f32.mrb[0].mxu0
      %v5087 = vadd.f32 0.0, %v5086
      %v5088 = vpop.f32.mrb[0].mxu0
      %5089 = vdwg.mxu0
      %v5090 = vadd.f32 %v4949, %v5052
      %v5091 = vadd.f32 %v4950, %v5057
      %v5092 = vadd.f32 %v4951, %v5062
      %v5093 = vadd.f32 %v4952, %v5067
      %v5094 = vadd.f32 %v4953, %v5072
      %v5095 = vadd.f32 %v4954, %v5077
      %v5096 = vadd.f32 %v4955, %v5082
      %v5097 = vadd.f32 %v4956, %v5087
      %5098 = vst.msk [vmem:[#allocation2] sm:$0xff] %vm451, %v5090
      %5099 = vst.msk [vmem:[#allocation2 + $0x8] sm:$0xff] %vm451, %v5091
      %5100 = vst.msk [vmem:[#allocation2 + $0x10] sm:$0xff] %vm451, %v5092
      %5101 = vst.msk [vmem:[#allocation2 + $0x18] sm:$0xff] %vm451, %v5093
      %5102 = vst.msk [vmem:[#allocation2 + $0x20] sm:$0xff] %vm451, %v5094
      %5103 = vst.msk [vmem:[#allocation2 + $0x28] sm:$0xff] %vm451, %v5095
      %5104 = vst.msk [vmem:[#allocation2 + $0x30] sm:$0xff] %vm451, %v5096
      %5105 = vst.msk [vmem:[#allocation2 + $0x38] sm:$0xff] %vm451, %v5097
      %v5106 = vld [vmem:[#allocation2] sm:$0xff]
      %v5107 = vld [vmem:[#allocation2 + $0x8] sm:$0xff]
      %v5108 = vld [vmem:[#allocation2 + $0x10] sm:$0xff]
      %v5109 = vld [vmem:[#allocation2 + $0x18] sm:$0xff]
      %v5110 = vld [vmem:[#allocation2 + $0x20] sm:$0xff]
      %v5111 = vld [vmem:[#allocation2 + $0x28] sm:$0xff]
      %v5112 = vld [vmem:[#allocation2 + $0x30] sm:$0xff]
      %v5113 = vld [vmem:[#allocation2 + $0x38] sm:$0xff]
      %5114 = vst.msk [vmem:[%s426] sm:$0xff] %vm451, %v5106
      %5115 = vst.msk [vmem:[%s426 + $0x8] sm:$0xff] %vm451, %v5107
      %5116 = vst.msk [vmem:[%s426 + $0x10] sm:$0xff] %vm451, %v5108
      %5117 = vst.msk [vmem:[%s426 + $0x18] sm:$0xff] %vm451, %v5109
      %5118 = vst.msk [vmem:[%s426 + $0x20] sm:$0xff] %vm451, %v5110
      %5119 = vst.msk [vmem:[%s426 + $0x28] sm:$0xff] %vm451, %v5111
      %5120 = vst.msk [vmem:[%s426 + $0x30] sm:$0xff] %vm451, %v5112
      %5121 = vst.msk [vmem:[%s426 + $0x38] sm:$0xff] %vm451, %v5113
      %p5122 = scmp.lt.s32.totalorder %s20, 1
      %s5123 = scalar_select %p5122, %s20, 1
      %p5124 = scmp.lt.s32.totalorder %s21, 7
      %s5125 = scalar_select %p5124, %s21, 7
      %s5126 = smul.addr %s5125, 8
      %s5127 = smul.addr %s5123, 64
      %s5128 = sadd.s32 %s5126, %s5127
      %s5129 = smul.addr %s5128, 8
      %s5130 = scalar_lea.vmem %s5, %s5129
      // Predicated region
      $region41: #{tpu_custom_call.1} parent=39 // pred_check
        %p5131 = pneg %p202
      $region42: #{tpu_custom_call.1} parent=39 // pred_check_branch
        %5133 = sbr.rel (%p5131) target = $region44
      $region43: #{tpu_custom_call.1} parent=39 // pred_region
        _
      $region44: #{tpu_custom_call.1} parent=39 // pred_fallthru
        _
    $region40: #{tpu_custom_call.1} parent=5 // pred_fallthru
      _
    %p5134 = scmp.le.s32.totalorder 2, %s11
    // Predicated region
    $region45: #{tpu_custom_call.1} parent=5 // pred_check
      %p5135 = pneg %p5134
    $region46: #{tpu_custom_call.1} parent=5 // pred_check_branch
      %5137 = sbr.rel (%p5135) target = $region48
    $region47: #{tpu_custom_call.1} parent=5 // pred_region
      %s5138 = ssub.s32 %s11, 2
      // Predicated region
      $region49: #{tpu_custom_call.1} parent=47 // pred_check
        %p5139 = pneg %p208
      $region50: #{tpu_custom_call.1} parent=47 // pred_check_branch
        %5141 = sbr.rel (%p5139) target = $region52
      $region51: #{tpu_custom_call.1} parent=47 // pred_region
        %p5142 = scmp.lt.s32.totalorder %s22, 1
        %s5143 = scalar_select %p5142, %s22, 1
        %p5144 = scmp.lt.s32.totalorder %s23, 7
        %s5145 = scalar_select %p5144, %s23, 7
        %s5146 = smul.addr %s5145, 8
        %s5147 = smul.addr %s5143, 64
        %s5148 = sadd.s32 %s5146, %s5147
        %s5149 = smul.addr %s5148, 8
        %s5150 = scalar_lea.vmem %s5, %s5149
      $region52: #{tpu_custom_call.1} parent=47 // pred_fallthru
        _
    $region48: #{tpu_custom_call.1} parent=5 // pred_fallthru
      _
  $region6: #{tpu_custom_call.1} parent=0 // loop_footer
    %s15 = sadd.s32 1, %s11
  $region7: #{tpu_custom_call.1} parent=0 // loop_footer_branch
    %10 = sbr.rel target = $region3
  $region8: #{tpu_custom_call.1} parent=0 // loop_exit
    _

</llo_original>
